<compile_context>
chip_gen: v7x
topology: tpu7x:2x2x1
jax: 0.10.0
libtpu: 0.0.40
codegen_flags: <defaults>
</compile_context>

<pallas_src>
import functools
import math

import jax
import jax.numpy as jnp
from jax import lax
from jax.experimental import pallas as pl
from jax.experimental.pallas import tpu as pltpu


# ----------------------------------------------------------------------------
# VMEM budgeting helpers
# ----------------------------------------------------------------------------
_TILE_BUDGET_BYTES = 12 * 1024 * 1024  # fits all generations' scoped-VMEM defaults w/ headroom
                                       # (16 MiB v5e, 32 MiB v6e, 32 MiB v7x)


def _vmem_capacity_bytes():
    try:
        info = pltpu.get_tpu_info()
        cap = getattr(info, "vmem_capacity_bytes", None)
        if cap:
            return int(cap)
    except Exception:
        pass
    return 64 * 1024 * 1024  # conservative (v7x per-TC physical VMEM)


def _vmem_limit_for(est_bytes):
    """Scoped-VMEM limit: accurate estimate + bounded headroom, never ~the whole part."""
    if est_bytes <= _TILE_BUDGET_BYTES:
        return None  # default scoped limit already sufficient
    cap = _vmem_capacity_bytes()
    return int(min(est_bytes + (16 << 20), cap - (8 << 20)))


def _tile_candidates_128(n):
    """Divisors of n that are multiples of 128 (descending); fall back to the full extent."""
    cands = [d for d in range(128, n + 1, 128) if n % d == 0]
    return sorted(cands, reverse=True) if cands else [n]


# ----------------------------------------------------------------------------
# Pallas kernel 1: streaming cosine-similarity argmax + fused pooled-mask gather
#   src_ref : (1, TQ, C)   bf16 query tile of source features (pre-cast, NOT normalized)
#   ref_ref : (1, TK, C)   bf16 reference tile (pre-normalized in the wrapper)
#   mask_ref: (1, 1, TK)   pooled reference mask tile, f32
#   out_ref : (1, 1, TQ)   gathered mask value per source pixel (written on last k step)
#   run_max : (1, TQ) VMEM running max of cos over reference tiles
#   run_val : (1, TQ) VMEM running gathered mask value at the running argmax
# ----------------------------------------------------------------------------
def _corr_gather_kernel(src_ref, ref_ref, mask_ref, out_ref, run_max, run_val):
    k = pl.program_id(2)

    @pl.when(k == 0)
    def _():
        run_max[...] = jnp.full(run_max.shape, -jnp.inf, jnp.float32)
        run_val[...] = jnp.zeros(run_val.shape, jnp.float32)

    s = src_ref[0]            # (TQ, C) bf16
    r = ref_ref[0]            # (TK, C) bf16, rows already L2-normalized
    m = mask_ref[0]           # (1, TK) f32

    # cos^T: (TK, TQ) — per-query reductions become sublane-axis reduces, so the running
    # accumulators and the final store stay lane-oriented (1, TQ).
    cos_t = lax.dot_general(r, s, (((1,), (1,)), ((), ())),
                            preferred_element_type=jnp.float32)                 # (TK, TQ)

    tk = cos_t.shape[0]
    mx = jnp.max(cos_t, axis=0, keepdims=True)                                  # (1, TQ)
    ids = lax.broadcasted_iota(jnp.int32, cos_t.shape, 0)
    first = jnp.min(jnp.where(cos_t >= mx, ids, tk), axis=0, keepdims=True)     # (1, TQ)
    onehot = (ids == first).astype(jnp.float32)                                 # (TK, TQ)
    # gather of the pooled-mask value at the per-tile argmax: one-hot matvec on the MXU
    gathered = lax.dot_general(m, onehot, (((1,), (0,)), ((), ())),
                               preferred_element_type=jnp.float32)              # (1, TQ)

    better = mx > run_max[...]           # strict '>' => global first-index tie semantics
    run_val[...] = jnp.where(better, gathered, run_val[...])
    run_max[...] = jnp.where(better, mx, run_max[...])

    @pl.when(k == pl.num_programs(2) - 1)
    def _():
        out_ref[...] = run_val[...].reshape(1, 1, -1)


def _k1_vmem_bytes(tq, tk, c):
    lanes_c = max(c, 128)
    src = 2 * tq * lanes_c * 2            # bf16 query tile, double-buffered
    ref = 2 * tk * lanes_c * 2            # bf16 reference tile, double-buffered
    msk = 2 * max(tk, 128) * 4
    out = 2 * max(tq, 128) * 4
    scr = 2 * max(tq, 128) * 4
    tmp = 4 * tk * tq * 4                 # cos_t + iota/onehot/compare temps (f32)
    return src + ref + msk + out + scr + tmp + (1 << 20)


def _choose_tiles_k1(batch, hw_src, hw_ref, c):
    tq_cands = _tile_candidates_128(hw_src)
    tk_cands = _tile_candidates_128(hw_ref)
    for tk in tk_cands:                   # prefer a resident reference (tk == hw_ref) if it fits
        for tq in tq_cands:
            if batch == 1 and tq == hw_src and len(tq_cands) > 1:
                continue                  # keep >=2 query tiles so both v7x TCs get work
            if _k1_vmem_bytes(tq, tk, c) <= _TILE_BUDGET_BYTES:
                return tq, tk
    return tq_cands[-1], tk_cands[-1]


def correspondence_gather(src_flat, ref_norm_flat, mask_flat):
    """src_flat [B,HWs,C], ref_norm_flat [B,HWr,C] (rows L2-normalized), mask_flat [B,HWr]
    -> gathered mask value at argmax_ref cos-sim, [B,HWs] f32."""
    B, HWs, C = src_flat.shape
    _, HWr, _ = ref_norm_flat.shape

    # bf16 casts hoisted out of the kernel (done once per call)
    src_bf16 = src_flat.astype(jnp.bfloat16)
    ref_bf16 = ref_norm_flat.astype(jnp.bfloat16)
    mask3 = mask_flat.reshape(B, 1, HWr).astype(jnp.float32)

    tq, tk = _choose_tiles_k1(B, HWs, HWr, C)
    n_q, n_k = HWs // tq, HWr // tk
    vmem_limit = _vmem_limit_for(_k1_vmem_bytes(tq, tk, C))

    out = pl.pallas_call(
        _corr_gather_kernel,
        out_shape=jax.ShapeDtypeStruct((B, 1, HWs), jnp.float32),
        grid_spec=pltpu.PrefetchScalarGridSpec(
            num_scalar_prefetch=0,
            grid=(B, n_q, n_k),
            in_specs=[pl.BlockSpec((1, tq, C), lambda b, q, k: (b, q, 0)),
                      pl.BlockSpec((1, tk, C), lambda b, q, k: (b, k, 0)),
                      pl.BlockSpec((1, 1, tk), lambda b, q, k: (b, 0, k))],
            out_specs=pl.BlockSpec((1, 1, tq), lambda b, q, k: (b, 0, q)),
            scratch_shapes=[pltpu.VMEM((1, tq), jnp.float32),
                            pltpu.VMEM((1, tq), jnp.float32)]),
        compiler_params=pltpu.CompilerParams(
            dimension_semantics=("parallel", "parallel", "arbitrary"),
            vmem_limit_bytes=vmem_limit),
    )(src_bf16, ref_bf16, mask3)
    return out[:, 0, :]


# ----------------------------------------------------------------------------
# Pallas kernel 2: row-tiled bilinear resize + separable 5x5 dilate/erode trimap
#   m_ref    : (1, rh, rw)        low-res gathered correspondence mask
#   wyh_ref  : (1, TH+2p, rh)     haloed, reflect-padded row-interpolation block
#   wyu_ref  : (TH, rh)           unpadded row-interpolation block (for the mask output)
#   wxT_ref  : (rw, w)            unpadded col-interpolation matrix, transposed
#   wxpT_ref : (rw, w+2p)         reflect-padded col-interpolation matrix, transposed
#   mask_out : (1, 1, TH, w)      F.interpolate(..., bilinear, align_corners=False) rows
#   tri_out  : (1, 1, TH, w)      trimap rows in {0, 0.5, 1}
# ----------------------------------------------------------------------------
def _window_reduce(x, ksize, axis, op):
    """Sliding-window (size ksize, stride 1) max/min along `axis` with log-step shifts."""
    out_len = x.shape[axis] - (ksize - 1)
    acc, span = x, 1
    while span * 2 <= ksize:
        n = acc.shape[axis]
        acc = op(lax.slice_in_dim(acc, 0, n - span, axis=axis),
                 lax.slice_in_dim(acc, span, n, axis=axis))
        span *= 2
    if span < ksize:
        shift = ksize - span
        acc = op(lax.slice_in_dim(acc, 0, out_len, axis=axis),
                 lax.slice_in_dim(acc, shift, shift + out_len, axis=axis))
    return acc


def _resize_trimap_kernel(m_ref, wyh_ref, wyu_ref, wxT_ref, wxpT_ref,
                          mask_out_ref, tri_out_ref, *, ksize):
    th = wyu_ref.shape[0]
    w = wxT_ref.shape[1]

    m = m_ref[0]                                                              # (rh, rw)
    t_unp = jnp.dot(m, wxT_ref[...], preferred_element_type=jnp.float32)      # (rh, w)
    t_pad = jnp.dot(m, wxpT_ref[...], preferred_element_type=jnp.float32)     # (rh, w+2p)

    # bilinear-resized rows via the UNPADDED matrices (avoids a misaligned slice relayout)
    mask_blk = jnp.dot(wyu_ref[...], t_unp, preferred_element_type=jnp.float32)   # (th, w)
    mask_out_ref[...] = mask_blk.reshape(1, 1, th, w)

    # reflect-padded rows (with vertical halo) for the separable morphology — f32 only
    padded = jnp.dot(wyh_ref[0], t_pad, preferred_element_type=jnp.float32)   # (th+2p, w+2p)

    vmax = _window_reduce(padded, ksize, 0, jnp.maximum)                      # (th, w+2p)
    vmin = _window_reduce(padded, ksize, 0, jnp.minimum)
    hmax = _window_reduce(vmax, ksize, 1, jnp.maximum)                        # (th, w)
    hmin = _window_reduce(vmin, ksize, 1, jnp.minimum)

    # dilated = max-pool; eroded = 1 - dilate(1 - x) == min-pool; same exact-equality
    # semantics as the PyTorch reference.
    tri = jnp.where(hmin == 1.0, 1.0, jnp.where(hmax == 1.0, 0.5, 0.0))
    tri_out_ref[...] = tri.reshape(1, 1, th, w)


def _k2_vmem_bytes(th, w, rh, rw, pad):
    wp = max(w + 2 * pad, 128)
    wl = max(w, 128)
    rhl = max(rh, 128)
    rwl = max(rw, 128)
    padded = (th + 2 * pad) * wp * 4
    temps = 8 * th * wl * 4                       # tree-reduce intermediates + tri
    outs = 2 * 2 * th * wl * 4                    # two double-buffered output blocks
    ins = 2 * ((th + 2 * pad) * rhl + th * rhl + rh * rwl + rw * (wl + wp)) * 4
    return padded + temps + outs + ins + (1 << 20)


def _choose_row_tile(batch, h, w, rh, rw, pad):
    cands = sorted([d for d in range(8, h + 1, 8) if h % d == 0], reverse=True) or [h]
    for th in cands:
        if batch == 1 and th == h and len(cands) > 1:
            continue                  # >=2 row tiles when batch==1 (feed both v7x TCs)
        if _k2_vmem_bytes(th, w, rh, rw, pad) <= _TILE_BUDGET_BYTES:
            return th
    return cands[-1]


def _bilinear_matrix(out_size, in_size):
    """PyTorch F.interpolate(mode='bilinear', align_corners=False) weights as a matrix."""
    i = jnp.arange(out_size, dtype=jnp.float32)
    src = jnp.maximum((i + 0.5) * (in_size / out_size) - 0.5, 0.0)
    i0 = jnp.minimum(jnp.floor(src).astype(jnp.int32), in_size - 1)
    i1 = jnp.minimum(i0 + 1, in_size - 1)
    w1 = src - i0.astype(jnp.float32)
    w0 = 1.0 - w1
    oh0 = jax.nn.one_hot(i0, in_size, dtype=jnp.float32)
    oh1 = jax.nn.one_hot(i1, in_size, dtype=jnp.float32)
    return w0[:, None] * oh0 + w1[:, None] * oh1


def resize_and_trimap(mask_small, h, w, ksize=5):
    """mask_small: [B, rh, rw] -> (mask [B,1,h,w], trimap [B,1,h,w])."""
    B, rh, rw = mask_small.shape
    pad = (ksize - 1) // 2

    wy = _bilinear_matrix(h, rh)                                        # (h, rh)
    wx = _bilinear_matrix(w, rw)                                        # (w, rw)
    wyp = jnp.pad(wy, ((pad, pad), (0, 0)), mode="reflect")             # (h+2p, rh)
    wxT = wx.T                                                          # (rw, w)
    wxpT = jnp.pad(wx, ((pad, pad), (0, 0)), mode="reflect").T          # (rw, w+2p)

    th = _choose_row_tile(B, h, w, rh, rw, pad)
    n_r = h // th
    # haloed row-blocks of the padded row-interpolation matrix (overlapping -> pre-expand)
    wyh = jnp.stack([wyp[r * th:r * th + th + 2 * pad] for r in range(n_r)])   # (n_r, th+2p, rh)

    vmem_limit = _vmem_limit_for(_k2_vmem_bytes(th, w, rh, rw, pad))
    kern = functools.partial(_resize_trimap_kernel, ksize=ksize)

    mask_out, tri_out = pl.pallas_call(
        kern,
        out_shape=(jax.ShapeDtypeStruct((B, 1, h, w), jnp.float32),
                   jax.ShapeDtypeStruct((B, 1, h, w), jnp.float32)),
        grid_spec=pltpu.PrefetchScalarGridSpec(
            num_scalar_prefetch=0,
            grid=(B, n_r),
            in_specs=[pl.BlockSpec((1, rh, rw), lambda b, r: (b, 0, 0)),
                      pl.BlockSpec((1, th + 2 * pad, rh), lambda b, r: (r, 0, 0)),
                      pl.BlockSpec((th, rh), lambda b, r: (r, 0)),
                      pl.BlockSpec((rw, w), lambda b, r: (0, 0)),
                      pl.BlockSpec((rw, w + 2 * pad), lambda b, r: (0, 0))],
            out_specs=(pl.BlockSpec((1, 1, th, w), lambda b, r: (b, 0, r, 0)),
                       pl.BlockSpec((1, 1, th, w), lambda b, r: (b, 0, r, 0))),
        ),
        compiler_params=pltpu.CompilerParams(
            dimension_semantics=("parallel", "parallel"),
            vmem_limit_bytes=vmem_limit),
    )(mask_small.astype(jnp.float32), wyh, wy, wxT, wxpT)
    return mask_out, tri_out


# ----------------------------------------------------------------------------
# Plain-JAX glue: mask pooling (tiny reshape/min, stays in XLA)
# ----------------------------------------------------------------------------
def maskpooling(mask, res):
    """mask: [B, 1, H, W] -> [B, 1, res, W//(H//res)]   (== -maxpool(-binarized))."""
    B, _, H, W = mask.shape
    m = jnp.where(mask > 0, 1.0, mask)
    k = H // res
    m = m.reshape(B, 1, H // k, k, W // k, k)
    return m.min(axis=(3, 5))


# ----------------------------------------------------------------------------
# Forward pass of InContextCorrespondence (refine_with_attention=False)
# ----------------------------------------------------------------------------
def in_context_correspondence_forward(feature_of_reference_image,
                                      ft_attn_of_source_image,
                                      guidance_on_reference_image,
                                      kernel_size=5):
    h, w = guidance_on_reference_image.shape[-2:]
    h_attn = ft_attn_of_source_image["attn"].shape[-3]
    feature_of_source_image = ft_attn_of_source_image["ft"]

    B, C, Hf, Wf = feature_of_source_image.shape
    src_flat = feature_of_source_image.transpose(0, 2, 3, 1).reshape(B, Hf * Wf, C)
    ref_flat = feature_of_reference_image.transpose(0, 2, 3, 1).reshape(B, -1, C)

    # Hoisted out of the kernel: L2-normalize reference rows once (source-row positive scale
    # cannot change the argmax).  F.normalize(p=2, dim=-1, eps=1e-12) equivalent.
    ref32 = ref_flat.astype(jnp.float32)
    inv_norm = lax.rsqrt(jnp.maximum(jnp.sum(ref32 * ref32, axis=-1, keepdims=True), 1e-24))
    ref_norm = ref32 * inv_norm

    mask_ref = maskpooling(guidance_on_reference_image, h_attn)       # [B,1,res,W//k]
    mask_flat = mask_ref.reshape(B, -1)
    # TODO(synk): as in the reference, the gather assumes the pooled-mask size matches the number
    # of reference-feature pixels (h_attn^2 == H_ref*W_ref); mismatched resolutions are silently
    # wrong in the original PyTorch too.
    assert mask_flat.shape[1] == ref_flat.shape[1], "pooled mask size must match #ref pixels"

    # fused: streaming cos-sim argmax over reference pixels + pooled-mask gather (Pallas)
    new_index = correspondence_gather(src_flat, ref_norm, mask_flat)  # [B, Hf*Wf] f32

    res = math.isqrt(new_index.shape[-1])                             # exact integer sqrt
    mask_small = new_index.reshape(B, res, res)

    # fused: row-tiled bilinear resize to (h, w) + reflect-padded separable trimap (Pallas)
    mask_result, pseudo_trimap = resize_and_trimap(mask_small, h, w, ksize=kernel_size)

    return {"trimap": pseudo_trimap,
            "feature": feature_of_source_image,
            "mask": mask_result}


if __name__ == "__main__":
    key = jax.random.PRNGKey(0)
    B, C, Hf, Wf = 2, 32, 16, 16       # feature maps
    Hg = Wg = 128                      # guidance resolution (multiple of 128 -> lane-dense stores)
    k1, k2, k3, k4 = jax.random.split(key, 4)

    feature_of_reference_image = jax.random.normal(k1, (B, C, Hf, Wf), dtype=jnp.float32)
    feature_of_source_image = jax.random.normal(k2, (B, C, Hf, Wf), dtype=jnp.float32)
    attention_of_source_image = jax.random.uniform(k3, (B, Hf, Wf, Hf * Wf), dtype=jnp.float32)
    guidance_on_reference_image = (
        jax.random.uniform(k4, (B, 1, Hg, Wg), dtype=jnp.float32) > 0.5
    ).astype(jnp.float32)

    fwd = jax.jit(in_context_correspondence_forward)
    out = fwd(feature_of_reference_image,
              {"ft": feature_of_source_image, "attn": attention_of_source_image},
              guidance_on_reference_image)
    jax.block_until_ready(out["trimap"])
    jax.block_until_ready(out["mask"])
    jax.block_until_ready(out["feature"])

    assert out["trimap"].shape == (B, 1, Hg, Wg)
    assert out["mask"].shape == (B, 1, Hg, Wg)
    assert out["feature"].shape == (B, C, Hf, Wf)

    tri = out["trimap"]
    msk = out["mask"]
    assert bool(jnp.all((tri == 0.0) | (tri == 0.5) | (tri == 1.0)))   # trimap value set
    assert bool(jnp.all(jnp.isfinite(msk)))
    # eroded (trimap==1) pixels must sit inside fully-foreground interpolated regions
    assert bool(jnp.all(jnp.where(tri == 1.0, msk > 0.999, True)))
    print("KERNEL_OK")
</pallas_src>

<mosaic_0001>
module attributes {stable_mosaic.version = 11 : i64} {
  func.func @_corr_gather_kernel(%arg0: i32, %arg1: i32, %arg2: i32, %arg3: memref<1x256x32xbf16, #tpu.memory_space<vmem>>, %arg4: memref<1x256x32xbf16, #tpu.memory_space<vmem>>, %arg5: memref<1x1x256xf32, #tpu.memory_space<vmem>>, %arg6: memref<1x1x256xf32, #tpu.memory_space<vmem>>, %arg7: memref<1x256xf32, #tpu.memory_space<vmem>>, %arg8: memref<1x256xf32, #tpu.memory_space<vmem>>) attributes {dimension_semantics = [#tpu.dimension_semantics<parallel>, #tpu.dimension_semantics<parallel>, #tpu.dimension_semantics<arbitrary>], iteration_bounds = array<i64: 2, 1, 1>, scalar_prefetch = 0 : i64, scratch_operands = 2 : i64, tpu.core_type = #tpu.core_type<tc>, window_params = [{transform_indices = @transform_0, window_bounds = array<i64: 1, 256, 32>}, {transform_indices = @transform_1, window_bounds = array<i64: 1, 256, 32>}, {transform_indices = @transform_2, window_bounds = array<i64: 1, 1, 256>}, {transform_indices = @transform_3, window_bounds = array<i64: 1, 1, 256>}]} {
    %c0_i32 = arith.constant 0 : i32
    %0 = arith.cmpi eq, %arg2, %c0_i32 : i32
    %1 = arith.extui %0 : i1 to i32
    %c0_i32_0 = arith.constant 0 : i32
    %2 = arith.cmpi ne, %1, %c0_i32_0 : i32
    scf.if %2 {
      %cst_24 = arith.constant 0xFF800000 : f32
      %35 = vector.broadcast %cst_24 : f32 to vector<1x256xf32>
      %c0_25 = arith.constant 0 : index
      %c0_26 = arith.constant 0 : index
      %36 = vector.load %arg7[%c0_25, %c0_26] : memref<1x256xf32, #tpu.memory_space<vmem>>, vector<1x256xf32>
      tpu.vector_store %arg7[%c0_25, %c0_26], %35 {strides = array<i32>} : memref<1x256xf32, #tpu.memory_space<vmem>>, vector<1x256xf32>,
      %cst_27 = arith.constant 0.000000e+00 : f32
      %37 = vector.broadcast %cst_27 : f32 to vector<1x256xf32>
      %c0_28 = arith.constant 0 : index
      %c0_29 = arith.constant 0 : index
      %38 = vector.load %arg8[%c0_28, %c0_29] : memref<1x256xf32, #tpu.memory_space<vmem>>, vector<1x256xf32>
      tpu.vector_store %arg8[%c0_28, %c0_29], %37 {strides = array<i32>} : memref<1x256xf32, #tpu.memory_space<vmem>>, vector<1x256xf32>,
    } else {
    }
    %c0 = arith.constant 0 : index
    %c0_1 = arith.constant 0 : index
    %c0_2 = arith.constant 0 : index
    %3 = vector.load %arg3[%c0, %c0_1, %c0_2] : memref<1x256x32xbf16, #tpu.memory_space<vmem>>, vector<1x256x32xbf16>
    %4 = vector.shape_cast %3 : vector<1x256x32xbf16> to vector<256x32xbf16>
    %c0_3 = arith.constant 0 : index
    %c0_4 = arith.constant 0 : index
    %c0_5 = arith.constant 0 : index
    %5 = vector.load %arg4[%c0_3, %c0_4, %c0_5] : memref<1x256x32xbf16, #tpu.memory_space<vmem>>, vector<1x256x32xbf16>
    %6 = vector.shape_cast %5 : vector<1x256x32xbf16> to vector<256x32xbf16>
    %c0_6 = arith.constant 0 : index
    %c0_7 = arith.constant 0 : index
    %c0_8 = arith.constant 0 : index
    %7 = vector.load %arg5[%c0_6, %c0_7, %c0_8] : memref<1x1x256xf32, #tpu.memory_space<vmem>>, vector<1x1x256xf32>
    %8 = vector.shape_cast %7 : vector<1x1x256xf32> to vector<1x256xf32>
    %cst = arith.constant dense<0.000000e+00> : vector<256x256xf32>
    %9 = tpu.matmul %6, %4, %cst {dimension_numbers = #tpu.dot_dimension_numbers<[1], [1], [0], [0], [0, 0, 1, 0], [], []>} : vector<256x32xbf16>, vector<256x32xbf16>, vector<256x256xf32> -> vector<256x256xf32>
    %cst_9 = arith.constant dense<0xFF800000> : vector<256xf32>
    %10 = vector.multi_reduction <maximumf>, %9, %cst_9 [0] : vector<256x256xf32> to vector<256xf32>
    %11 = vector.shape_cast %10 : vector<256xf32> to vector<1x256xf32>
    %12 = tpu.iota {dimensions = array<i32: 0>} : vector<256x256xi32>
    %13 = vector.broadcast %11 : vector<1x256xf32> to vector<256x256xf32>
    %14 = arith.cmpf oge, %9, %13 : vector<256x256xf32>
    %c256_i32 = arith.constant 256 : i32
    %15 = vector.broadcast %c256_i32 : i32 to vector<256x256xi32>
    %16 = arith.select %14, %12, %15 : vector<256x256xi1>, vector<256x256xi32>
    %cst_10 = arith.constant dense<2147483647> : vector<256xi32>
    %17 = vector.multi_reduction <minsi>, %16, %cst_10 [0] : vector<256x256xi32> to vector<256xi32>
    %18 = vector.shape_cast %17 : vector<256xi32> to vector<1x256xi32>
    %19 = vector.broadcast %18 : vector<1x256xi32> to vector<256x256xi32>
    %20 = arith.cmpi eq, %12, %19 : vector<256x256xi32>
    %21 = arith.extui %20 : vector<256x256xi1> to vector<256x256xi32>
    %22 = arith.sitofp %21 : vector<256x256xi32> to vector<256x256xf32>
    %cst_11 = arith.constant dense<0.000000e+00> : vector<1x256xf32>
    %23 = tpu.matmul %8, %22, %cst_11 {dimension_numbers = #tpu.dot_dimension_numbers<[1], [0], [0], [1], [0, 0, 1, 1], [], []>} : vector<1x256xf32>, vector<256x256xf32>, vector<1x256xf32> -> vector<1x256xf32>
    %c0_12 = arith.constant 0 : index
    %c0_13 = arith.constant 0 : index
    %24 = vector.load %arg7[%c0_12, %c0_13] : memref<1x256xf32, #tpu.memory_space<vmem>>, vector<1x256xf32>
    %25 = arith.cmpf ogt, %11, %24 : vector<1x256xf32>
    %c0_14 = arith.constant 0 : index
    %c0_15 = arith.constant 0 : index
    %26 = vector.load %arg8[%c0_14, %c0_15] : memref<1x256xf32, #tpu.memory_space<vmem>>, vector<1x256xf32>
    %27 = arith.select %25, %23, %26 : vector<1x256xi1>, vector<1x256xf32>
    %c0_16 = arith.constant 0 : index
    %c0_17 = arith.constant 0 : index
    %28 = vector.load %arg8[%c0_16, %c0_17] : memref<1x256xf32, #tpu.memory_space<vmem>>, vector<1x256xf32>
    tpu.vector_store %arg8[%c0_16, %c0_17], %27 {strides = array<i32>} : memref<1x256xf32, #tpu.memory_space<vmem>>, vector<1x256xf32>,
    %c0_18 = arith.constant 0 : index
    %c0_19 = arith.constant 0 : index
    %29 = vector.load %arg7[%c0_18, %c0_19] : memref<1x256xf32, #tpu.memory_space<vmem>>, vector<1x256xf32>
    %30 = arith.select %25, %11, %29 : vector<1x256xi1>, vector<1x256xf32>
    %c0_20 = arith.constant 0 : index
    %c0_21 = arith.constant 0 : index
    %31 = vector.load %arg7[%c0_20, %c0_21] : memref<1x256xf32, #tpu.memory_space<vmem>>, vector<1x256xf32>
    tpu.vector_store %arg7[%c0_20, %c0_21], %30 {strides = array<i32>} : memref<1x256xf32, #tpu.memory_space<vmem>>, vector<1x256xf32>,
    %c0_i32_22 = arith.constant 0 : i32
    %32 = arith.cmpi eq, %arg2, %c0_i32_22 : i32
    %33 = arith.extui %32 : i1 to i32
    %c0_i32_23 = arith.constant 0 : i32
    %34 = arith.cmpi ne, %33, %c0_i32_23 : i32
    scf.if %34 {
      %c0_24 = arith.constant 0 : index
      %c0_25 = arith.constant 0 : index
      %35 = vector.load %arg8[%c0_24, %c0_25] : memref<1x256xf32, #tpu.memory_space<vmem>>, vector<1x256xf32>
      %36 = vector.shape_cast %35 : vector<1x256xf32> to vector<1x1x256xf32>
      %c0_26 = arith.constant 0 : index
      %c0_27 = arith.constant 0 : index
      %c0_28 = arith.constant 0 : index
      %37 = vector.load %arg6[%c0_26, %c0_27, %c0_28] : memref<1x1x256xf32, #tpu.memory_space<vmem>>, vector<1x1x256xf32>
      tpu.vector_store %arg6[%c0_26, %c0_27, %c0_28], %36 {strides = array<i32>} : memref<1x1x256xf32, #tpu.memory_space<vmem>>, vector<1x1x256xf32>,
    } else {
    }
    return
  }
  func.func @transform_0(%arg0: i32, %arg1: i32, %arg2: i32) -> (i32, i32, i32) {
    %c0_i32 = arith.constant 0 : i32
    %c0_i32_0 = arith.constant 0 : i32
    return %arg0, %arg1, %c0_i32 : i32, i32, i32
  }
  func.func @transform_1(%arg0: i32, %arg1: i32, %arg2: i32) -> (i32, i32, i32) {
    %c0_i32 = arith.constant 0 : i32
    %c0_i32_0 = arith.constant 0 : i32
    return %arg0, %arg2, %c0_i32 : i32, i32, i32
  }
  func.func @transform_2(%arg0: i32, %arg1: i32, %arg2: i32) -> (i32, i32, i32) {
    %c0_i32 = arith.constant 0 : i32
    %c0_i32_0 = arith.constant 0 : i32
    return %arg0, %c0_i32, %arg2 : i32, i32, i32
  }
  func.func @transform_3(%arg0: i32, %arg1: i32, %arg2: i32) -> (i32, i32, i32) {
    %c0_i32 = arith.constant 0 : i32
    %c0_i32_0 = arith.constant 0 : i32
    return %arg0, %c0_i32, %arg1 : i32, i32, i32
  }
}

module attributes {stable_mosaic.version = 11 : i64} {
  func.func @_resize_trimap_kernel(%arg0: i32, %arg1: i32, %arg2: memref<1x16x16xf32, #tpu.memory_space<vmem>>, %arg3: memref<1x132x16xf32, #tpu.memory_space<vmem>>, %arg4: memref<128x16xf32, #tpu.memory_space<vmem>>, %arg5: memref<16x128xf32, #tpu.memory_space<vmem>>, %arg6: memref<16x132xf32, #tpu.memory_space<vmem>>, %arg7: memref<1x1x128x128xf32, #tpu.memory_space<vmem>>, %arg8: memref<1x1x128x128xf32, #tpu.memory_space<vmem>>) attributes {dimension_semantics = [#tpu.dimension_semantics<parallel>, #tpu.dimension_semantics<parallel>], iteration_bounds = array<i64: 2, 1>, scalar_prefetch = 0 : i64, scratch_operands = 0 : i64, tpu.core_type = #tpu.core_type<tc>, window_params = [{transform_indices = @transform_0, window_bounds = array<i64: 1, 16, 16>}, {transform_indices = @transform_1, window_bounds = array<i64: 1, 132, 16>}, {transform_indices = @transform_2, window_bounds = array<i64: 128, 16>}, {pipeline_mode = #tpu.pipeline_mode<synchronous>, transform_indices = @transform_3, window_bounds = array<i64: 16, 128>}, {pipeline_mode = #tpu.pipeline_mode<synchronous>, transform_indices = @transform_4, window_bounds = array<i64: 16, 132>}, {transform_indices = @transform_5, window_bounds = array<i64: 1, 1, 128, 128>}, {transform_indices = @transform_6, window_bounds = array<i64: 1, 1, 128, 128>}]} {
    %c0 = arith.constant 0 : index
    %c0_0 = arith.constant 0 : index
    %c0_1 = arith.constant 0 : index
    %0 = vector.load %arg2[%c0, %c0_0, %c0_1] : memref<1x16x16xf32, #tpu.memory_space<vmem>>, vector<1x16x16xf32>
    %1 = vector.shape_cast %0 : vector<1x16x16xf32> to vector<16x16xf32>
    %c0_2 = arith.constant 0 : index
    %c0_3 = arith.constant 0 : index
    %2 = vector.load %arg5[%c0_2, %c0_3] : memref<16x128xf32, #tpu.memory_space<vmem>>, vector<16x128xf32>
    %cst = arith.constant dense<0.000000e+00> : vector<16x128xf32>
    %3 = tpu.matmul %1, %2, %cst {dimension_numbers = #tpu.dot_dimension_numbers<[1], [0], [0], [1], [0, 0, 1, 1], [], []>} : vector<16x16xf32>, vector<16x128xf32>, vector<16x128xf32> -> vector<16x128xf32>
    %c0_4 = arith.constant 0 : index
    %c0_5 = arith.constant 0 : index
    %4 = vector.load %arg6[%c0_4, %c0_5] : memref<16x132xf32, #tpu.memory_space<vmem>>, vector<16x132xf32>
    %cst_6 = arith.constant dense<0.000000e+00> : vector<16x132xf32>
    %5 = tpu.matmul %1, %4, %cst_6 {dimension_numbers = #tpu.dot_dimension_numbers<[1], [0], [0], [1], [0, 0, 1, 1], [], []>} : vector<16x16xf32>, vector<16x132xf32>, vector<16x132xf32> -> vector<16x132xf32>
    %c0_7 = arith.constant 0 : index
    %c0_8 = arith.constant 0 : index
    %6 = vector.load %arg4[%c0_7, %c0_8] : memref<128x16xf32, #tpu.memory_space<vmem>>, vector<128x16xf32>
    %cst_9 = arith.constant dense<0.000000e+00> : vector<128x128xf32>
    %7 = tpu.matmul %6, %3, %cst_9 {dimension_numbers = #tpu.dot_dimension_numbers<[1], [0], [0], [1], [0, 0, 1, 1], [], []>} : vector<128x16xf32>, vector<16x128xf32>, vector<128x128xf32> -> vector<128x128xf32>
    %8 = vector.shape_cast %7 : vector<128x128xf32> to vector<1x1x128x128xf32>
    %c0_10 = arith.constant 0 : index
    %c0_11 = arith.constant 0 : index
    %c0_12 = arith.constant 0 : index
    %c0_13 = arith.constant 0 : index
    %9 = vector.load %arg7[%c0_10, %c0_11, %c0_12, %c0_13] : memref<1x1x128x128xf32, #tpu.memory_space<vmem>>, vector<1x1x128x128xf32>
    tpu.vector_store %arg7[%c0_10, %c0_11, %c0_12, %c0_13], %8 {strides = array<i32>} : memref<1x1x128x128xf32, #tpu.memory_space<vmem>>, vector<1x1x128x128xf32>,
    %c0_14 = arith.constant 0 : index
    %c0_15 = arith.constant 0 : index
    %c0_16 = arith.constant 0 : index
    %10 = vector.load %arg3[%c0_14, %c0_15, %c0_16] : memref<1x132x16xf32, #tpu.memory_space<vmem>>, vector<1x132x16xf32>
    %11 = vector.shape_cast %10 : vector<1x132x16xf32> to vector<132x16xf32>
    %cst_17 = arith.constant dense<0.000000e+00> : vector<132x132xf32>
    %12 = tpu.matmul %11, %5, %cst_17 {dimension_numbers = #tpu.dot_dimension_numbers<[1], [0], [0], [1], [0, 0, 1, 1], [], []>} : vector<132x16xf32>, vector<16x132xf32>, vector<132x132xf32> -> vector<132x132xf32>
    %13 = vector.extract_strided_slice %12 {offsets = [0, 0], sizes = [131, 132], strides = [1, 1]} : vector<132x132xf32> to vector<131x132xf32>
    %14 = vector.extract_strided_slice %12 {offsets = [1, 0], sizes = [131, 132], strides = [1, 1]} : vector<132x132xf32> to vector<131x132xf32>
    %15 = arith.maximumf %13, %14 : vector<131x132xf32>
    %16 = vector.extract_strided_slice %15 {offsets = [0, 0], sizes = [129, 132], strides = [1, 1]} : vector<131x132xf32> to vector<129x132xf32>
    %17 = vector.extract_strided_slice %15 {offsets = [2, 0], sizes = [129, 132], strides = [1, 1]} : vector<131x132xf32> to vector<129x132xf32>
    %18 = arith.maximumf %16, %17 : vector<129x132xf32>
    %19 = vector.extract_strided_slice %18 {offsets = [0, 0], sizes = [128, 132], strides = [1, 1]} : vector<129x132xf32> to vector<128x132xf32>
    %20 = vector.extract_strided_slice %18 {offsets = [1, 0], sizes = [128, 132], strides = [1, 1]} : vector<129x132xf32> to vector<128x132xf32>
    %21 = arith.maximumf %19, %20 : vector<128x132xf32>
    %22 = vector.extract_strided_slice %12 {offsets = [0, 0], sizes = [131, 132], strides = [1, 1]} : vector<132x132xf32> to vector<131x132xf32>
    %23 = vector.extract_strided_slice %12 {offsets = [1, 0], sizes = [131, 132], strides = [1, 1]} : vector<132x132xf32> to vector<131x132xf32>
    %24 = arith.minimumf %22, %23 : vector<131x132xf32>
    %25 = vector.extract_strided_slice %24 {offsets = [0, 0], sizes = [129, 132], strides = [1, 1]} : vector<131x132xf32> to vector<129x132xf32>
    %26 = vector.extract_strided_slice %24 {offsets = [2, 0], sizes = [129, 132], strides = [1, 1]} : vector<131x132xf32> to vector<129x132xf32>
    %27 = arith.minimumf %25, %26 : vector<129x132xf32>
    %28 = vector.extract_strided_slice %27 {offsets = [0, 0], sizes = [128, 132], strides = [1, 1]} : vector<129x132xf32> to vector<128x132xf32>
    %29 = vector.extract_strided_slice %27 {offsets = [1, 0], sizes = [128, 132], strides = [1, 1]} : vector<129x132xf32> to vector<128x132xf32>
    %30 = arith.minimumf %28, %29 : vector<128x132xf32>
    %31 = vector.extract_strided_slice %21 {offsets = [0, 0], sizes = [128, 131], strides = [1, 1]} : vector<128x132xf32> to vector<128x131xf32>
    %32 = vector.extract_strided_slice %21 {offsets = [0, 1], sizes = [128, 131], strides = [1, 1]} : vector<128x132xf32> to vector<128x131xf32>
    %33 = arith.maximumf %31, %32 : vector<128x131xf32>
    %34 = vector.extract_strided_slice %33 {offsets = [0, 0], sizes = [128, 129], strides = [1, 1]} : vector<128x131xf32> to vector<128x129xf32>
    %35 = vector.extract_strided_slice %33 {offsets = [0, 2], sizes = [128, 129], strides = [1, 1]} : vector<128x131xf32> to vector<128x129xf32>
    %36 = arith.maximumf %34, %35 : vector<128x129xf32>
    %37 = vector.extract_strided_slice %36 {offsets = [0, 0], sizes = [128, 128], strides = [1, 1]} : vector<128x129xf32> to vector<128x128xf32>
    %38 = vector.extract_strided_slice %36 {offsets = [0, 1], sizes = [128, 128], strides = [1, 1]} : vector<128x129xf32> to vector<128x128xf32>
    %39 = arith.maximumf %37, %38 : vector<128x128xf32>
    %40 = vector.extract_strided_slice %30 {offsets = [0, 0], sizes = [128, 131], strides = [1, 1]} : vector<128x132xf32> to vector<128x131xf32>
    %41 = vector.extract_strided_slice %30 {offsets = [0, 1], sizes = [128, 131], strides = [1, 1]} : vector<128x132xf32> to vector<128x131xf32>
    %42 = arith.minimumf %40, %41 : vector<128x131xf32>
    %43 = vector.extract_strided_slice %42 {offsets = [0, 0], sizes = [128, 129], strides = [1, 1]} : vector<128x131xf32> to vector<128x129xf32>
    %44 = vector.extract_strided_slice %42 {offsets = [0, 2], sizes = [128, 129], strides = [1, 1]} : vector<128x131xf32> to vector<128x129xf32>
    %45 = arith.minimumf %43, %44 : vector<128x129xf32>
    %46 = vector.extract_strided_slice %45 {offsets = [0, 0], sizes = [128, 128], strides = [1, 1]} : vector<128x129xf32> to vector<128x128xf32>
    %47 = vector.extract_strided_slice %45 {offsets = [0, 1], sizes = [128, 128], strides = [1, 1]} : vector<128x129xf32> to vector<128x128xf32>
    %48 = arith.minimumf %46, %47 : vector<128x128xf32>
    %cst_18 = arith.constant 1.000000e+00 : f32
    %49 = vector.broadcast %cst_18 : f32 to vector<128x128xf32>
    %50 = arith.cmpf oeq, %48, %49 : vector<128x128xf32>
    %cst_19 = arith.constant 1.000000e+00 : f32
    %51 = vector.broadcast %cst_19 : f32 to vector<128x128xf32>
    %52 = arith.cmpf oeq, %39, %51 : vector<128x128xf32>
    %cst_20 = arith.constant 5.000000e-01 : f32
    %cst_21 = arith.constant 0.000000e+00 : f32
    %53 = vector.broadcast %cst_20 : f32 to vector<128x128xf32>
    %54 = vector.broadcast %cst_21 : f32 to vector<128x128xf32>
    %55 = arith.select %52, %53, %54 : vector<128x128xi1>, vector<128x128xf32>
    %cst_22 = arith.constant 1.000000e+00 : f32
    %56 = vector.broadcast %cst_22 : f32 to vector<128x128xf32>
    %57 = arith.select %50, %56, %55 : vector<128x128xi1>, vector<128x128xf32>
    %58 = vector.shape_cast %57 : vector<128x128xf32> to vector<1x1x128x128xf32>
    %c0_23 = arith.constant 0 : index
    %c0_24 = arith.constant 0 : index
    %c0_25 = arith.constant 0 : index
    %c0_26 = arith.constant 0 : index
    %59 = vector.load %arg8[%c0_23, %c0_24, %c0_25, %c0_26] : memref<1x1x128x128xf32, #tpu.memory_space<vmem>>, vector<1x1x128x128xf32>
    tpu.vector_store %arg8[%c0_23, %c0_24, %c0_25, %c0_26], %58 {strides = array<i32>} : memref<1x1x128x128xf32, #tpu.memory_space<vmem>>, vector<1x1x128x128xf32>,
    return
  }
  func.func @transform_0(%arg0: i32, %arg1: i32) -> (i32, i32, i32) {
    %c0_i32 = arith.constant 0 : i32
    %c0_i32_0 = arith.constant 0 : i32
    %c0_i32_1 = arith.constant 0 : i32
    return %arg0, %c0_i32, %c0_i32_0 : i32, i32, i32
  }
  func.func @transform_1(%arg0: i32, %arg1: i32) -> (i32, i32, i32) {
    %c0_i32 = arith.constant 0 : i32
    %c0_i32_0 = arith.constant 0 : i32
    %c0_i32_1 = arith.constant 0 : i32
    return %arg1, %c0_i32, %c0_i32_0 : i32, i32, i32
  }
  func.func @transform_2(%arg0: i32, %arg1: i32) -> (i32, i32) {
    %c0_i32 = arith.constant 0 : i32
    %c0_i32_0 = arith.constant 0 : i32
    return %arg1, %c0_i32 : i32, i32
  }
  func.func @transform_3(%arg0: i32, %arg1: i32) -> (i32, i32) {
    %c0_i32 = arith.constant 0 : i32
    %c0_i32_0 = arith.constant 0 : i32
    %c0_i32_1 = arith.constant 0 : i32
    return %c0_i32, %c0_i32_0 : i32, i32
  }
  func.func @transform_4(%arg0: i32, %arg1: i32) -> (i32, i32) {
    %c0_i32 = arith.constant 0 : i32
    %c0_i32_0 = arith.constant 0 : i32
    %c0_i32_1 = arith.constant 0 : i32
    return %c0_i32, %c0_i32_0 : i32, i32
  }
  func.func @transform_5(%arg0: i32, %arg1: i32) -> (i32, i32, i32, i32) {
    %c0_i32 = arith.constant 0 : i32
    %c0_i32_0 = arith.constant 0 : i32
    %c0_i32_1 = arith.constant 0 : i32
    return %arg0, %c0_i32, %arg1, %c0_i32_0 : i32, i32, i32, i32
  }
  func.func @transform_6(%arg0: i32, %arg1: i32) -> (i32, i32, i32, i32) {
    %c0_i32 = arith.constant 0 : i32
    %c0_i32_0 = arith.constant 0 : i32
    %c0_i32_1 = arith.constant 0 : i32
    return %arg0, %c0_i32, %arg1, %c0_i32_0 : i32, i32, i32, i32
  }
}

</mosaic_0001>

<llo_original>
// kernel: squeeze.1
$region0: #{squeeze.1}
  %s0 = inlined_call_operand.vmem [shape: f32[2,256], index: 0, kind: input, shape index: {}]
  %s1 = inlined_call_operand.vmem [shape: f32[2,16,16], index: 1, kind: output, shape index: {}]
  $region1: #{squeeze.1} parent=0
    #allocation0 [shape = 'u8[8192]{0}', space=vmem, size = 0x2000, scoped, tag = 'scoped mem for input reshape']
    %s3 = sshllo.u32 0, 2
    %s4 = scalar_lea.vmem %s0, 2
    %v5 = vld [vmem:[%s4] sm:%s3]
    %s6 = scalar_lea.vmem [#allocation0], 8
    %7 = vst [vmem:[%s6] sm:%s3] %v5
    %v8 = vld [vmem:[%s0] sm:%s3]
    %9 = vst [vmem:[#allocation0] sm:%s3] %v8
    %v10 = vld [vmem:[#allocation0] sm:$0x3]
    %vm11 = vcmask 130048
    %12 = vst.msk [vmem:[%s1] ss:$16 sm:$0x3] %vm11, %v10
    %s13 = scalar_lea.vmem [#allocation0], 8
    %v14 = vld [vmem:[%s13] sm:$0x3]
    %vm15 = vcmask 130048
    %s16 = scalar_lea.vmem %s1, 8
    %17 = vst.msk [vmem:[%s16] ss:$16 sm:$0x3] %vm15, %v14
    %v18 = vld.sshfl [vmem:[#allocation0] sm:$0xff pattern:$0x99999180]
    %19 = vrot.lane.b32.xlu0 %v18, 112
    %v20 = vpop.permute.xlu0 %19
    %vm21 = vcmask 130048
    %s22 = scalar_lea.vmem %s1, 1
    %23 = vst.msk [vmem:[%s22] ss:$8 sm:$0xf] %vm21, %v20
    %v24 = vld.sshfl [vmem:[#allocation0] sm:$0xff pattern:$0x99999180]
    %25 = vrot.lane.b32.xlu0 %v24, 96
    %v26 = vpop.permute.xlu0 %25
    %vm27 = vcmask 130048
    %s28 = scalar_lea.vmem %s1, 2
    %29 = vst.msk [vmem:[%s28] ss:$8 sm:$0xf] %vm27, %v26
    %v30 = vld.sshfl [vmem:[#allocation0] sm:$0xff pattern:$0x99999180]
    %31 = vrot.lane.b32.xlu0 %v30, 80
    %v32 = vpop.permute.xlu0 %31
    %vm33 = vcmask 130048
    %s34 = scalar_lea.vmem %s1, 3
    %35 = vst.msk [vmem:[%s34] ss:$8 sm:$0xf] %vm33, %v32
    %v36 = vld.sshfl [vmem:[#allocation0] sm:$0xff pattern:$0x99999180]
    %37 = vrot.lane.b32.xlu0 %v36, 64
    %v38 = vpop.permute.xlu0 %37
    %vm39 = vcmask 130048
    %s40 = scalar_lea.vmem %s1, 4
    %41 = vst.msk [vmem:[%s40] ss:$8 sm:$0xf] %vm39, %v38
    %v42 = vld.sshfl [vmem:[#allocation0] sm:$0xff pattern:$0x99999180]
    %43 = vrot.lane.b32.xlu0 %v42, 48
    %v44 = vpop.permute.xlu0 %43
    %vm45 = vcmask 130048
    %s46 = scalar_lea.vmem %s1, 5
    %47 = vst.msk [vmem:[%s46] ss:$8 sm:$0xf] %vm45, %v44
    %v48 = vld.sshfl [vmem:[#allocation0] sm:$0xff pattern:$0x99999180]
    %49 = vrot.lane.b32.xlu0 %v48, 32
    %v50 = vpop.permute.xlu0 %49
    %vm51 = vcmask 130048
    %s52 = scalar_lea.vmem %s1, 6
    %53 = vst.msk [vmem:[%s52] ss:$8 sm:$0xf] %vm51, %v50
    %v54 = vld.sshfl [vmem:[#allocation0] sm:$0xff pattern:$0x99999180]
    %55 = vrot.lane.b32.xlu0 %v54, 16
    %v56 = vpop.permute.xlu0 %55
    %vm57 = vcmask 130048
    %s58 = scalar_lea.vmem %s1, 7
    %59 = vst.msk [vmem:[%s58] ss:$8 sm:$0xf] %vm57, %v56

// kernel: in_context_correspondence_forward.2
$region0: #{in_context_correspondence_forward.2}
  #allocation0 [shape = 'u32[]', space=smem, size = 0x4, offset = 0x4, fixed_abs, tag = 'smem constant byte address 0x4 - core index']
  #allocation1 [shape = 'u32[144,128]{1,0:T(1,128)}', space=vmem, size = 0x12000, scoped, tag = 'internal scratch']
  #allocation2 [shape = 'f32[1,256]{1,0:T(1,128)}', space=vmem, size = 0x400, scoped, tag = 'scratch operand']
  #allocation3 [shape = 'f32[1,256]{1,0:T(1,128)}', space=vmem, size = 0x400, scoped, tag = 'scratch operand']
  %s0 = inlined_call_operand.vmem [shape: bf16[2,256,32], index: 0, kind: input, shape index: {}]
  %s1 = inlined_call_operand.vmem [shape: bf16[2,256,32], index: 1, kind: input, shape index: {}]
  %s2 = inlined_call_operand.vmem [shape: f32[2,1,256], index: 2, kind: input, shape index: {}]
  %s3 = inlined_call_operand.vmem [shape: f32[2,1,256], index: 3, kind: output, shape index: {}]
  %s4 = sld [smem:[#allocation0]]
  $region53: #{in_context_correspondence_forward.2} parent=0
    _
  %s6 = ssub.s32 1, %s4
  %s7 = scalar_select 0, %s6, %s4
  loop: start=0, step=1, limit=4
  $region2: #{in_context_correspondence_forward.2} parent=0 // loop_pre_header
    _
  $region3: #{in_context_correspondence_forward.2} parent=0 // loop_header
    %s9 = sphi 0, %s13
    %p10 = scmp.ge.s32.totalorder %s9, 4
    %s16 = sphi 0, %s35
    %s17 = sphi 0, %s31
    %s18 = sphi 0, %s27
    %s19 = sphi 0, %s16
    %s20 = sphi 0, %s17
    %s21 = sphi 0, %s18
    %s22 = sphi 0, %s19
    %s23 = sphi 0, %s20
    %s24 = sphi 0, %s21
    %s40 = sphi 0, %s42
    %s43 = sphi 0, %s40
    %s44 = sphi 0, %s43
    %s60 = sphi 0, %s44
    %s68 = sphi 0, %s70
    %s71 = sphi 0, %s68
    %s72 = sphi 0, %s71
    %s88 = sphi 0, %s72
    %s96 = sphi 0, %s98
    %s99 = sphi 0, %s96
    %s100 = sphi 0, %s99
    %s116 = sphi 0, %s100
    %s124 = sphi 0, %s126
    %s127 = sphi 0, %s124
    %s128 = sphi 0, %s127
    %s144 = sphi 0, %s128
  $region4: #{in_context_correspondence_forward.2} parent=0 // loop_header_branch
    %12 = sbr.rel (%p10) target = $region8
  $region5: #{in_context_correspondence_forward.2} parent=0 // loop_body
    %s14 = ssub.s32 %s9, 1
    %s15 = ssub.s32 %s9, 2
    %s25 = sadd.s32 1, %s18
    %p26 = scmp.ge.s32.totalorder %s25, 1
    %s27 = scalar_select %p26, 0, %s25
    %s28 = sadd.s32 1, %s17
    %s29 = scalar_select %p26, %s28, %s17
    %p30 = scmp.ge.s32.totalorder %s29, 1
    %s31 = scalar_select %p30, 0, %s29
    %s32 = sadd.s32 1, %s16
    %s33 = scalar_select %p30, %s32, %s16
    %p34 = scmp.ge.s32.totalorder %s33, 2
    %s35 = scalar_select %p34, 0, %s33
    %s36 = ssub.s32 %s16, %s35
    %s37 = ssub.s32 %s17, %s31
    %s38 = sor.u32 %s36, %s37
    %p39 = scmp.eq.s32.totalorder %s38, 0
    %s41 = sadd.s32 %s40, 1
    %s42 = scalar_select %p39, %s40, %s41
    %p45 = pneg %p39
    %p46 = scmp.eq.s32.totalorder %s9, 1
    %p47 = por %p45, %p46
    %p48 = scmp.ne.s32.totalorder %s40, %s43
    %p49 = scmp.eq.s32.totalorder %s9, 0
    %p50 = por %p48, %p49
    %p51 = scmp.ne.s32.totalorder %s40, %s43
    %p52 = scmp.eq.s32.totalorder %s14, 1
    %p53 = por %p51, %p52
    %p54 = scmp.ne.s32.totalorder %s43, %s44
    %p55 = scmp.eq.s32.totalorder %s14, 0
    %p56 = por %p54, %p55
    %p57 = scmp.ne.s32.totalorder %s43, %s44
    %p58 = scmp.eq.s32.totalorder %s15, 1
    %p59 = por %p57, %p58
    %p61 = scmp.ne.s32.totalorder %s44, %s60
    %p62 = scmp.eq.s32.totalorder %s15, 0
    %p63 = por %p61, %p62
    %s64 = ssub.s32 %s16, %s35
    %s65 = ssub.s32 %s18, %s27
    %s66 = sor.u32 %s64, %s65
    %p67 = scmp.eq.s32.totalorder %s66, 0
    %s69 = sadd.s32 %s68, 1
    %s70 = scalar_select %p67, %s68, %s69
    %p73 = pneg %p67
    %p74 = scmp.eq.s32.totalorder %s9, 1
    %p75 = por %p73, %p74
    %p76 = scmp.ne.s32.totalorder %s68, %s71
    %p77 = scmp.eq.s32.totalorder %s9, 0
    %p78 = por %p76, %p77
    %p79 = scmp.ne.s32.totalorder %s68, %s71
    %p80 = scmp.eq.s32.totalorder %s14, 1
    %p81 = por %p79, %p80
    %p82 = scmp.ne.s32.totalorder %s71, %s72
    %p83 = scmp.eq.s32.totalorder %s14, 0
    %p84 = por %p82, %p83
    %p85 = scmp.ne.s32.totalorder %s71, %s72
    %p86 = scmp.eq.s32.totalorder %s15, 1
    %p87 = por %p85, %p86
    %p89 = scmp.ne.s32.totalorder %s72, %s88
    %p90 = scmp.eq.s32.totalorder %s15, 0
    %p91 = por %p89, %p90
    %s92 = ssub.s32 %s16, %s35
    %s93 = ssub.s32 %s18, %s27
    %s94 = sor.u32 %s92, %s93
    %p95 = scmp.eq.s32.totalorder %s94, 0
    %s97 = sadd.s32 %s96, 1
    %s98 = scalar_select %p95, %s96, %s97
    %p101 = pneg %p95
    %p102 = scmp.eq.s32.totalorder %s9, 1
    %p103 = por %p101, %p102
    %p104 = scmp.ne.s32.totalorder %s96, %s99
    %p105 = scmp.eq.s32.totalorder %s9, 0
    %p106 = por %p104, %p105
    %p107 = scmp.ne.s32.totalorder %s96, %s99
    %p108 = scmp.eq.s32.totalorder %s14, 1
    %p109 = por %p107, %p108
    %p110 = scmp.ne.s32.totalorder %s99, %s100
    %p111 = scmp.eq.s32.totalorder %s14, 0
    %p112 = por %p110, %p111
    %p113 = scmp.ne.s32.totalorder %s99, %s100
    %p114 = scmp.eq.s32.totalorder %s15, 1
    %p115 = por %p113, %p114
    %p117 = scmp.ne.s32.totalorder %s100, %s116
    %p118 = scmp.eq.s32.totalorder %s15, 0
    %p119 = por %p117, %p118
    %s120 = ssub.s32 %s16, %s35
    %s121 = ssub.s32 %s17, %s31
    %s122 = sor.u32 %s120, %s121
    %p123 = scmp.eq.s32.totalorder %s122, 0
    %s125 = sadd.s32 %s124, 1
    %s126 = scalar_select %p123, %s124, %s125
    %p129 = pneg %p123
    %p130 = scmp.eq.s32.totalorder %s9, 1
    %p131 = por %p129, %p130
    %p132 = scmp.ne.s32.totalorder %s124, %s127
    %p133 = scmp.eq.s32.totalorder %s9, 0
    %p134 = por %p132, %p133
    %p135 = scmp.ne.s32.totalorder %s124, %s127
    %p136 = scmp.eq.s32.totalorder %s14, 1
    %p137 = por %p135, %p136
    %p138 = scmp.ne.s32.totalorder %s127, %s128
    %p139 = scmp.eq.s32.totalorder %s14, 0
    %p140 = por %p138, %p139
    %p141 = scmp.ne.s32.totalorder %s127, %s128
    %p142 = scmp.eq.s32.totalorder %s15, 1
    %p143 = por %p141, %p142
    %p145 = scmp.ne.s32.totalorder %s128, %s144
    %p146 = scmp.eq.s32.totalorder %s15, 0
    %p147 = por %p145, %p146
    %p148 = scmp.le.s32.totalorder 1, %s9
    %p149 = scmp.lt.s32.totalorder %s9, 3
    %p150 = pnand %p148, %p149
    %p151 = pneg %p150
    // Predicated region
    $region9: #{in_context_correspondence_forward.2} parent=5 // pred_check
      _
    $region10: #{in_context_correspondence_forward.2} parent=5 // pred_check_branch
      %153 = sbr.rel (%p150) target = $region12
    $region11: #{in_context_correspondence_forward.2} parent=5 // pred_region
      %s154 = ssub.s32 %s9, 1
    $region12: #{in_context_correspondence_forward.2} parent=5 // pred_fallthru
      _
    %p155 = scmp.lt.s32.totalorder %s9, 2
    // Predicated region
    $region13: #{in_context_correspondence_forward.2} parent=5 // pred_check
      %p156 = pneg %p155
    $region14: #{in_context_correspondence_forward.2} parent=5 // pred_check_branch
      %158 = sbr.rel (%p156) target = $region16
    $region15: #{in_context_correspondence_forward.2} parent=5 // pred_region
      // Predicated region
      $region17: #{in_context_correspondence_forward.2} parent=15 // pred_check
        %p159 = pneg %p50
      $region18: #{in_context_correspondence_forward.2} parent=15 // pred_check_branch
        %161 = sbr.rel (%p159) target = $region20
      $region19: #{in_context_correspondence_forward.2} parent=15 // pred_region
        %s162 = smul.u32 32, %s17
        %p163 = scmp.lt.s32.totalorder %s16, 1
        %s164 = scalar_select %p163, %s16, 1
        %p165 = scmp.lt.s32.totalorder %s162, 31
        %s166 = scalar_select %p165, %s162, 31
        %s167 = smul.addr %s164, 32
        %s168 = sadd.s32 %s166, %s167
        %s169 = smul.addr %s168, 4
        %s170 = scalar_lea.vmem %s0, %s169
        %s171 = smul.u32 32, %s17
      $region20: #{in_context_correspondence_forward.2} parent=15 // pred_fallthru
        _
      // Predicated region
      $region21: #{in_context_correspondence_forward.2} parent=15 // pred_check
        %p172 = pneg %p78
      $region22: #{in_context_correspondence_forward.2} parent=15 // pred_check_branch
        %174 = sbr.rel (%p172) target = $region24
      $region23: #{in_context_correspondence_forward.2} parent=15 // pred_region
        %s175 = smul.u32 32, %s18
        %p176 = scmp.lt.s32.totalorder %s16, 1
        %s177 = scalar_select %p176, %s16, 1
        %p178 = scmp.lt.s32.totalorder %s175, 31
        %s179 = scalar_select %p178, %s175, 31
        %s180 = smul.addr %s177, 32
        %s181 = sadd.s32 %s179, %s180
        %s182 = smul.addr %s181, 4
        %s183 = scalar_lea.vmem %s1, %s182
        %s184 = smul.u32 32, %s18
      $region24: #{in_context_correspondence_forward.2} parent=15 // pred_fallthru
        _
      // Predicated region
      $region25: #{in_context_correspondence_forward.2} parent=15 // pred_check
        %p185 = pneg %p106
      $region26: #{in_context_correspondence_forward.2} parent=15 // pred_check_branch
        %187 = sbr.rel (%p185) target = $region28
      $region27: #{in_context_correspondence_forward.2} parent=15 // pred_region
        %s188 = smul.u32 2, %s18
        %p189 = scmp.lt.s32.totalorder %s16, 1
        %s190 = scalar_select %p189, %s16, 1
        %p191 = scmp.lt.s32.totalorder %s188, 1
        %s192 = scalar_select %p191, %s188, 1
        %s193 = smul.addr %s190, 2
        %s194 = sadd.s32 %s192, %s193
        %s195 = scalar_lea.vmem %s2, %s194
        %s196 = smul.u32 2, %s18
      $region28: #{in_context_correspondence_forward.2} parent=15 // pred_fallthru
        _
    $region16: #{in_context_correspondence_forward.2} parent=5 // pred_fallthru
      _
    %p197 = scmp.le.s32.totalorder 1, %s9
    %p198 = scmp.lt.s32.totalorder %s9, 3
    %p199 = pnand %p197, %p198
    %p200 = pneg %p199
    // Predicated region
    $region29: #{in_context_correspondence_forward.2} parent=5 // pred_check
      _
    $region30: #{in_context_correspondence_forward.2} parent=5 // pred_check_branch
      %202 = sbr.rel (%p199) target = $region32
    $region31: #{in_context_correspondence_forward.2} parent=5 // pred_region
      %s203 = ssub.s32 %s9, 1
      %s204 = smul.u32 32, %s20
      %p205 = scmp.lt.s32.totalorder %s19, 1
      %s206 = scalar_select %p205, %s19, 1
      %p207 = scmp.lt.s32.totalorder %s204, 31
      %s208 = scalar_select %p207, %s204, 31
      %s209 = smul.addr %s206, 32
      %s210 = sadd.s32 %s208, %s209
      %s211 = smul.addr %s210, 4
      %s212 = scalar_lea.vmem %s0, %s211
      %p213 = pneg %p56
      %p214 = pneg %p53
      %s215 = smul.u32 32, %s21
      %p216 = scmp.lt.s32.totalorder %s19, 1
      %s217 = scalar_select %p216, %s19, 1
      %p218 = scmp.lt.s32.totalorder %s215, 31
      %s219 = scalar_select %p218, %s215, 31
      %s220 = smul.addr %s217, 32
      %s221 = sadd.s32 %s219, %s220
      %s222 = smul.addr %s221, 4
      %s223 = scalar_lea.vmem %s1, %s222
      %p224 = pneg %p84
      %p225 = pneg %p81
      %s226 = smul.u32 2, %s21
      %p227 = scmp.lt.s32.totalorder %s19, 1
      %s228 = scalar_select %p227, %s19, 1
      %p229 = scmp.lt.s32.totalorder %s226, 1
      %s230 = scalar_select %p229, %s226, 1
      %s231 = smul.addr %s228, 2
      %s232 = sadd.s32 %s230, %s231
      %s233 = scalar_lea.vmem %s2, %s232
      %p234 = pneg %p112
      %p235 = pneg %p109
      %p236 = pneg %p140
      %p237 = pneg %p137
      %s238 = smul.u32 2, %s20
      %p239 = scmp.lt.s32.totalorder %s19, 1
      %s240 = scalar_select %p239, %s19, 1
      %p241 = scmp.lt.s32.totalorder %s238, 1
      %s242 = scalar_select %p241, %s238, 1
      %s243 = smul.addr %s240, 2
      %s244 = sadd.s32 %s242, %s243
      %s245 = scalar_lea.vmem %s3, %s244
      %s246 = smul.u32 32, %s20
      %p247 = scmp.lt.s32.totalorder %s19, 1
      %s248 = scalar_select %p247, %s19, 1
      %p249 = scmp.lt.s32.totalorder %s246, 31
      %s250 = scalar_select %p249, %s246, 31
      %s251 = smul.addr %s248, 32
      %s252 = sadd.s32 %s250, %s251
      %s253 = smul.addr %s252, 4
      %s254 = scalar_lea.vmem %s0, %s253
      %s255 = smul.u32 32, %s20
      %s256 = smul.u32 32, %s21
      %p257 = scmp.lt.s32.totalorder %s19, 1
      %s258 = scalar_select %p257, %s19, 1
      %p259 = scmp.lt.s32.totalorder %s256, 31
      %s260 = scalar_select %p259, %s256, 31
      %s261 = smul.addr %s258, 32
      %s262 = sadd.s32 %s260, %s261
      %s263 = smul.addr %s262, 4
      %s264 = scalar_lea.vmem %s1, %s263
      %s265 = smul.u32 32, %s21
      %s266 = smul.u32 2, %s21
      %p267 = scmp.lt.s32.totalorder %s19, 1
      %s268 = scalar_select %p267, %s19, 1
      %p269 = scmp.lt.s32.totalorder %s266, 1
      %s270 = scalar_select %p269, %s266, 1
      %s271 = smul.addr %s268, 2
      %s272 = sadd.s32 %s270, %s271
      %s273 = scalar_lea.vmem %s2, %s272
      %s274 = smul.u32 2, %s21
      %s275 = smul.u32 2, %s20
      %p276 = scmp.lt.s32.totalorder %s19, 1
      %s277 = scalar_select %p276, %s19, 1
      %p278 = scmp.lt.s32.totalorder %s275, 1
      %s279 = scalar_select %p278, %s275, 1
      %s280 = smul.addr %s277, 2
      %s281 = sadd.s32 %s279, %s280
      %s282 = scalar_lea.vmem %s3, %s281
      %s283 = smul.u32 2, %s20
      %p285 = scmp.eq.s32.totalorder %s21, 0
      // Predicated region
      $region33: #{in_context_correspondence_forward.2} parent=31 // pred_check
        %p286 = pneg %p285
      $region34: #{in_context_correspondence_forward.2} parent=31 // pred_check_branch
        %288 = sbr.rel (%p286) target = $region36
      $region35: #{in_context_correspondence_forward.2} parent=31 // pred_region
        %v289 = vlaneseq
        %vm290 = vcmp.ge.s32.totalorder %v289, 0
        %vm291 = vcmp.lt.s32.totalorder %v289, 256
        %vm292 = vmand %vm290, %vm291
        %293 = vst.msk [vmem:[#allocation2] sm:$0x3] %vm292, -inf
        %294 = vst.msk [vmem:[#allocation3] sm:$0x3] %vm292, 0.0
      $region36: #{in_context_correspondence_forward.2} parent=31 // pred_fallthru
        _
      %v295 = vld [vmem:[%s254] sm:$0xf]
      %v296 = vld [vmem:[%s254 + $0x4] sm:$0xf]
      %v297 = vld [vmem:[%s254 + $0x8] sm:$0xf]
      %v298 = vld [vmem:[%s254 + $0xc] sm:$0xf]
      %v299 = vld [vmem:[%s254 + $0x10] sm:$0xf]
      %v300 = vld [vmem:[%s254 + $0x14] sm:$0xf]
      %v301 = vld [vmem:[%s254 + $0x18] sm:$0xf]
      %v302 = vld [vmem:[%s254 + $0x1c] sm:$0xf]
      %v303 = vld [vmem:[%s254 + $0x20] sm:$0xf]
      %v304 = vld [vmem:[%s254 + $0x24] sm:$0xf]
      %v305 = vld [vmem:[%s254 + $0x28] sm:$0xf]
      %v306 = vld [vmem:[%s254 + $0x2c] sm:$0xf]
      %v307 = vld [vmem:[%s254 + $0x30] sm:$0xf]
      %v308 = vld [vmem:[%s254 + $0x34] sm:$0xf]
      %v309 = vld [vmem:[%s254 + $0x38] sm:$0xf]
      %v310 = vld [vmem:[%s254 + $0x3c] sm:$0xf]
      %v311 = vld [vmem:[%s254 + $0x40] sm:$0xf]
      %v312 = vld [vmem:[%s254 + $0x44] sm:$0xf]
      %v313 = vld [vmem:[%s254 + $0x48] sm:$0xf]
      %v314 = vld [vmem:[%s254 + $0x4c] sm:$0xf]
      %v315 = vld [vmem:[%s254 + $0x50] sm:$0xf]
      %v316 = vld [vmem:[%s254 + $0x54] sm:$0xf]
      %v317 = vld [vmem:[%s254 + $0x58] sm:$0xf]
      %v318 = vld [vmem:[%s254 + $0x5c] sm:$0xf]
      %v319 = vld [vmem:[%s254 + $0x60] sm:$0xf]
      %v320 = vld [vmem:[%s254 + $0x64] sm:$0xf]
      %v321 = vld [vmem:[%s254 + $0x68] sm:$0xf]
      %v322 = vld [vmem:[%s254 + $0x6c] sm:$0xf]
      %v323 = vld [vmem:[%s254 + $0x70] sm:$0xf]
      %v324 = vld [vmem:[%s254 + $0x74] sm:$0xf]
      %v325 = vld [vmem:[%s254 + $0x78] sm:$0xf]
      %v326 = vld [vmem:[%s254 + $0x7c] sm:$0xf]
      %v327 = vld [vmem:[%s264] sm:$0xf]
      %v328 = vld [vmem:[%s264 + $0x4] sm:$0xf]
      %v329 = vld [vmem:[%s264 + $0x8] sm:$0xf]
      %v330 = vld [vmem:[%s264 + $0xc] sm:$0xf]
      %v331 = vld [vmem:[%s264 + $0x10] sm:$0xf]
      %v332 = vld [vmem:[%s264 + $0x14] sm:$0xf]
      %v333 = vld [vmem:[%s264 + $0x18] sm:$0xf]
      %v334 = vld [vmem:[%s264 + $0x1c] sm:$0xf]
      %v335 = vld [vmem:[%s264 + $0x20] sm:$0xf]
      %v336 = vld [vmem:[%s264 + $0x24] sm:$0xf]
      %v337 = vld [vmem:[%s264 + $0x28] sm:$0xf]
      %v338 = vld [vmem:[%s264 + $0x2c] sm:$0xf]
      %v339 = vld [vmem:[%s264 + $0x30] sm:$0xf]
      %v340 = vld [vmem:[%s264 + $0x34] sm:$0xf]
      %v341 = vld [vmem:[%s264 + $0x38] sm:$0xf]
      %v342 = vld [vmem:[%s264 + $0x3c] sm:$0xf]
      %v343 = vld [vmem:[%s264 + $0x40] sm:$0xf]
      %v344 = vld [vmem:[%s264 + $0x44] sm:$0xf]
      %v345 = vld [vmem:[%s264 + $0x48] sm:$0xf]
      %v346 = vld [vmem:[%s264 + $0x4c] sm:$0xf]
      %v347 = vld [vmem:[%s264 + $0x50] sm:$0xf]
      %v348 = vld [vmem:[%s264 + $0x54] sm:$0xf]
      %v349 = vld [vmem:[%s264 + $0x58] sm:$0xf]
      %v350 = vld [vmem:[%s264 + $0x5c] sm:$0xf]
      %v351 = vld [vmem:[%s264 + $0x60] sm:$0xf]
      %v352 = vld [vmem:[%s264 + $0x64] sm:$0xf]
      %v353 = vld [vmem:[%s264 + $0x68] sm:$0xf]
      %v354 = vld [vmem:[%s264 + $0x6c] sm:$0xf]
      %v355 = vld [vmem:[%s264 + $0x70] sm:$0xf]
      %v356 = vld [vmem:[%s264 + $0x74] sm:$0xf]
      %v357 = vld [vmem:[%s264 + $0x78] sm:$0xf]
      %v358 = vld [vmem:[%s264 + $0x7c] sm:$0xf]
      %v359 = vld [vmem:[%s273] sm:$0x3]
      %v392 = vunpack.c.l.b16 %v327
      %v393 = vunpack.c.l.b16 %v328
      %v394 = vunpack.c.l.b16 %v329
      %v395 = vunpack.c.l.b16 %v330
      %v396 = vunpack.c.l.b16 %v331
      %v397 = vunpack.c.l.b16 %v332
      %v398 = vunpack.c.l.b16 %v333
      %v399 = vunpack.c.l.b16 %v334
      %v400 = vunpack.c.l.b16 %v335
      %v401 = vunpack.c.l.b16 %v336
      %v402 = vunpack.c.l.b16 %v337
      %v403 = vunpack.c.l.b16 %v338
      %v404 = vunpack.c.l.b16 %v339
      %v405 = vunpack.c.l.b16 %v340
      %v406 = vunpack.c.l.b16 %v341
      %v407 = vunpack.c.l.b16 %v342
      %v408 = vunpack.c.l.b16 %v343
      %v409 = vunpack.c.l.b16 %v344
      %v410 = vunpack.c.l.b16 %v345
      %v411 = vunpack.c.l.b16 %v346
      %v412 = vunpack.c.l.b16 %v347
      %v413 = vunpack.c.l.b16 %v348
      %v414 = vunpack.c.l.b16 %v349
      %v415 = vunpack.c.l.b16 %v350
      %v416 = vunpack.c.l.b16 %v351
      %v417 = vunpack.c.l.b16 %v352
      %v418 = vunpack.c.l.b16 %v353
      %v419 = vunpack.c.l.b16 %v354
      %v420 = vunpack.c.l.b16 %v355
      %v421 = vunpack.c.l.b16 %v356
      %v422 = vunpack.c.l.b16 %v357
      %v423 = vunpack.c.l.b16 %v358
      %v424 = vpack.c.b16 %v393, %v392
      %v425 = vpack.c.b16 %v395, %v394
      %v426 = vpack.c.b16 %v397, %v396
      %v427 = vpack.c.b16 %v399, %v398
      %v428 = vpack.c.b16 %v401, %v400
      %v429 = vpack.c.b16 %v403, %v402
      %v430 = vpack.c.b16 %v405, %v404
      %v431 = vpack.c.b16 %v407, %v406
      %v432 = vpack.c.b16 %v409, %v408
      %v433 = vpack.c.b16 %v411, %v410
      %v434 = vpack.c.b16 %v413, %v412
      %v435 = vpack.c.b16 %v415, %v414
      %v436 = vpack.c.b16 %v417, %v416
      %v437 = vpack.c.b16 %v419, %v418
      %v438 = vpack.c.b16 %v421, %v420
      %v439 = vpack.c.b16 %v423, %v422
      %v472 = vunpack.c.l.b16 %v295
      %v473 = vunpack.c.l.b16 %v296
      %v474 = vunpack.c.l.b16 %v297
      %v475 = vunpack.c.l.b16 %v298
      %v476 = vunpack.c.l.b16 %v299
      %v477 = vunpack.c.l.b16 %v300
      %v478 = vunpack.c.l.b16 %v301
      %v479 = vunpack.c.l.b16 %v302
      %v480 = vunpack.c.l.b16 %v303
      %v481 = vunpack.c.l.b16 %v304
      %v482 = vunpack.c.l.b16 %v305
      %v483 = vunpack.c.l.b16 %v306
      %v484 = vunpack.c.l.b16 %v307
      %v485 = vunpack.c.l.b16 %v308
      %v486 = vunpack.c.l.b16 %v309
      %v487 = vunpack.c.l.b16 %v310
      %v488 = vunpack.c.l.b16 %v311
      %v489 = vunpack.c.l.b16 %v312
      %v490 = vunpack.c.l.b16 %v313
      %v491 = vunpack.c.l.b16 %v314
      %v492 = vunpack.c.l.b16 %v315
      %v493 = vunpack.c.l.b16 %v316
      %v494 = vunpack.c.l.b16 %v317
      %v495 = vunpack.c.l.b16 %v318
      %v496 = vunpack.c.l.b16 %v319
      %v497 = vunpack.c.l.b16 %v320
      %v498 = vunpack.c.l.b16 %v321
      %v499 = vunpack.c.l.b16 %v322
      %v500 = vunpack.c.l.b16 %v323
      %v501 = vunpack.c.l.b16 %v324
      %v502 = vunpack.c.l.b16 %v325
      %v503 = vunpack.c.l.b16 %v326
      %v504 = vpack.c.b16 %v473, %v472
      %v505 = vpack.c.b16 %v475, %v474
      %v506 = vpack.c.b16 %v477, %v476
      %v507 = vpack.c.b16 %v479, %v478
      %v508 = vpack.c.b16 %v481, %v480
      %v509 = vpack.c.b16 %v483, %v482
      %v510 = vpack.c.b16 %v485, %v484
      %v511 = vpack.c.b16 %v487, %v486
      %v512 = vpack.c.b16 %v489, %v488
      %v513 = vpack.c.b16 %v491, %v490
      %v514 = vpack.c.b16 %v493, %v492
      %v515 = vpack.c.b16 %v495, %v494
      %v516 = vpack.c.b16 %v497, %v496
      %v517 = vpack.c.b16 %v499, %v498
      %v518 = vpack.c.b16 %v501, %v500
      %v519 = vpack.c.b16 %v503, %v502
      %vm520 = vcmask 261120
      %v522 = vsel %vm520, %v424, 0
      %v525 = vsel %vm520, %v425, 0
      %v528 = vsel %vm520, %v426, 0
      %v531 = vsel %vm520, %v427, 0
      %v534 = vsel %vm520, %v428, 0
      %v537 = vsel %vm520, %v429, 0
      %v540 = vsel %vm520, %v430, 0
      %v543 = vsel %vm520, %v431, 0
      %v546 = vsel %vm520, %v432, 0
      %v549 = vsel %vm520, %v433, 0
      %v552 = vsel %vm520, %v434, 0
      %v555 = vsel %vm520, %v435, 0
      %v558 = vsel %vm520, %v436, 0
      %v561 = vsel %vm520, %v437, 0
      %v564 = vsel %vm520, %v438, 0
      %v567 = vsel %vm520, %v439, 0
      %v570 = vsel %vm520, %v504, 0
      %v573 = vsel %vm520, %v505, 0
      %v576 = vsel %vm520, %v506, 0
      %v579 = vsel %vm520, %v507, 0
      %v582 = vsel %vm520, %v508, 0
      %v585 = vsel %vm520, %v509, 0
      %v588 = vsel %vm520, %v510, 0
      %v591 = vsel %vm520, %v511, 0
      %v594 = vsel %vm520, %v512, 0
      %v597 = vsel %vm520, %v513, 0
      %v600 = vsel %vm520, %v514, 0
      %v603 = vsel %vm520, %v515, 0
      %v606 = vsel %vm520, %v516, 0
      %v609 = vsel %vm520, %v517, 0
      %v612 = vsel %vm520, %v518, 0
      %v615 = vsel %vm520, %v519, 0
      %617 = vmatprep.subr.bf16.mxu0 0
      %618 = vmatpush1.bf16.xpose.msra.mxu0 %v570
      %619 = vmatprep.subr.bf16.mxu0 0
      %620 = vmatpush1.bf16.xpose.msra.mxu0 %v573
      %621 = vmatprep.subr.bf16.mxu0 0
      %622 = vmatpush1.bf16.xpose.msra.mxu0 %v576
      %623 = vmatprep.subr.bf16.mxu0 0
      %624 = vmatpush1.bf16.xpose.msra.mxu0 %v579
      %625 = vmatprep.subr.bf16.mxu0 0
      %626 = vmatpush1.bf16.xpose.msra.mxu0 %v582
      %627 = vmatprep.subr.bf16.mxu0 0
      %628 = vmatpush1.bf16.xpose.msra.mxu0 %v585
      %629 = vmatprep.subr.bf16.mxu0 0
      %630 = vmatpush1.bf16.xpose.msra.mxu0 %v588
      %631 = vmatprep.subr.bf16.mxu0 0
      %632 = vmatpush1.bf16.xpose.msra.mxu0 %v591
      %633 = vmatprep.subr.bf16.mxu0 0
      %634 = vmatpush1.bf16.xpose.msra.mxu0 %v594
      %635 = vmatprep.subr.bf16.mxu0 0
      %636 = vmatpush1.bf16.xpose.msra.mxu0 %v597
      %637 = vmatprep.subr.bf16.mxu0 0
      %638 = vmatpush1.bf16.xpose.msra.mxu0 %v600
      %639 = vmatprep.subr.bf16.mxu0 0
      %640 = vmatpush1.bf16.xpose.msra.mxu0 %v603
      %641 = vmatprep.subr.bf16.mxu0 0
      %642 = vmatpush1.bf16.xpose.msra.mxu0 %v606
      %643 = vmatprep.subr.bf16.mxu0 0
      %644 = vmatpush1.bf16.xpose.msra.mxu0 %v609
      %645 = vmatprep.subr.bf16.mxu0 0
      %646 = vmatpush1.bf16.xpose.msra.mxu0 %v612
      %647 = vmatprep.subr.bf16.mxu0 0
      %648 = vmatpush1.bf16.xpose.msra.mxu0 %v615
      %649 = vmatprep.mubr.bf16.mxu0 0
      %650 = vmatmul.mubr.bf16.gmra.mrb[0].mxu0 %v522
      %v651 = vpop.f32.mrb[0].mxu0
      %v652 = vadd.f32 0.0, %v651
      %v653 = vpop.f32.mrb[0].mxu0
      %v654 = vadd.f32 0.0, %v653
      %v655 = vpop.f32.mrb[0].mxu0
      %v656 = vadd.f32 0.0, %v655
      %v657 = vpop.f32.mrb[0].mxu0
      %v658 = vadd.f32 0.0, %v657
      %659 = vmatprep.mubr.bf16.mxu0 0
      %660 = vmatmul.mubr.bf16.gmra.mrb[0].mxu0 %v525
      %v661 = vpop.f32.mrb[0].mxu0
      %v662 = vadd.f32 0.0, %v661
      %v663 = vpop.f32.mrb[0].mxu0
      %v664 = vadd.f32 0.0, %v663
      %v665 = vpop.f32.mrb[0].mxu0
      %v666 = vadd.f32 0.0, %v665
      %v667 = vpop.f32.mrb[0].mxu0
      %v668 = vadd.f32 0.0, %v667
      %669 = vmatprep.mubr.bf16.mxu0 0
      %670 = vmatmul.mubr.bf16.gmra.mrb[0].mxu0 %v528
      %v671 = vpop.f32.mrb[0].mxu0
      %v672 = vadd.f32 0.0, %v671
      %v673 = vpop.f32.mrb[0].mxu0
      %v674 = vadd.f32 0.0, %v673
      %v675 = vpop.f32.mrb[0].mxu0
      %v676 = vadd.f32 0.0, %v675
      %v677 = vpop.f32.mrb[0].mxu0
      %v678 = vadd.f32 0.0, %v677
      %679 = vmatprep.mubr.bf16.mxu0 0
      %680 = vmatmul.mubr.bf16.gmra.mrb[0].mxu0 %v531
      %v681 = vpop.f32.mrb[0].mxu0
      %v682 = vadd.f32 0.0, %v681
      %v683 = vpop.f32.mrb[0].mxu0
      %v684 = vadd.f32 0.0, %v683
      %v685 = vpop.f32.mrb[0].mxu0
      %v686 = vadd.f32 0.0, %v685
      %v687 = vpop.f32.mrb[0].mxu0
      %v688 = vadd.f32 0.0, %v687
      %689 = vmatprep.mubr.bf16.mxu0 0
      %690 = vmatmul.mubr.bf16.gmra.mrb[0].mxu0 %v534
      %v691 = vpop.f32.mrb[0].mxu0
      %v692 = vadd.f32 0.0, %v691
      %v693 = vpop.f32.mrb[0].mxu0
      %v694 = vadd.f32 0.0, %v693
      %v695 = vpop.f32.mrb[0].mxu0
      %v696 = vadd.f32 0.0, %v695
      %v697 = vpop.f32.mrb[0].mxu0
      %v698 = vadd.f32 0.0, %v697
      %699 = vmatprep.mubr.bf16.mxu0 0
      %700 = vmatmul.mubr.bf16.gmra.mrb[0].mxu0 %v537
      %v701 = vpop.f32.mrb[0].mxu0
      %v702 = vadd.f32 0.0, %v701
      %v703 = vpop.f32.mrb[0].mxu0
      %v704 = vadd.f32 0.0, %v703
      %v705 = vpop.f32.mrb[0].mxu0
      %v706 = vadd.f32 0.0, %v705
      %v707 = vpop.f32.mrb[0].mxu0
      %v708 = vadd.f32 0.0, %v707
      %709 = vmatprep.mubr.bf16.mxu0 0
      %710 = vmatmul.mubr.bf16.gmra.mrb[0].mxu0 %v540
      %v711 = vpop.f32.mrb[0].mxu0
      %v712 = vadd.f32 0.0, %v711
      %v713 = vpop.f32.mrb[0].mxu0
      %v714 = vadd.f32 0.0, %v713
      %v715 = vpop.f32.mrb[0].mxu0
      %v716 = vadd.f32 0.0, %v715
      %v717 = vpop.f32.mrb[0].mxu0
      %v718 = vadd.f32 0.0, %v717
      %719 = vmatprep.mubr.bf16.mxu0 0
      %720 = vmatmul.mubr.bf16.gmra.mrb[0].mxu0 %v543
      %v721 = vpop.f32.mrb[0].mxu0
      %v722 = vadd.f32 0.0, %v721
      %v723 = vpop.f32.mrb[0].mxu0
      %v724 = vadd.f32 0.0, %v723
      %v725 = vpop.f32.mrb[0].mxu0
      %v726 = vadd.f32 0.0, %v725
      %v727 = vpop.f32.mrb[0].mxu0
      %v728 = vadd.f32 0.0, %v727
      %729 = vmatprep.mubr.bf16.mxu0 0
      %730 = vmatmul.mubr.bf16.gmra.mrb[0].mxu0 %v546
      %v731 = vpop.f32.mrb[0].mxu0
      %v732 = vadd.f32 0.0, %v731
      %v733 = vpop.f32.mrb[0].mxu0
      %v734 = vadd.f32 0.0, %v733
      %v735 = vpop.f32.mrb[0].mxu0
      %v736 = vadd.f32 0.0, %v735
      %v737 = vpop.f32.mrb[0].mxu0
      %v738 = vadd.f32 0.0, %v737
      %739 = vmatprep.mubr.bf16.mxu0 0
      %740 = vmatmul.mubr.bf16.gmra.mrb[0].mxu0 %v549
      %v741 = vpop.f32.mrb[0].mxu0
      %v742 = vadd.f32 0.0, %v741
      %v743 = vpop.f32.mrb[0].mxu0
      %v744 = vadd.f32 0.0, %v743
      %v745 = vpop.f32.mrb[0].mxu0
      %v746 = vadd.f32 0.0, %v745
      %v747 = vpop.f32.mrb[0].mxu0
      %v748 = vadd.f32 0.0, %v747
      %749 = vmatprep.mubr.bf16.mxu0 0
      %750 = vmatmul.mubr.bf16.gmra.mrb[0].mxu0 %v552
      %v751 = vpop.f32.mrb[0].mxu0
      %v752 = vadd.f32 0.0, %v751
      %v753 = vpop.f32.mrb[0].mxu0
      %v754 = vadd.f32 0.0, %v753
      %v755 = vpop.f32.mrb[0].mxu0
      %v756 = vadd.f32 0.0, %v755
      %v757 = vpop.f32.mrb[0].mxu0
      %v758 = vadd.f32 0.0, %v757
      %759 = vmatprep.mubr.bf16.mxu0 0
      %760 = vmatmul.mubr.bf16.gmra.mrb[0].mxu0 %v555
      %v761 = vpop.f32.mrb[0].mxu0
      %v762 = vadd.f32 0.0, %v761
      %v763 = vpop.f32.mrb[0].mxu0
      %v764 = vadd.f32 0.0, %v763
      %v765 = vpop.f32.mrb[0].mxu0
      %v766 = vadd.f32 0.0, %v765
      %v767 = vpop.f32.mrb[0].mxu0
      %v768 = vadd.f32 0.0, %v767
      %769 = vmatprep.mubr.bf16.mxu0 0
      %770 = vmatmul.mubr.bf16.gmra.mrb[0].mxu0 %v558
      %v771 = vpop.f32.mrb[0].mxu0
      %v772 = vadd.f32 0.0, %v771
      %v773 = vpop.f32.mrb[0].mxu0
      %v774 = vadd.f32 0.0, %v773
      %v775 = vpop.f32.mrb[0].mxu0
      %v776 = vadd.f32 0.0, %v775
      %v777 = vpop.f32.mrb[0].mxu0
      %v778 = vadd.f32 0.0, %v777
      %779 = vmatprep.mubr.bf16.mxu0 0
      %780 = vmatmul.mubr.bf16.gmra.mrb[0].mxu0 %v561
      %v781 = vpop.f32.mrb[0].mxu0
      %v782 = vadd.f32 0.0, %v781
      %v783 = vpop.f32.mrb[0].mxu0
      %v784 = vadd.f32 0.0, %v783
      %v785 = vpop.f32.mrb[0].mxu0
      %v786 = vadd.f32 0.0, %v785
      %v787 = vpop.f32.mrb[0].mxu0
      %v788 = vadd.f32 0.0, %v787
      %789 = vmatprep.mubr.bf16.mxu0 0
      %790 = vmatmul.mubr.bf16.gmra.mrb[0].mxu0 %v564
      %v791 = vpop.f32.mrb[0].mxu0
      %v792 = vadd.f32 0.0, %v791
      %v793 = vpop.f32.mrb[0].mxu0
      %v794 = vadd.f32 0.0, %v793
      %v795 = vpop.f32.mrb[0].mxu0
      %v796 = vadd.f32 0.0, %v795
      %v797 = vpop.f32.mrb[0].mxu0
      %v798 = vadd.f32 0.0, %v797
      %799 = vmatprep.mubr.bf16.mxu0 0
      %800 = vmatmul.mubr.bf16.gmra.mrb[0].mxu0 %v567
      %v801 = vpop.f32.mrb[0].mxu0
      %v802 = vadd.f32 0.0, %v801
      %v803 = vpop.f32.mrb[0].mxu0
      %v804 = vadd.f32 0.0, %v803
      %v805 = vpop.f32.mrb[0].mxu0
      %v806 = vadd.f32 0.0, %v805
      %v807 = vpop.f32.mrb[0].mxu0
      %v808 = vadd.f32 0.0, %v807
      %809 = vdwg.mxu0
      %v810 = vmax.f32 %v652, %v662
      %v811 = vmax.f32 %v656, %v666
      %v812 = vmax.f32 %v810, %v672
      %v813 = vmax.f32 %v811, %v676
      %v814 = vmax.f32 %v812, %v682
      %v815 = vmax.f32 %v813, %v686
      %v816 = vmax.f32 %v814, %v692
      %v817 = vmax.f32 %v815, %v696
      %v818 = vmax.f32 %v816, %v702
      %v819 = vmax.f32 %v817, %v706
      %v820 = vmax.f32 %v818, %v712
      %v821 = vmax.f32 %v819, %v716
      %v822 = vmax.f32 %v820, %v722
      %v823 = vmax.f32 %v821, %v726
      %v824 = vmax.f32 %v822, %v732
      %v825 = vmax.f32 %v823, %v736
      %v826 = vmax.f32 %v824, %v742
      %v827 = vmax.f32 %v825, %v746
      %v828 = vmax.f32 %v826, %v752
      %v829 = vmax.f32 %v827, %v756
      %v830 = vmax.f32 %v828, %v762
      %v831 = vmax.f32 %v829, %v766
      %v832 = vmax.f32 %v830, %v772
      %v833 = vmax.f32 %v831, %v776
      %v834 = vmax.f32 %v832, %v782
      %v835 = vmax.f32 %v833, %v786
      %v836 = vmax.f32 %v834, %v792
      %v837 = vmax.f32 %v835, %v796
      %v838 = vmax.f32 %v836, %v802
      %v839 = vmax.f32 %v837, %v806
      %v840 = vmax.f32 %v838, %v839
      %v841 = vrot.slane %v840, 4
      %v842 = vmax.f32 %v840, %v841
      %v843 = vrot.slane %v842, 2
      %v844 = vmax.f32 %v842, %v843
      %v845 = vrot.slane %v844, 1
      %v846 = vmax.f32 %v844, %v845
      %v847 = vmax.f32 %v654, %v664
      %v848 = vmax.f32 %v658, %v668
      %v849 = vmax.f32 %v847, %v674
      %v850 = vmax.f32 %v848, %v678
      %v851 = vmax.f32 %v849, %v684
      %v852 = vmax.f32 %v850, %v688
      %v853 = vmax.f32 %v851, %v694
      %v854 = vmax.f32 %v852, %v698
      %v855 = vmax.f32 %v853, %v704
      %v856 = vmax.f32 %v854, %v708
      %v857 = vmax.f32 %v855, %v714
      %v858 = vmax.f32 %v856, %v718
      %v859 = vmax.f32 %v857, %v724
      %v860 = vmax.f32 %v858, %v728
      %v861 = vmax.f32 %v859, %v734
      %v862 = vmax.f32 %v860, %v738
      %v863 = vmax.f32 %v861, %v744
      %v864 = vmax.f32 %v862, %v748
      %v865 = vmax.f32 %v863, %v754
      %v866 = vmax.f32 %v864, %v758
      %v867 = vmax.f32 %v865, %v764
      %v868 = vmax.f32 %v866, %v768
      %v869 = vmax.f32 %v867, %v774
      %v870 = vmax.f32 %v868, %v778
      %v871 = vmax.f32 %v869, %v784
      %v872 = vmax.f32 %v870, %v788
      %v873 = vmax.f32 %v871, %v794
      %v874 = vmax.f32 %v872, %v798
      %v875 = vmax.f32 %v873, %v804
      %v876 = vmax.f32 %v874, %v808
      %v877 = vmax.f32 %v875, %v876
      %v878 = vrot.slane %v877, 4
      %v879 = vmax.f32 %v877, %v878
      %v880 = vrot.slane %v879, 2
      %v881 = vmax.f32 %v879, %v880
      %v882 = vrot.slane %v881, 1
      %v883 = vmax.f32 %v881, %v882
      %v884 = vlaneseq
      %v885 = vshrl.u32 %v884, 7
      %v886 = vadd.s32 %v885, 8
      %v887 = vadd.s32 %v885, 16
      %v888 = vadd.s32 %v885, 24
      %v889 = vadd.s32 %v885, 32
      %v890 = vadd.s32 %v885, 40
      %v891 = vadd.s32 %v885, 48
      %v892 = vadd.s32 %v885, 56
      %v893 = vadd.s32 %v885, 64
      %v894 = vadd.s32 %v885, 72
      %v895 = vadd.s32 %v885, 80
      %v896 = vadd.s32 %v885, 88
      %v897 = vadd.s32 %v885, 96
      %v898 = vadd.s32 %v885, 104
      %v899 = vadd.s32 %v885, 112
      %v900 = vadd.s32 %v885, 120
      %v901 = vadd.s32 %v885, 128
      %v902 = vadd.s32 %v885, 136
      %v903 = vadd.s32 %v885, 144
      %v904 = vadd.s32 %v885, 152
      %v905 = vadd.s32 %v885, 160
      %v906 = vadd.s32 %v885, 168
      %v907 = vadd.s32 %v885, 176
      %v908 = vadd.s32 %v885, 184
      %v909 = vadd.s32 %v885, 192
      %v910 = vadd.s32 %v885, 200
      %v911 = vadd.s32 %v885, 208
      %v912 = vadd.s32 %v885, 216
      %v913 = vadd.s32 %v885, 224
      %v914 = vadd.s32 %v885, 232
      %v915 = vadd.s32 %v885, 240
      %v916 = vadd.s32 %v885, 248
      %vm917 = vcmp.ge.f32.partialorder %v652, %v846
      %vm918 = vcmp.ge.f32.partialorder %v654, %v883
      %vm919 = vcmp.ge.f32.partialorder %v656, %v846
      %vm920 = vcmp.ge.f32.partialorder %v658, %v883
      %vm921 = vcmp.ge.f32.partialorder %v662, %v846
      %vm922 = vcmp.ge.f32.partialorder %v664, %v883
      %vm923 = vcmp.ge.f32.partialorder %v666, %v846
      %vm924 = vcmp.ge.f32.partialorder %v668, %v883
      %vm925 = vcmp.ge.f32.partialorder %v672, %v846
      %vm926 = vcmp.ge.f32.partialorder %v674, %v883
      %vm927 = vcmp.ge.f32.partialorder %v676, %v846
      %vm928 = vcmp.ge.f32.partialorder %v678, %v883
      %vm929 = vcmp.ge.f32.partialorder %v682, %v846
      %vm930 = vcmp.ge.f32.partialorder %v684, %v883
      %vm931 = vcmp.ge.f32.partialorder %v686, %v846
      %vm932 = vcmp.ge.f32.partialorder %v688, %v883
      %vm933 = vcmp.ge.f32.partialorder %v692, %v846
      %vm934 = vcmp.ge.f32.partialorder %v694, %v883
      %vm935 = vcmp.ge.f32.partialorder %v696, %v846
      %vm936 = vcmp.ge.f32.partialorder %v698, %v883
      %vm937 = vcmp.ge.f32.partialorder %v702, %v846
      %vm938 = vcmp.ge.f32.partialorder %v704, %v883
      %vm939 = vcmp.ge.f32.partialorder %v706, %v846
      %vm940 = vcmp.ge.f32.partialorder %v708, %v883
      %vm941 = vcmp.ge.f32.partialorder %v712, %v846
      %vm942 = vcmp.ge.f32.partialorder %v714, %v883
      %vm943 = vcmp.ge.f32.partialorder %v716, %v846
      %vm944 = vcmp.ge.f32.partialorder %v718, %v883
      %vm945 = vcmp.ge.f32.partialorder %v722, %v846
      %vm946 = vcmp.ge.f32.partialorder %v724, %v883
      %vm947 = vcmp.ge.f32.partialorder %v726, %v846
      %vm948 = vcmp.ge.f32.partialorder %v728, %v883
      %vm949 = vcmp.ge.f32.partialorder %v732, %v846
      %vm950 = vcmp.ge.f32.partialorder %v734, %v883
      %vm951 = vcmp.ge.f32.partialorder %v736, %v846
      %vm952 = vcmp.ge.f32.partialorder %v738, %v883
      %vm953 = vcmp.ge.f32.partialorder %v742, %v846
      %vm954 = vcmp.ge.f32.partialorder %v744, %v883
      %vm955 = vcmp.ge.f32.partialorder %v746, %v846
      %vm956 = vcmp.ge.f32.partialorder %v748, %v883
      %vm957 = vcmp.ge.f32.partialorder %v752, %v846
      %vm958 = vcmp.ge.f32.partialorder %v754, %v883
      %vm959 = vcmp.ge.f32.partialorder %v756, %v846
      %vm960 = vcmp.ge.f32.partialorder %v758, %v883
      %vm961 = vcmp.ge.f32.partialorder %v762, %v846
      %vm962 = vcmp.ge.f32.partialorder %v764, %v883
      %vm963 = vcmp.ge.f32.partialorder %v766, %v846
      %vm964 = vcmp.ge.f32.partialorder %v768, %v883
      %vm965 = vcmp.ge.f32.partialorder %v772, %v846
      %vm966 = vcmp.ge.f32.partialorder %v774, %v883
      %vm967 = vcmp.ge.f32.partialorder %v776, %v846
      %vm968 = vcmp.ge.f32.partialorder %v778, %v883
      %vm969 = vcmp.ge.f32.partialorder %v782, %v846
      %vm970 = vcmp.ge.f32.partialorder %v784, %v883
      %vm971 = vcmp.ge.f32.partialorder %v786, %v846
      %vm972 = vcmp.ge.f32.partialorder %v788, %v883
      %vm973 = vcmp.ge.f32.partialorder %v792, %v846
      %vm974 = vcmp.ge.f32.partialorder %v794, %v883
      %vm975 = vcmp.ge.f32.partialorder %v796, %v846
      %vm976 = vcmp.ge.f32.partialorder %v798, %v883
      %vm977 = vcmp.ge.f32.partialorder %v802, %v846
      %vm978 = vcmp.ge.f32.partialorder %v804, %v883
      %vm979 = vcmp.ge.f32.partialorder %v806, %v846
      %vm980 = vcmp.ge.f32.partialorder %v808, %v883
      %v981 = vsel %vm917, %v885, 256
      %v982 = vsel %vm918, %v885, 256
      %v983 = vsel %vm919, %v886, 256
      %v984 = vsel %vm920, %v886, 256
      %v985 = vsel %vm921, %v887, 256
      %v986 = vsel %vm922, %v887, 256
      %v987 = vsel %vm923, %v888, 256
      %v988 = vsel %vm924, %v888, 256
      %v989 = vsel %vm925, %v889, 256
      %v990 = vsel %vm926, %v889, 256
      %v991 = vsel %vm927, %v890, 256
      %v992 = vsel %vm928, %v890, 256
      %v993 = vsel %vm929, %v891, 256
      %v994 = vsel %vm930, %v891, 256
      %v995 = vsel %vm931, %v892, 256
      %v996 = vsel %vm932, %v892, 256
      %v997 = vsel %vm933, %v893, 256
      %v998 = vsel %vm934, %v893, 256
      %v999 = vsel %vm935, %v894, 256
      %v1000 = vsel %vm936, %v894, 256
      %v1001 = vsel %vm937, %v895, 256
      %v1002 = vsel %vm938, %v895, 256
      %v1003 = vsel %vm939, %v896, 256
      %v1004 = vsel %vm940, %v896, 256
      %v1005 = vsel %vm941, %v897, 256
      %v1006 = vsel %vm942, %v897, 256
      %v1007 = vsel %vm943, %v898, 256
      %v1008 = vsel %vm944, %v898, 256
      %v1009 = vsel %vm945, %v899, 256
      %v1010 = vsel %vm946, %v899, 256
      %v1011 = vsel %vm947, %v900, 256
      %v1012 = vsel %vm948, %v900, 256
      %v1013 = vsel %vm949, %v901, 256
      %v1014 = vsel %vm950, %v901, 256
      %v1015 = vsel %vm951, %v902, 256
      %v1016 = vsel %vm952, %v902, 256
      %v1017 = vsel %vm953, %v903, 256
      %v1018 = vsel %vm954, %v903, 256
      %v1019 = vsel %vm955, %v904, 256
      %v1020 = vsel %vm956, %v904, 256
      %v1021 = vsel %vm957, %v905, 256
      %v1022 = vsel %vm958, %v905, 256
      %v1023 = vsel %vm959, %v906, 256
      %v1024 = vsel %vm960, %v906, 256
      %v1025 = vsel %vm961, %v907, 256
      %v1026 = vsel %vm962, %v907, 256
      %v1027 = vsel %vm963, %v908, 256
      %v1028 = vsel %vm964, %v908, 256
      %v1029 = vsel %vm965, %v909, 256
      %v1030 = vsel %vm966, %v909, 256
      %v1031 = vsel %vm967, %v910, 256
      %v1032 = vsel %vm968, %v910, 256
      %v1033 = vsel %vm969, %v911, 256
      %v1034 = vsel %vm970, %v911, 256
      %v1035 = vsel %vm971, %v912, 256
      %v1036 = vsel %vm972, %v912, 256
      %v1037 = vsel %vm973, %v913, 256
      %v1038 = vsel %vm974, %v913, 256
      %v1039 = vsel %vm975, %v914, 256
      %v1040 = vsel %vm976, %v914, 256
      %v1041 = vsel %vm977, %v915, 256
      %v1042 = vsel %vm978, %v915, 256
      %v1043 = vsel %vm979, %v916, 256
      %v1044 = vsel %vm980, %v916, 256
      %vm1045 = vcmp.lt.s32.totalorder %v981, %v985
      %v1046 = vsel %vm1045, %v981, %v985
      %vm1047 = vcmp.lt.s32.totalorder %v983, %v987
      %v1048 = vsel %vm1047, %v983, %v987
      %vm1049 = vcmp.lt.s32.totalorder %v1046, %v989
      %v1050 = vsel %vm1049, %v1046, %v989
      %vm1051 = vcmp.lt.s32.totalorder %v1048, %v991
      %v1052 = vsel %vm1051, %v1048, %v991
      %vm1053 = vcmp.lt.s32.totalorder %v1050, %v993
      %v1054 = vsel %vm1053, %v1050, %v993
      %vm1055 = vcmp.lt.s32.totalorder %v1052, %v995
      %v1056 = vsel %vm1055, %v1052, %v995
      %vm1057 = vcmp.lt.s32.totalorder %v1054, %v997
      %v1058 = vsel %vm1057, %v1054, %v997
      %vm1059 = vcmp.lt.s32.totalorder %v1056, %v999
      %v1060 = vsel %vm1059, %v1056, %v999
      %vm1061 = vcmp.lt.s32.totalorder %v1058, %v1001
      %v1062 = vsel %vm1061, %v1058, %v1001
      %vm1063 = vcmp.lt.s32.totalorder %v1060, %v1003
      %v1064 = vsel %vm1063, %v1060, %v1003
      %vm1065 = vcmp.lt.s32.totalorder %v1062, %v1005
      %v1066 = vsel %vm1065, %v1062, %v1005
      %vm1067 = vcmp.lt.s32.totalorder %v1064, %v1007
      %v1068 = vsel %vm1067, %v1064, %v1007
      %vm1069 = vcmp.lt.s32.totalorder %v1066, %v1009
      %v1070 = vsel %vm1069, %v1066, %v1009
      %vm1071 = vcmp.lt.s32.totalorder %v1068, %v1011
      %v1072 = vsel %vm1071, %v1068, %v1011
      %vm1073 = vcmp.lt.s32.totalorder %v1070, %v1013
      %v1074 = vsel %vm1073, %v1070, %v1013
      %vm1075 = vcmp.lt.s32.totalorder %v1072, %v1015
      %v1076 = vsel %vm1075, %v1072, %v1015
      %vm1077 = vcmp.lt.s32.totalorder %v1074, %v1017
      %v1078 = vsel %vm1077, %v1074, %v1017
      %vm1079 = vcmp.lt.s32.totalorder %v1076, %v1019
      %v1080 = vsel %vm1079, %v1076, %v1019
      %vm1081 = vcmp.lt.s32.totalorder %v1078, %v1021
      %v1082 = vsel %vm1081, %v1078, %v1021
      %vm1083 = vcmp.lt.s32.totalorder %v1080, %v1023
      %v1084 = vsel %vm1083, %v1080, %v1023
      %vm1085 = vcmp.lt.s32.totalorder %v1082, %v1025
      %v1086 = vsel %vm1085, %v1082, %v1025
      %vm1087 = vcmp.lt.s32.totalorder %v1084, %v1027
      %v1088 = vsel %vm1087, %v1084, %v1027
      %vm1089 = vcmp.lt.s32.totalorder %v1086, %v1029
      %v1090 = vsel %vm1089, %v1086, %v1029
      %vm1091 = vcmp.lt.s32.totalorder %v1088, %v1031
      %v1092 = vsel %vm1091, %v1088, %v1031
      %vm1093 = vcmp.lt.s32.totalorder %v1090, %v1033
      %v1094 = vsel %vm1093, %v1090, %v1033
      %vm1095 = vcmp.lt.s32.totalorder %v1092, %v1035
      %v1096 = vsel %vm1095, %v1092, %v1035
      %vm1097 = vcmp.lt.s32.totalorder %v1094, %v1037
      %v1098 = vsel %vm1097, %v1094, %v1037
      %vm1099 = vcmp.lt.s32.totalorder %v1096, %v1039
      %v1100 = vsel %vm1099, %v1096, %v1039
      %vm1101 = vcmp.lt.s32.totalorder %v1098, %v1041
      %v1102 = vsel %vm1101, %v1098, %v1041
      %vm1103 = vcmp.lt.s32.totalorder %v1100, %v1043
      %v1104 = vsel %vm1103, %v1100, %v1043
      %vm1105 = vcmp.lt.s32.totalorder %v1102, %v1104
      %v1106 = vsel %vm1105, %v1102, %v1104
      %v1107 = vrot.slane %v1106, 4
      %vm1108 = vcmp.lt.s32.totalorder %v1106, %v1107
      %v1109 = vsel %vm1108, %v1106, %v1107
      %v1110 = vrot.slane %v1109, 2
      %vm1111 = vcmp.lt.s32.totalorder %v1109, %v1110
      %v1112 = vsel %vm1111, %v1109, %v1110
      %v1113 = vrot.slane %v1112, 1
      %vm1114 = vcmp.lt.s32.totalorder %v1112, %v1113
      %v1115 = vsel %vm1114, %v1112, %v1113
      %vm1116 = vcmp.lt.s32.totalorder %v982, %v986
      %v1117 = vsel %vm1116, %v982, %v986
      %vm1118 = vcmp.lt.s32.totalorder %v984, %v988
      %v1119 = vsel %vm1118, %v984, %v988
      %vm1120 = vcmp.lt.s32.totalorder %v1117, %v990
      %v1121 = vsel %vm1120, %v1117, %v990
      %vm1122 = vcmp.lt.s32.totalorder %v1119, %v992
      %v1123 = vsel %vm1122, %v1119, %v992
      %vm1124 = vcmp.lt.s32.totalorder %v1121, %v994
      %v1125 = vsel %vm1124, %v1121, %v994
      %vm1126 = vcmp.lt.s32.totalorder %v1123, %v996
      %v1127 = vsel %vm1126, %v1123, %v996
      %vm1128 = vcmp.lt.s32.totalorder %v1125, %v998
      %v1129 = vsel %vm1128, %v1125, %v998
      %vm1130 = vcmp.lt.s32.totalorder %v1127, %v1000
      %v1131 = vsel %vm1130, %v1127, %v1000
      %vm1132 = vcmp.lt.s32.totalorder %v1129, %v1002
      %v1133 = vsel %vm1132, %v1129, %v1002
      %vm1134 = vcmp.lt.s32.totalorder %v1131, %v1004
      %v1135 = vsel %vm1134, %v1131, %v1004
      %vm1136 = vcmp.lt.s32.totalorder %v1133, %v1006
      %v1137 = vsel %vm1136, %v1133, %v1006
      %vm1138 = vcmp.lt.s32.totalorder %v1135, %v1008
      %v1139 = vsel %vm1138, %v1135, %v1008
      %vm1140 = vcmp.lt.s32.totalorder %v1137, %v1010
      %v1141 = vsel %vm1140, %v1137, %v1010
      %vm1142 = vcmp.lt.s32.totalorder %v1139, %v1012
      %v1143 = vsel %vm1142, %v1139, %v1012
      %vm1144 = vcmp.lt.s32.totalorder %v1141, %v1014
      %v1145 = vsel %vm1144, %v1141, %v1014
      %vm1146 = vcmp.lt.s32.totalorder %v1143, %v1016
      %v1147 = vsel %vm1146, %v1143, %v1016
      %vm1148 = vcmp.lt.s32.totalorder %v1145, %v1018
      %v1149 = vsel %vm1148, %v1145, %v1018
      %vm1150 = vcmp.lt.s32.totalorder %v1147, %v1020
      %v1151 = vsel %vm1150, %v1147, %v1020
      %vm1152 = vcmp.lt.s32.totalorder %v1149, %v1022
      %v1153 = vsel %vm1152, %v1149, %v1022
      %vm1154 = vcmp.lt.s32.totalorder %v1151, %v1024
      %v1155 = vsel %vm1154, %v1151, %v1024
      %vm1156 = vcmp.lt.s32.totalorder %v1153, %v1026
      %v1157 = vsel %vm1156, %v1153, %v1026
      %vm1158 = vcmp.lt.s32.totalorder %v1155, %v1028
      %v1159 = vsel %vm1158, %v1155, %v1028
      %vm1160 = vcmp.lt.s32.totalorder %v1157, %v1030
      %v1161 = vsel %vm1160, %v1157, %v1030
      %vm1162 = vcmp.lt.s32.totalorder %v1159, %v1032
      %v1163 = vsel %vm1162, %v1159, %v1032
      %vm1164 = vcmp.lt.s32.totalorder %v1161, %v1034
      %v1165 = vsel %vm1164, %v1161, %v1034
      %vm1166 = vcmp.lt.s32.totalorder %v1163, %v1036
      %v1167 = vsel %vm1166, %v1163, %v1036
      %vm1168 = vcmp.lt.s32.totalorder %v1165, %v1038
      %v1169 = vsel %vm1168, %v1165, %v1038
      %vm1170 = vcmp.lt.s32.totalorder %v1167, %v1040
      %v1171 = vsel %vm1170, %v1167, %v1040
      %vm1172 = vcmp.lt.s32.totalorder %v1169, %v1042
      %v1173 = vsel %vm1172, %v1169, %v1042
      %vm1174 = vcmp.lt.s32.totalorder %v1171, %v1044
      %v1175 = vsel %vm1174, %v1171, %v1044
      %vm1176 = vcmp.lt.s32.totalorder %v1173, %v1175
      %v1177 = vsel %vm1176, %v1173, %v1175
      %v1178 = vrot.slane %v1177, 4
      %vm1179 = vcmp.lt.s32.totalorder %v1177, %v1178
      %v1180 = vsel %vm1179, %v1177, %v1178
      %v1181 = vrot.slane %v1180, 2
      %vm1182 = vcmp.lt.s32.totalorder %v1180, %v1181
      %v1183 = vsel %vm1182, %v1180, %v1181
      %v1184 = vrot.slane %v1183, 1
      %vm1185 = vcmp.lt.s32.totalorder %v1183, %v1184
      %v1186 = vsel %vm1185, %v1183, %v1184
      %vm1187 = vcmp.eq.s32.totalorder %v885, %v1115
      %vm1188 = vcmp.eq.s32.totalorder %v885, %v1186
      %vm1189 = vcmp.eq.s32.totalorder %v886, %v1115
      %vm1190 = vcmp.eq.s32.totalorder %v886, %v1186
      %vm1191 = vcmp.eq.s32.totalorder %v887, %v1115
      %vm1192 = vcmp.eq.s32.totalorder %v887, %v1186
      %vm1193 = vcmp.eq.s32.totalorder %v888, %v1115
      %vm1194 = vcmp.eq.s32.totalorder %v888, %v1186
      %vm1195 = vcmp.eq.s32.totalorder %v889, %v1115
      %vm1196 = vcmp.eq.s32.totalorder %v889, %v1186
      %vm1197 = vcmp.eq.s32.totalorder %v890, %v1115
      %vm1198 = vcmp.eq.s32.totalorder %v890, %v1186
      %vm1199 = vcmp.eq.s32.totalorder %v891, %v1115
      %vm1200 = vcmp.eq.s32.totalorder %v891, %v1186
      %vm1201 = vcmp.eq.s32.totalorder %v892, %v1115
      %vm1202 = vcmp.eq.s32.totalorder %v892, %v1186
      %vm1203 = vcmp.eq.s32.totalorder %v893, %v1115
      %vm1204 = vcmp.eq.s32.totalorder %v893, %v1186
      %vm1205 = vcmp.eq.s32.totalorder %v894, %v1115
      %vm1206 = vcmp.eq.s32.totalorder %v894, %v1186
      %vm1207 = vcmp.eq.s32.totalorder %v895, %v1115
      %vm1208 = vcmp.eq.s32.totalorder %v895, %v1186
      %vm1209 = vcmp.eq.s32.totalorder %v896, %v1115
      %vm1210 = vcmp.eq.s32.totalorder %v896, %v1186
      %vm1211 = vcmp.eq.s32.totalorder %v897, %v1115
      %vm1212 = vcmp.eq.s32.totalorder %v897, %v1186
      %vm1213 = vcmp.eq.s32.totalorder %v898, %v1115
      %vm1214 = vcmp.eq.s32.totalorder %v898, %v1186
      %vm1215 = vcmp.eq.s32.totalorder %v899, %v1115
      %vm1216 = vcmp.eq.s32.totalorder %v899, %v1186
      %vm1217 = vcmp.eq.s32.totalorder %v900, %v1115
      %vm1218 = vcmp.eq.s32.totalorder %v900, %v1186
      %vm1219 = vcmp.eq.s32.totalorder %v901, %v1115
      %vm1220 = vcmp.eq.s32.totalorder %v901, %v1186
      %vm1221 = vcmp.eq.s32.totalorder %v902, %v1115
      %vm1222 = vcmp.eq.s32.totalorder %v902, %v1186
      %vm1223 = vcmp.eq.s32.totalorder %v903, %v1115
      %vm1224 = vcmp.eq.s32.totalorder %v903, %v1186
      %vm1225 = vcmp.eq.s32.totalorder %v904, %v1115
      %vm1226 = vcmp.eq.s32.totalorder %v904, %v1186
      %vm1227 = vcmp.eq.s32.totalorder %v905, %v1115
      %vm1228 = vcmp.eq.s32.totalorder %v905, %v1186
      %vm1229 = vcmp.eq.s32.totalorder %v906, %v1115
      %vm1230 = vcmp.eq.s32.totalorder %v906, %v1186
      %vm1231 = vcmp.eq.s32.totalorder %v907, %v1115
      %vm1232 = vcmp.eq.s32.totalorder %v907, %v1186
      %vm1233 = vcmp.eq.s32.totalorder %v908, %v1115
      %vm1234 = vcmp.eq.s32.totalorder %v908, %v1186
      %vm1235 = vcmp.eq.s32.totalorder %v909, %v1115
      %vm1236 = vcmp.eq.s32.totalorder %v909, %v1186
      %vm1237 = vcmp.eq.s32.totalorder %v910, %v1115
      %vm1238 = vcmp.eq.s32.totalorder %v910, %v1186
      %vm1239 = vcmp.eq.s32.totalorder %v911, %v1115
      %vm1240 = vcmp.eq.s32.totalorder %v911, %v1186
      %vm1241 = vcmp.eq.s32.totalorder %v912, %v1115
      %vm1242 = vcmp.eq.s32.totalorder %v912, %v1186
      %vm1243 = vcmp.eq.s32.totalorder %v913, %v1115
      %vm1244 = vcmp.eq.s32.totalorder %v913, %v1186
      %vm1245 = vcmp.eq.s32.totalorder %v914, %v1115
      %vm1246 = vcmp.eq.s32.totalorder %v914, %v1186
      %vm1247 = vcmp.eq.s32.totalorder %v915, %v1115
      %vm1248 = vcmp.eq.s32.totalorder %v915, %v1186
      %vm1249 = vcmp.eq.s32.totalorder %v916, %v1115
      %vm1250 = vcmp.eq.s32.totalorder %v916, %v1186
      %v1251 = vsel %vm1187, 1, 0
      %v1252 = vsel %vm1188, 1, 0
      %v1253 = vsel %vm1189, 1, 0
      %v1254 = vsel %vm1190, 1, 0
      %v1255 = vsel %vm1191, 1, 0
      %v1256 = vsel %vm1192, 1, 0
      %v1257 = vsel %vm1193, 1, 0
      %v1258 = vsel %vm1194, 1, 0
      %v1259 = vsel %vm1195, 1, 0
      %v1260 = vsel %vm1196, 1, 0
      %v1261 = vsel %vm1197, 1, 0
      %v1262 = vsel %vm1198, 1, 0
      %v1263 = vsel %vm1199, 1, 0
      %v1264 = vsel %vm1200, 1, 0
      %v1265 = vsel %vm1201, 1, 0
      %v1266 = vsel %vm1202, 1, 0
      %v1267 = vsel %vm1203, 1, 0
      %v1268 = vsel %vm1204, 1, 0
      %v1269 = vsel %vm1205, 1, 0
      %v1270 = vsel %vm1206, 1, 0
      %v1271 = vsel %vm1207, 1, 0
      %v1272 = vsel %vm1208, 1, 0
      %v1273 = vsel %vm1209, 1, 0
      %v1274 = vsel %vm1210, 1, 0
      %v1275 = vsel %vm1211, 1, 0
      %v1276 = vsel %vm1212, 1, 0
      %v1277 = vsel %vm1213, 1, 0
      %v1278 = vsel %vm1214, 1, 0
      %v1279 = vsel %vm1215, 1, 0
      %v1280 = vsel %vm1216, 1, 0
      %v1281 = vsel %vm1217, 1, 0
      %v1282 = vsel %vm1218, 1, 0
      %v1283 = vsel %vm1219, 1, 0
      %v1284 = vsel %vm1220, 1, 0
      %v1285 = vsel %vm1221, 1, 0
      %v1286 = vsel %vm1222, 1, 0
      %v1287 = vsel %vm1223, 1, 0
      %v1288 = vsel %vm1224, 1, 0
      %v1289 = vsel %vm1225, 1, 0
      %v1290 = vsel %vm1226, 1, 0
      %v1291 = vsel %vm1227, 1, 0
      %v1292 = vsel %vm1228, 1, 0
      %v1293 = vsel %vm1229, 1, 0
      %v1294 = vsel %vm1230, 1, 0
      %v1295 = vsel %vm1231, 1, 0
      %v1296 = vsel %vm1232, 1, 0
      %v1297 = vsel %vm1233, 1, 0
      %v1298 = vsel %vm1234, 1, 0
      %v1299 = vsel %vm1235, 1, 0
      %v1300 = vsel %vm1236, 1, 0
      %v1301 = vsel %vm1237, 1, 0
      %v1302 = vsel %vm1238, 1, 0
      %v1303 = vsel %vm1239, 1, 0
      %v1304 = vsel %vm1240, 1, 0
      %v1305 = vsel %vm1241, 1, 0
      %v1306 = vsel %vm1242, 1, 0
      %v1307 = vsel %vm1243, 1, 0
      %v1308 = vsel %vm1244, 1, 0
      %v1309 = vsel %vm1245, 1, 0
      %v1310 = vsel %vm1246, 1, 0
      %v1311 = vsel %vm1247, 1, 0
      %v1312 = vsel %vm1248, 1, 0
      %v1313 = vsel %vm1249, 1, 0
      %v1314 = vsel %vm1250, 1, 0
      %v1315 = vcvt.s32.f32 %v1251
      %v1316 = vcvt.s32.f32 %v1252
      %v1317 = vcvt.s32.f32 %v1253
      %v1318 = vcvt.s32.f32 %v1254
      %v1319 = vcvt.s32.f32 %v1255
      %v1320 = vcvt.s32.f32 %v1256
      %v1321 = vcvt.s32.f32 %v1257
      %v1322 = vcvt.s32.f32 %v1258
      %v1323 = vcvt.s32.f32 %v1259
      %v1324 = vcvt.s32.f32 %v1260
      %v1325 = vcvt.s32.f32 %v1261
      %v1326 = vcvt.s32.f32 %v1262
      %v1327 = vcvt.s32.f32 %v1263
      %v1328 = vcvt.s32.f32 %v1264
      %v1329 = vcvt.s32.f32 %v1265
      %v1330 = vcvt.s32.f32 %v1266
      %v1331 = vcvt.s32.f32 %v1267
      %v1332 = vcvt.s32.f32 %v1268
      %v1333 = vcvt.s32.f32 %v1269
      %v1334 = vcvt.s32.f32 %v1270
      %v1335 = vcvt.s32.f32 %v1271
      %v1336 = vcvt.s32.f32 %v1272
      %v1337 = vcvt.s32.f32 %v1273
      %v1338 = vcvt.s32.f32 %v1274
      %v1339 = vcvt.s32.f32 %v1275
      %v1340 = vcvt.s32.f32 %v1276
      %v1341 = vcvt.s32.f32 %v1277
      %v1342 = vcvt.s32.f32 %v1278
      %v1343 = vcvt.s32.f32 %v1279
      %v1344 = vcvt.s32.f32 %v1280
      %v1345 = vcvt.s32.f32 %v1281
      %v1346 = vcvt.s32.f32 %v1282
      %v1347 = vcvt.s32.f32 %v1283
      %v1348 = vcvt.s32.f32 %v1284
      %v1349 = vcvt.s32.f32 %v1285
      %v1350 = vcvt.s32.f32 %v1286
      %v1351 = vcvt.s32.f32 %v1287
      %v1352 = vcvt.s32.f32 %v1288
      %v1353 = vcvt.s32.f32 %v1289
      %v1354 = vcvt.s32.f32 %v1290
      %v1355 = vcvt.s32.f32 %v1291
      %v1356 = vcvt.s32.f32 %v1292
      %v1357 = vcvt.s32.f32 %v1293
      %v1358 = vcvt.s32.f32 %v1294
      %v1359 = vcvt.s32.f32 %v1295
      %v1360 = vcvt.s32.f32 %v1296
      %v1361 = vcvt.s32.f32 %v1297
      %v1362 = vcvt.s32.f32 %v1298
      %v1363 = vcvt.s32.f32 %v1299
      %v1364 = vcvt.s32.f32 %v1300
      %v1365 = vcvt.s32.f32 %v1301
      %v1366 = vcvt.s32.f32 %v1302
      %v1367 = vcvt.s32.f32 %v1303
      %v1368 = vcvt.s32.f32 %v1304
      %v1369 = vcvt.s32.f32 %v1305
      %v1370 = vcvt.s32.f32 %v1306
      %v1371 = vcvt.s32.f32 %v1307
      %v1372 = vcvt.s32.f32 %v1308
      %v1373 = vcvt.s32.f32 %v1309
      %v1374 = vcvt.s32.f32 %v1310
      %v1375 = vcvt.s32.f32 %v1311
      %v1376 = vcvt.s32.f32 %v1312
      %v1377 = vcvt.s32.f32 %v1313
      %v1378 = vcvt.s32.f32 %v1314
      %v1380 = vlaneseq
      %v1381 = vshrl.u32 %v1380, 7
      %v1382 = vsub.s32 0, %v1381
      %v1383 = vrot.slane %v359, %v1382
      %v1384 = vlaneseq
      %v1385 = vshrl.u32 %v1384, 7
      %v1386 = vsub.s32 1, %v1385
      %v1387 = vrot.slane %v359, %v1386
      %1390 = vmatprep.subr.mxu0 %v1316
      %1391 = vmatpush1.msra.mxu0 %v1315
      %1392 = vmatprep.subr.mxu0 %v1318
      %1393 = vmatpush1.msra.mxu0 %v1317
      %1394 = vmatprep.subr.mxu0 %v1320
      %1395 = vmatpush1.msra.mxu0 %v1319
      %1396 = vmatprep.subr.mxu0 %v1322
      %1397 = vmatpush1.msra.mxu0 %v1321
      %1398 = vmatprep.subr.mxu0 %v1324
      %1399 = vmatpush1.msra.mxu0 %v1323
      %1400 = vmatprep.subr.mxu0 %v1326
      %1401 = vmatpush1.msra.mxu0 %v1325
      %1402 = vmatprep.subr.mxu0 %v1328
      %1403 = vmatpush1.msra.mxu0 %v1327
      %1404 = vmatprep.subr.mxu0 %v1330
      %1405 = vmatpush1.msra.mxu0 %v1329
      %1406 = vmatprep.subr.mxu0 %v1332
      %1407 = vmatpush1.msra.mxu0 %v1331
      %1408 = vmatprep.subr.mxu0 %v1334
      %1409 = vmatpush1.msra.mxu0 %v1333
      %1410 = vmatprep.subr.mxu0 %v1336
      %1411 = vmatpush1.msra.mxu0 %v1335
      %1412 = vmatprep.subr.mxu0 %v1338
      %1413 = vmatpush1.msra.mxu0 %v1337
      %1414 = vmatprep.subr.mxu0 %v1340
      %1415 = vmatpush1.msra.mxu0 %v1339
      %1416 = vmatprep.subr.mxu0 %v1342
      %1417 = vmatpush1.msra.mxu0 %v1341
      %1418 = vmatprep.subr.mxu0 %v1344
      %1419 = vmatpush1.msra.mxu0 %v1343
      %1420 = vmatprep.subr.mxu0 %v1346
      %1421 = vmatpush1.msra.mxu0 %v1345
      %1422 = vmatprep.subr.mxu0 %v1348
      %1423 = vmatpush1.msra.mxu0 %v1347
      %1424 = vmatprep.subr.mxu0 %v1350
      %1425 = vmatpush1.msra.mxu0 %v1349
      %1426 = vmatprep.subr.mxu0 %v1352
      %1427 = vmatpush1.msra.mxu0 %v1351
      %1428 = vmatprep.subr.mxu0 %v1354
      %1429 = vmatpush1.msra.mxu0 %v1353
      %1430 = vmatprep.subr.mxu0 %v1356
      %1431 = vmatpush1.msra.mxu0 %v1355
      %1432 = vmatprep.subr.mxu0 %v1358
      %1433 = vmatpush1.msra.mxu0 %v1357
      %1434 = vmatprep.subr.mxu0 %v1360
      %1435 = vmatpush1.msra.mxu0 %v1359
      %1436 = vmatprep.subr.mxu0 %v1362
      %1437 = vmatpush1.msra.mxu0 %v1361
      %1438 = vmatprep.subr.mxu0 %v1364
      %1439 = vmatpush1.msra.mxu0 %v1363
      %1440 = vmatprep.subr.mxu0 %v1366
      %1441 = vmatpush1.msra.mxu0 %v1365
      %1442 = vmatprep.subr.mxu0 %v1368
      %1443 = vmatpush1.msra.mxu0 %v1367
      %1444 = vmatprep.subr.mxu0 %v1370
      %1445 = vmatpush1.msra.mxu0 %v1369
      %1446 = vmatprep.subr.mxu0 %v1372
      %1447 = vmatpush1.msra.mxu0 %v1371
      %1448 = vmatprep.subr.mxu0 %v1374
      %1449 = vmatpush1.msra.mxu0 %v1373
      %1450 = vmatprep.subr.mxu0 %v1376
      %1451 = vmatpush1.msra.mxu0 %v1375
      %1452 = vmatprep.subr.mxu0 %v1378
      %1453 = vmatpush1.msra.mxu0 %v1377
      %1454 = vmatprep.mubr.f32.mxu0 %v1387
      %1455 = vmatmul.mubr.f32.gmra.mrb[0].mxu0 %v1383
      %v1456 = vpop.f32.mrb[0].mxu0
      %v1457 = vadd.f32 0.0, %v1456
      %v1458 = vpop.f32.mrb[0].mxu0
      %v1459 = vadd.f32 0.0, %v1458
      %1460 = vdwg.mxu0
      %v1461 = vld [vmem:[#allocation2] sm:$0x3]
      %v1463 = vlaneseq
      %v1464 = vshrl.u32 %v1463, 7
      %v1465 = vsub.s32 0, %v1464
      %v1466 = vrot.slane %v1461, %v1465
      %v1467 = vlaneseq
      %v1468 = vshrl.u32 %v1467, 7
      %v1469 = vsub.s32 1, %v1468
      %v1470 = vrot.slane %v1461, %v1469
      %vm1473 = vcmp.gt.f32.partialorder %v846, %v1466
      %vm1474 = vcmp.gt.f32.partialorder %v883, %v1470
      %v1475 = vld [vmem:[#allocation3] sm:$0x3]
      %v1477 = vlaneseq
      %v1478 = vshrl.u32 %v1477, 7
      %v1479 = vsub.s32 0, %v1478
      %v1480 = vrot.slane %v1475, %v1479
      %v1481 = vlaneseq
      %v1482 = vshrl.u32 %v1481, 7
      %v1483 = vsub.s32 1, %v1482
      %v1484 = vrot.slane %v1475, %v1483
      %v1487 = vsel %vm1473, %v1457, %v1480
      %v1488 = vsel %vm1474, %v1459, %v1484
      %v1491 = vcombine.low %v1487, %v1488
      %v1493 = vunpack.c.l.s4 1966171168
      %v1494 = vunpack.c.0.s8 %v1493
      %v1495 = vlaneseq
      %v1496 = vshrl.u32 %v1495, 7
      %v1497 = vsub.s32 %v1494, %v1496
      %v1498 = vrot.slane %v1491, %v1497
      %v1500 = vunpack.c.l.s4 1966171168
      %v1501 = vunpack.c.0.s8 %v1500
      %v1502 = vlaneseq
      %v1503 = vshrl.u32 %v1502, 7
      %v1504 = vsub.s32 %v1501, %v1503
      %v1505 = vrot.slane %v1498, %v1504
      %v1507 = vlaneseq
      %vm1508 = vcmp.ge.s32.totalorder %v1507, 0
      %vm1509 = vcmp.lt.s32.totalorder %v1507, 256
      %vm1510 = vmand %vm1508, %vm1509
      %1511 = vst.msk [vmem:[#allocation3] sm:$0x3] %vm1510, %v1505
      %v1512 = vld [vmem:[#allocation2] sm:$0x3]
      %v1514 = vlaneseq
      %v1515 = vshrl.u32 %v1514, 7
      %v1516 = vsub.s32 0, %v1515
      %v1517 = vrot.slane %v1512, %v1516
      %v1518 = vlaneseq
      %v1519 = vshrl.u32 %v1518, 7
      %v1520 = vsub.s32 1, %v1519
      %v1521 = vrot.slane %v1512, %v1520
      %v1524 = vsel %vm1473, %v846, %v1517
      %v1525 = vsel %vm1474, %v883, %v1521
      %v1528 = vcombine.low %v1524, %v1525
      %v1530 = vunpack.c.l.s4 1966171168
      %v1531 = vunpack.c.0.s8 %v1530
      %v1532 = vlaneseq
      %v1533 = vshrl.u32 %v1532, 7
      %v1534 = vsub.s32 %v1531, %v1533
      %v1535 = vrot.slane %v1528, %v1534
      %v1537 = vunpack.c.l.s4 1966171168
      %v1538 = vunpack.c.0.s8 %v1537
      %v1539 = vlaneseq
      %v1540 = vshrl.u32 %v1539, 7
      %v1541 = vsub.s32 %v1538, %v1540
      %v1542 = vrot.slane %v1535, %v1541
      %1544 = vst.msk [vmem:[#allocation2] sm:$0x3] %vm1510, %v1542
      // Predicated region
      $region37: #{in_context_correspondence_forward.2} parent=31 // pred_check
        %p1545 = pneg %p285
      $region38: #{in_context_correspondence_forward.2} parent=31 // pred_check_branch
        %1547 = sbr.rel (%p1545) target = $region40
      $region39: #{in_context_correspondence_forward.2} parent=31 // pred_region
        %v1548 = vld [vmem:[#allocation3] sm:$0x3]
        %1549 = vst.msk [vmem:[%s282] sm:$0x3] %vm1510, %v1548
      $region40: #{in_context_correspondence_forward.2} parent=31 // pred_fallthru
        _
      %s1550 = smul.u32 2, %s20
      %p1551 = scmp.lt.s32.totalorder %s19, 1
      %s1552 = scalar_select %p1551, %s19, 1
      %p1553 = scmp.lt.s32.totalorder %s1550, 1
      %s1554 = scalar_select %p1553, %s1550, 1
      %s1555 = smul.addr %s1552, 2
      %s1556 = sadd.s32 %s1554, %s1555
      %s1557 = scalar_lea.vmem %s3, %s1556
      // Predicated region
      $region41: #{in_context_correspondence_forward.2} parent=31 // pred_check
        %p1558 = pneg %p137
      $region42: #{in_context_correspondence_forward.2} parent=31 // pred_check_branch
        %1560 = sbr.rel (%p1558) target = $region44
      $region43: #{in_context_correspondence_forward.2} parent=31 // pred_region
        %s1561 = smul.u32 2, %s20
      $region44: #{in_context_correspondence_forward.2} parent=31 // pred_fallthru
        _
    $region32: #{in_context_correspondence_forward.2} parent=5 // pred_fallthru
      _
    %p1562 = scmp.le.s32.totalorder 2, %s9
    // Predicated region
    $region45: #{in_context_correspondence_forward.2} parent=5 // pred_check
      %p1563 = pneg %p1562
    $region46: #{in_context_correspondence_forward.2} parent=5 // pred_check_branch
      %1565 = sbr.rel (%p1563) target = $region48
    $region47: #{in_context_correspondence_forward.2} parent=5 // pred_region
      %s1566 = ssub.s32 %s9, 2
      // Predicated region
      $region49: #{in_context_correspondence_forward.2} parent=47 // pred_check
        %p1567 = pneg %p143
      $region50: #{in_context_correspondence_forward.2} parent=47 // pred_check_branch
        %1569 = sbr.rel (%p1567) target = $region52
      $region51: #{in_context_correspondence_forward.2} parent=47 // pred_region
        %s1570 = smul.u32 2, %s23
        %p1571 = scmp.lt.s32.totalorder %s22, 1
        %s1572 = scalar_select %p1571, %s22, 1
        %p1573 = scmp.lt.s32.totalorder %s1570, 1
        %s1574 = scalar_select %p1573, %s1570, 1
        %s1575 = smul.addr %s1572, 2
        %s1576 = sadd.s32 %s1574, %s1575
        %s1577 = scalar_lea.vmem %s3, %s1576
      $region52: #{in_context_correspondence_forward.2} parent=47 // pred_fallthru
        _
    $region48: #{in_context_correspondence_forward.2} parent=5 // pred_fallthru
      _
  $region6: #{in_context_correspondence_forward.2} parent=0 // loop_footer
    %s13 = sadd.s32 1, %s9
  $region7: #{in_context_correspondence_forward.2} parent=0 // loop_footer_branch
    %8 = sbr.rel target = $region3
  $region8: #{in_context_correspondence_forward.2} parent=0 // loop_exit
    _

// kernel: in_context_correspondence_forward.3
$region0: #{in_context_correspondence_forward.3}
  #allocation0 [shape = 'u32[]', space=smem, size = 0x4, offset = 0x4, fixed_abs, tag = 'smem constant byte address 0x4 - core index']
  #allocation1 [shape = 'u32[144,128]{1,0:T(1,128)}', space=vmem, size = 0x12000, scoped, tag = 'internal scratch']
  %s0 = inlined_call_operand.vmem [shape: f32[2,16,16], index: 0, kind: input, shape index: {}]
  %s1 = inlined_call_operand.vmem [shape: f32[1,132,16], index: 1, kind: input, shape index: {}]
  %s2 = inlined_call_operand.vmem [shape: f32[128,16], index: 2, kind: input, shape index: {}]
  %s3 = inlined_call_operand.vmem [shape: f32[16,128], index: 3, kind: input, shape index: {}]
  %s4 = inlined_call_operand.vmem [shape: f32[16,132], index: 4, kind: input, shape index: {}]
  %s5 = inlined_call_operand.hbm [shape: f32[2,1,128,128], index: 5, kind: output, shape index: {0}]
  %s6 = inlined_call_operand.hbm [shape: f32[2,1,128,128], index: 6, kind: output, shape index: {1}]
  %7 = xla_tuple %s5, %s6
  %s8 = sld [smem:[#allocation0]]
  $region61: #{in_context_correspondence_forward.3} parent=0
    _
  %s10 = ssub.s32 1, %s8
  %s11 = scalar_select 0, %s10, %s8
  $region1: #{in_context_correspondence_forward.3} parent=0
    #allocation2 [shape = 'u8[131072]{0}', space=vmem, size = 0x20000, scoped, tag = 'output window, operand 0']
    #allocation3 [shape = 's32[2]{0}', space=sflag, size = 0x8, scoped, tag = 'scoped memory for in_context_correspondence_forward.3']
    #allocation4 [shape = 'u8[131072]{0}', space=vmem, size = 0x20000, scoped, tag = 'output window, operand 1']
    #allocation5 [shape = 's32[2]{0}', space=sflag, size = 0x8, scoped, tag = 'scoped memory for in_context_correspondence_forward.3']
    %12 = vsyncpa [#allocation3], 0
    %s13 = scalar_lea.sflag [#allocation3], 1
    %14 = vsyncpa %s13, 0
    %15 = vsyncpa [#allocation5], 0
    %s16 = scalar_lea.sflag [#allocation5], 1
    %17 = vsyncpa %s16, 0
    loop: start=0, step=1, limit=4
    $region2: #{in_context_correspondence_forward.3} parent=1 // loop_pre_header
      _
    $region3: #{in_context_correspondence_forward.3} parent=1 // loop_header
      %s19 = sphi 0, %s23
      %p20 = scmp.ge.s32.totalorder %s19, 4
      %s26 = sphi 0, %s38
      %s27 = sphi 0, %s34
      %s28 = sphi 0, %s26
      %s29 = sphi 0, %s27
      %s30 = sphi 0, %s28
      %s31 = sphi 0, %s29
      %s41 = sphi 0, %s43
      %s44 = sphi 0, %s41
      %s45 = sphi 0, %s44
      %s61 = sphi 0, %s45
      %s67 = sphi 0, %s69
      %s70 = sphi 0, %s67
      %s71 = sphi 0, %s70
      %s87 = sphi 0, %s71
      %s93 = sphi 0, %s95
      %s96 = sphi 0, %s93
      %s97 = sphi 0, %s96
      %s113 = sphi 0, %s97
      %s117 = sphi 0, %s117
      %s119 = sphi 0, %s117
      %s120 = sphi 0, %s119
      %s134 = sphi 0, %s120
      %s138 = sphi 0, %s138
      %s140 = sphi 0, %s138
      %s141 = sphi 0, %s140
      %s155 = sphi 0, %s141
      %s163 = sphi 0, %s165
      %s166 = sphi 0, %s163
      %s167 = sphi 0, %s166
      %s183 = sphi 0, %s167
      %s191 = sphi 0, %s193
      %s194 = sphi 0, %s191
      %s195 = sphi 0, %s194
      %s211 = sphi 0, %s195
    $region4: #{in_context_correspondence_forward.3} parent=1 // loop_header_branch
      %22 = sbr.rel (%p20) target = $region8
    $region5: #{in_context_correspondence_forward.3} parent=1 // loop_body
      %s24 = ssub.s32 %s19, 1
      %s25 = ssub.s32 %s19, 2
      %s32 = sadd.s32 1, %s27
      %p33 = scmp.ge.s32.totalorder %s32, 1
      %s34 = scalar_select %p33, 0, %s32
      %s35 = sadd.s32 1, %s26
      %s36 = scalar_select %p33, %s35, %s26
      %p37 = scmp.ge.s32.totalorder %s36, 2
      %s38 = scalar_select %p37, 0, %s36
      %s39 = ssub.s32 %s26, %s38
      %p40 = scmp.eq.s32.totalorder %s39, 0
      %s42 = sadd.s32 %s41, 1
      %s43 = scalar_select %p40, %s41, %s42
      %p46 = pneg %p40
      %p47 = scmp.eq.s32.totalorder %s19, 1
      %p48 = por %p46, %p47
      %p49 = scmp.ne.s32.totalorder %s41, %s44
      %p50 = scmp.eq.s32.totalorder %s19, 0
      %p51 = por %p49, %p50
      %p52 = scmp.ne.s32.totalorder %s41, %s44
      %p53 = scmp.eq.s32.totalorder %s24, 1
      %p54 = por %p52, %p53
      %p55 = scmp.ne.s32.totalorder %s44, %s45
      %p56 = scmp.eq.s32.totalorder %s24, 0
      %p57 = por %p55, %p56
      %p58 = scmp.ne.s32.totalorder %s44, %s45
      %p59 = scmp.eq.s32.totalorder %s25, 1
      %p60 = por %p58, %p59
      %p62 = scmp.ne.s32.totalorder %s45, %s61
      %p63 = scmp.eq.s32.totalorder %s25, 0
      %p64 = por %p62, %p63
      %s65 = ssub.s32 %s27, %s34
      %p66 = scmp.eq.s32.totalorder %s65, 0
      %s68 = sadd.s32 %s67, 1
      %s69 = scalar_select %p66, %s67, %s68
      %p72 = pneg %p66
      %p73 = scmp.eq.s32.totalorder %s19, 1
      %p74 = por %p72, %p73
      %p75 = scmp.ne.s32.totalorder %s67, %s70
      %p76 = scmp.eq.s32.totalorder %s19, 0
      %p77 = por %p75, %p76
      %p78 = scmp.ne.s32.totalorder %s67, %s70
      %p79 = scmp.eq.s32.totalorder %s24, 1
      %p80 = por %p78, %p79
      %p81 = scmp.ne.s32.totalorder %s70, %s71
      %p82 = scmp.eq.s32.totalorder %s24, 0
      %p83 = por %p81, %p82
      %p84 = scmp.ne.s32.totalorder %s70, %s71
      %p85 = scmp.eq.s32.totalorder %s25, 1
      %p86 = por %p84, %p85
      %p88 = scmp.ne.s32.totalorder %s71, %s87
      %p89 = scmp.eq.s32.totalorder %s25, 0
      %p90 = por %p88, %p89
      %s91 = ssub.s32 %s27, %s34
      %p92 = scmp.eq.s32.totalorder %s91, 0
      %s94 = sadd.s32 %s93, 1
      %s95 = scalar_select %p92, %s93, %s94
      %p98 = pneg %p92
      %p99 = scmp.eq.s32.totalorder %s19, 1
      %p100 = por %p98, %p99
      %p101 = scmp.ne.s32.totalorder %s93, %s96
      %p102 = scmp.eq.s32.totalorder %s19, 0
      %p103 = por %p101, %p102
      %p104 = scmp.ne.s32.totalorder %s93, %s96
      %p105 = scmp.eq.s32.totalorder %s24, 1
      %p106 = por %p104, %p105
      %p107 = scmp.ne.s32.totalorder %s96, %s97
      %p108 = scmp.eq.s32.totalorder %s24, 0
      %p109 = por %p107, %p108
      %p110 = scmp.ne.s32.totalorder %s96, %s97
      %p111 = scmp.eq.s32.totalorder %s25, 1
      %p112 = por %p110, %p111
      %p114 = scmp.ne.s32.totalorder %s97, %s113
      %p115 = scmp.eq.s32.totalorder %s25, 0
      %p116 = por %p114, %p115
      %s118 = sadd.s32 %s117, 1
      %p121 = scmp.eq.s32.totalorder %s19, 1
      %p122 = scmp.ne.s32.totalorder %s117, %s119
      %p123 = scmp.eq.s32.totalorder %s19, 0
      %p124 = por %p122, %p123
      %p125 = scmp.ne.s32.totalorder %s117, %s119
      %p126 = scmp.eq.s32.totalorder %s24, 1
      %p127 = por %p125, %p126
      %p128 = scmp.ne.s32.totalorder %s119, %s120
      %p129 = scmp.eq.s32.totalorder %s24, 0
      %p130 = por %p128, %p129
      %p131 = scmp.ne.s32.totalorder %s119, %s120
      %p132 = scmp.eq.s32.totalorder %s25, 1
      %p133 = por %p131, %p132
      %p135 = scmp.ne.s32.totalorder %s120, %s134
      %p136 = scmp.eq.s32.totalorder %s25, 0
      %p137 = por %p135, %p136
      %s139 = sadd.s32 %s138, 1
      %p142 = scmp.eq.s32.totalorder %s19, 1
      %p143 = scmp.ne.s32.totalorder %s138, %s140
      %p144 = scmp.eq.s32.totalorder %s19, 0
      %p145 = por %p143, %p144
      %p146 = scmp.ne.s32.totalorder %s138, %s140
      %p147 = scmp.eq.s32.totalorder %s24, 1
      %p148 = por %p146, %p147
      %p149 = scmp.ne.s32.totalorder %s140, %s141
      %p150 = scmp.eq.s32.totalorder %s24, 0
      %p151 = por %p149, %p150
      %p152 = scmp.ne.s32.totalorder %s140, %s141
      %p153 = scmp.eq.s32.totalorder %s25, 1
      %p154 = por %p152, %p153
      %p156 = scmp.ne.s32.totalorder %s141, %s155
      %p157 = scmp.eq.s32.totalorder %s25, 0
      %p158 = por %p156, %p157
      %s159 = ssub.s32 %s26, %s38
      %s160 = ssub.s32 %s27, %s34
      %s161 = sor.u32 %s159, %s160
      %p162 = scmp.eq.s32.totalorder %s161, 0
      %s164 = sadd.s32 %s163, 1
      %s165 = scalar_select %p162, %s163, %s164
      %p168 = pneg %p162
      %p169 = scmp.eq.s32.totalorder %s19, 1
      %p170 = por %p168, %p169
      %p171 = scmp.ne.s32.totalorder %s163, %s166
      %p172 = scmp.eq.s32.totalorder %s19, 0
      %p173 = por %p171, %p172
      %p174 = scmp.ne.s32.totalorder %s163, %s166
      %p175 = scmp.eq.s32.totalorder %s24, 1
      %p176 = por %p174, %p175
      %p177 = scmp.ne.s32.totalorder %s166, %s167
      %p178 = scmp.eq.s32.totalorder %s24, 0
      %p179 = por %p177, %p178
      %p180 = scmp.ne.s32.totalorder %s166, %s167
      %p181 = scmp.eq.s32.totalorder %s25, 1
      %p182 = por %p180, %p181
      %p184 = scmp.ne.s32.totalorder %s167, %s183
      %p185 = scmp.eq.s32.totalorder %s25, 0
      %p186 = por %p184, %p185
      %s187 = ssub.s32 %s26, %s38
      %s188 = ssub.s32 %s27, %s34
      %s189 = sor.u32 %s187, %s188
      %p190 = scmp.eq.s32.totalorder %s189, 0
      %s192 = sadd.s32 %s191, 1
      %s193 = scalar_select %p190, %s191, %s192
      %p196 = pneg %p190
      %p197 = scmp.eq.s32.totalorder %s19, 1
      %p198 = por %p196, %p197
      %p199 = scmp.ne.s32.totalorder %s191, %s194
      %p200 = scmp.eq.s32.totalorder %s19, 0
      %p201 = por %p199, %p200
      %p202 = scmp.ne.s32.totalorder %s191, %s194
      %p203 = scmp.eq.s32.totalorder %s24, 1
      %p204 = por %p202, %p203
      %p205 = scmp.ne.s32.totalorder %s194, %s195
      %p206 = scmp.eq.s32.totalorder %s24, 0
      %p207 = por %p205, %p206
      %p208 = scmp.ne.s32.totalorder %s194, %s195
      %p209 = scmp.eq.s32.totalorder %s25, 1
      %p210 = por %p208, %p209
      %p212 = scmp.ne.s32.totalorder %s195, %s211
      %p213 = scmp.eq.s32.totalorder %s25, 0
      %p214 = por %p212, %p213
      %p215 = scmp.le.s32.totalorder 1, %s19
      %p216 = scmp.lt.s32.totalorder %s19, 3
      %p217 = pnand %p215, %p216
      %p218 = pneg %p217
      // Predicated region
      $region9: #{in_context_correspondence_forward.3} parent=5 // pred_check
        _
      $region10: #{in_context_correspondence_forward.3} parent=5 // pred_check_branch
        %220 = sbr.rel (%p217) target = $region12
      $region11: #{in_context_correspondence_forward.3} parent=5 // pred_region
        %s221 = ssub.s32 %s19, 1
        // Predicated region
        $region13: #{in_context_correspondence_forward.3} parent=11 // pred_check
          %p222 = pneg %p83
        $region14: #{in_context_correspondence_forward.3} parent=11 // pred_check_branch
          %224 = sbr.rel (%p222) target = $region16
        $region15: #{in_context_correspondence_forward.3} parent=11 // pred_region
          %p225 = scmp.lt.s32.totalorder %s29, 0
          %s226 = scalar_select %p225, %s29, 0
          %s227 = smul.addr %s226, 17
          %s228 = smul.addr %s227, 8
          %s229 = scalar_lea.vmem %s1, %s228
        $region16: #{in_context_correspondence_forward.3} parent=11 // pred_fallthru
          _
        // Predicated region
        $region17: #{in_context_correspondence_forward.3} parent=11 // pred_check
          %p230 = pneg %p109
        $region18: #{in_context_correspondence_forward.3} parent=11 // pred_check_branch
          %232 = sbr.rel (%p230) target = $region20
        $region19: #{in_context_correspondence_forward.3} parent=11 // pred_region
          %s233 = smul.u32 16, %s29
          %p234 = scmp.lt.s32.totalorder %s233, 15
          %s235 = scalar_select %p234, %s233, 15
          %s236 = smul.addr %s235, 8
          %s237 = scalar_lea.vmem %s2, %s236
          %s238 = smul.u32 16, %s29
        $region20: #{in_context_correspondence_forward.3} parent=11 // pred_fallthru
          _
        // Predicated region
        $region21: #{in_context_correspondence_forward.3} parent=11 // pred_check
          %p239 = pneg %p130
        $region22: #{in_context_correspondence_forward.3} parent=11 // pred_check_branch
          %241 = sbr.rel (%p239) target = $region24
        $region23: #{in_context_correspondence_forward.3} parent=11 // pred_region
          _
        $region24: #{in_context_correspondence_forward.3} parent=11 // pred_fallthru
          _
        // Predicated region
        $region25: #{in_context_correspondence_forward.3} parent=11 // pred_check
          %p242 = pneg %p151
        $region26: #{in_context_correspondence_forward.3} parent=11 // pred_check_branch
          %244 = sbr.rel (%p242) target = $region28
        $region27: #{in_context_correspondence_forward.3} parent=11 // pred_region
          _
        $region28: #{in_context_correspondence_forward.3} parent=11 // pred_fallthru
          _
      $region12: #{in_context_correspondence_forward.3} parent=5 // pred_fallthru
        _
      %p245 = scmp.lt.s32.totalorder %s19, 2
      // Predicated region
      $region29: #{in_context_correspondence_forward.3} parent=5 // pred_check
        %p246 = pneg %p245
      $region30: #{in_context_correspondence_forward.3} parent=5 // pred_check_branch
        %248 = sbr.rel (%p246) target = $region32
      $region31: #{in_context_correspondence_forward.3} parent=5 // pred_region
        // Predicated region
        $region33: #{in_context_correspondence_forward.3} parent=31 // pred_check
          %p249 = pneg %p51
        $region34: #{in_context_correspondence_forward.3} parent=31 // pred_check_branch
          %251 = sbr.rel (%p249) target = $region36
        $region35: #{in_context_correspondence_forward.3} parent=31 // pred_region
          %p252 = scmp.lt.s32.totalorder %s26, 1
          %s253 = scalar_select %p252, %s26, 1
          %s254 = smul.addr %s253, 2
          %s255 = smul.addr %s254, 8
          %s256 = scalar_lea.vmem %s0, %s255
        $region36: #{in_context_correspondence_forward.3} parent=31 // pred_fallthru
          _
      $region32: #{in_context_correspondence_forward.3} parent=5 // pred_fallthru
        _
      %p257 = scmp.le.s32.totalorder 1, %s19
      %p258 = scmp.lt.s32.totalorder %s19, 3
      %p259 = pnand %p257, %p258
      %p260 = pneg %p259
      // Predicated region
      $region37: #{in_context_correspondence_forward.3} parent=5 // pred_check
        _
      $region38: #{in_context_correspondence_forward.3} parent=5 // pred_check_branch
        %262 = sbr.rel (%p259) target = $region40
      $region39: #{in_context_correspondence_forward.3} parent=5 // pred_region
        %s263 = ssub.s32 %s19, 1
        %p264 = scmp.lt.s32.totalorder %s28, 1
        %s265 = scalar_select %p264, %s28, 1
        %s266 = smul.addr %s265, 2
        %s267 = smul.addr %s266, 8
        %s268 = scalar_lea.vmem %s0, %s267
        %p269 = pneg %p57
        %p270 = pneg %p54
        %p271 = scmp.lt.s32.totalorder %s29, 0
        %s272 = scalar_select %p271, %s29, 0
        %s273 = smul.addr %s272, 17
        %s274 = smul.addr %s273, 8
        %s275 = scalar_lea.vmem %s1, %s274
        %p276 = pneg %p83
        %p277 = pneg %p80
        %s278 = smul.u32 16, %s29
        %p279 = scmp.lt.s32.totalorder %s278, 15
        %s280 = scalar_select %p279, %s278, 15
        %s281 = smul.addr %s280, 8
        %s282 = scalar_lea.vmem %s2, %s281
        %p283 = pneg %p109
        %p284 = pneg %p106
        %p285 = pneg %p130
        %p286 = pneg %p127
        %p287 = pneg %p151
        %p288 = pneg %p148
        %p289 = pneg %p179
        %p290 = pneg %p176
        %s291 = sand.u32 %s166, 1
        %s292 = scalar_lea.sflag [#allocation3], %s291
        %s293 = sand.u32 %s166, 1
        %s294 = smul.addr %s293, 128
        %s295 = scalar_lea.vmem [#allocation2], %s294
        %p296 = pneg %p207
        %p297 = pneg %p204
        %s298 = sand.u32 %s194, 1
        %s299 = scalar_lea.sflag [#allocation5], %s298
        %s300 = sand.u32 %s194, 1
        %s301 = smul.addr %s300, 128
        %s302 = scalar_lea.vmem [#allocation4], %s301
        %p303 = scmp.lt.s32.totalorder %s28, 1
        %s304 = scalar_select %p303, %s28, 1
        %s305 = smul.addr %s304, 2
        %s306 = smul.addr %s305, 8
        %s307 = scalar_lea.vmem %s0, %s306
        %p308 = scmp.lt.s32.totalorder %s29, 0
        %s309 = scalar_select %p308, %s29, 0
        %s310 = smul.addr %s309, 17
        %s311 = smul.addr %s310, 8
        %s312 = scalar_lea.vmem %s1, %s311
        %s313 = smul.u32 16, %s29
        %p314 = scmp.lt.s32.totalorder %s313, 15
        %s315 = scalar_select %p314, %s313, 15
        %s316 = smul.addr %s315, 8
        %s317 = scalar_lea.vmem %s2, %s316
        %s318 = smul.u32 16, %s29
        %s319 = smul.u32 16, %s29
        %s320 = smul.u32 16, %s29
        %v321 = vld [vmem:[%s307] sm:$0xff]
        %v322 = vld [vmem:[%s307 + $0x8] sm:$0xff]
        %v323 = vld [vmem:[%s3] sm:$0xff]
        %v324 = vld [vmem:[%s3 + $0x8] sm:$0xff]
        %vm325 = vcmask 130048
        %v327 = vsel %vm325, %v321, 0
        %v330 = vsel %vm325, %v322, 0
        %332 = vmatprep.subr.mxu0 0.0
        %333 = vmatpush1.msra.mxu0 %v323
        %334 = vmatprep.subr.mxu0 0.0
        %335 = vmatpush1.msra.mxu0 %v324
        %336 = vmatprep.subr.mxu0 0.0
        %337 = vmatpush1.msra.mxu0 0.0
        %338 = vmatprep.subr.mxu0 0.0
        %339 = vmatpush1.msra.mxu0 0.0
        %340 = vmatprep.subr.mxu0 0.0
        %341 = vmatpush1.msra.mxu0 0.0
        %342 = vmatprep.subr.mxu0 0.0
        %343 = vmatpush1.msra.mxu0 0.0
        %344 = vmatprep.subr.mxu0 0.0
        %345 = vmatpush1.msra.mxu0 0.0
        %346 = vmatprep.subr.mxu0 0.0
        %347 = vmatpush1.msra.mxu0 0.0
        %348 = vmatprep.subr.mxu0 0.0
        %349 = vmatpush1.msra.mxu0 0.0
        %350 = vmatprep.subr.mxu0 0.0
        %351 = vmatpush1.msra.mxu0 0.0
        %352 = vmatprep.subr.mxu0 0.0
        %353 = vmatpush1.msra.mxu0 0.0
        %354 = vmatprep.subr.mxu0 0.0
        %355 = vmatpush1.msra.mxu0 0.0
        %356 = vmatprep.subr.mxu0 0.0
        %357 = vmatpush1.msra.mxu0 0.0
        %358 = vmatprep.subr.mxu0 0.0
        %359 = vmatpush1.msra.mxu0 0.0
        %360 = vmatprep.subr.mxu0 0.0
        %361 = vmatpush1.msra.mxu0 0.0
        %362 = vmatprep.subr.mxu0 0.0
        %363 = vmatpush1.msra.mxu0 0.0
        %364 = vmatprep.subr.mxu0 0.0
        %365 = vmatpush1.msra.mxu0 0.0
        %366 = vmatprep.subr.mxu0 0.0
        %367 = vmatpush1.msra.mxu0 0.0
        %368 = vmatprep.subr.mxu0 0.0
        %369 = vmatpush1.msra.mxu0 0.0
        %370 = vmatprep.subr.mxu0 0.0
        %371 = vmatpush1.msra.mxu0 0.0
        %372 = vmatprep.subr.mxu0 0.0
        %373 = vmatpush1.msra.mxu0 0.0
        %374 = vmatprep.subr.mxu0 0.0
        %375 = vmatpush1.msra.mxu0 0.0
        %376 = vmatprep.subr.mxu0 0.0
        %377 = vmatpush1.msra.mxu0 0.0
        %378 = vmatprep.subr.mxu0 0.0
        %379 = vmatpush1.msra.mxu0 0.0
        %380 = vmatprep.subr.mxu0 0.0
        %381 = vmatpush1.msra.mxu0 0.0
        %382 = vmatprep.subr.mxu0 0.0
        %383 = vmatpush1.msra.mxu0 0.0
        %384 = vmatprep.subr.mxu0 0.0
        %385 = vmatpush1.msra.mxu0 0.0
        %386 = vmatprep.subr.mxu0 0.0
        %387 = vmatpush1.msra.mxu0 0.0
        %388 = vmatprep.subr.mxu0 0.0
        %389 = vmatpush1.msra.mxu0 0.0
        %390 = vmatprep.subr.mxu0 0.0
        %391 = vmatpush1.msra.mxu0 0.0
        %392 = vmatprep.subr.mxu0 0.0
        %393 = vmatpush1.msra.mxu0 0.0
        %394 = vmatprep.subr.mxu0 0.0
        %395 = vmatpush1.msra.mxu0 0.0
        %396 = vmatprep.mubr.f32.mxu0 0.0
        %397 = vmatmul.mubr.f32.gmra.mrb[0].mxu0 %v327
        %v398 = vpop.f32.mrb[0].mxu0
        %v399 = vadd.f32 0.0, %v398
        %v400 = vpop.f32.mrb[0].mxu0
        %401 = vmatprep.mubr.f32.mxu0 0.0
        %402 = vmatmul.mubr.f32.gmra.mrb[0].mxu0 %v330
        %v403 = vpop.f32.mrb[0].mxu0
        %v404 = vadd.f32 0.0, %v403
        %v405 = vpop.f32.mrb[0].mxu0
        %406 = vdwg.mxu0
        %v407 = vld [vmem:[%s4] sm:$0xff]
        %v408 = vld [vmem:[%s4 + $0x8] sm:$0xff]
        %v409 = vld [vmem:[%s4 + $0x10] sm:$0xff]
        %v410 = vld [vmem:[%s4 + $0x18] sm:$0xff]
        %411 = vmatprep.subr.mxu0 %v408
        %412 = vmatpush1.msra.mxu0 %v407
        %413 = vmatprep.subr.mxu0 %v410
        %414 = vmatpush1.msra.mxu0 %v409
        %415 = vmatprep.subr.mxu0 0.0
        %416 = vmatpush1.msra.mxu0 0.0
        %417 = vmatprep.subr.mxu0 0.0
        %418 = vmatpush1.msra.mxu0 0.0
        %419 = vmatprep.subr.mxu0 0.0
        %420 = vmatpush1.msra.mxu0 0.0
        %421 = vmatprep.subr.mxu0 0.0
        %422 = vmatpush1.msra.mxu0 0.0
        %423 = vmatprep.subr.mxu0 0.0
        %424 = vmatpush1.msra.mxu0 0.0
        %425 = vmatprep.subr.mxu0 0.0
        %426 = vmatpush1.msra.mxu0 0.0
        %427 = vmatprep.subr.mxu0 0.0
        %428 = vmatpush1.msra.mxu0 0.0
        %429 = vmatprep.subr.mxu0 0.0
        %430 = vmatpush1.msra.mxu0 0.0
        %431 = vmatprep.subr.mxu0 0.0
        %432 = vmatpush1.msra.mxu0 0.0
        %433 = vmatprep.subr.mxu0 0.0
        %434 = vmatpush1.msra.mxu0 0.0
        %435 = vmatprep.subr.mxu0 0.0
        %436 = vmatpush1.msra.mxu0 0.0
        %437 = vmatprep.subr.mxu0 0.0
        %438 = vmatpush1.msra.mxu0 0.0
        %439 = vmatprep.subr.mxu0 0.0
        %440 = vmatpush1.msra.mxu0 0.0
        %441 = vmatprep.subr.mxu0 0.0
        %442 = vmatpush1.msra.mxu0 0.0
        %443 = vmatprep.subr.mxu0 0.0
        %444 = vmatpush1.msra.mxu0 0.0
        %445 = vmatprep.subr.mxu0 0.0
        %446 = vmatpush1.msra.mxu0 0.0
        %447 = vmatprep.subr.mxu0 0.0
        %448 = vmatpush1.msra.mxu0 0.0
        %449 = vmatprep.subr.mxu0 0.0
        %450 = vmatpush1.msra.mxu0 0.0
        %451 = vmatprep.subr.mxu0 0.0
        %452 = vmatpush1.msra.mxu0 0.0
        %453 = vmatprep.subr.mxu0 0.0
        %454 = vmatpush1.msra.mxu0 0.0
        %455 = vmatprep.subr.mxu0 0.0
        %456 = vmatpush1.msra.mxu0 0.0
        %457 = vmatprep.subr.mxu0 0.0
        %458 = vmatpush1.msra.mxu0 0.0
        %459 = vmatprep.subr.mxu0 0.0
        %460 = vmatpush1.msra.mxu0 0.0
        %461 = vmatprep.subr.mxu0 0.0
        %462 = vmatpush1.msra.mxu0 0.0
        %463 = vmatprep.subr.mxu0 0.0
        %464 = vmatpush1.msra.mxu0 0.0
        %465 = vmatprep.subr.mxu0 0.0
        %466 = vmatpush1.msra.mxu0 0.0
        %467 = vmatprep.subr.mxu0 0.0
        %468 = vmatpush1.msra.mxu0 0.0
        %469 = vmatprep.subr.mxu0 0.0
        %470 = vmatpush1.msra.mxu0 0.0
        %471 = vmatprep.subr.mxu0 0.0
        %472 = vmatpush1.msra.mxu0 0.0
        %473 = vmatprep.subr.mxu0 0.0
        %474 = vmatpush1.msra.mxu0 0.0
        %475 = vmatprep.mubr.f32.mxu0 0.0
        %476 = vmatmul.mubr.f32.gmra.mrb[0].mxu0 %v327
        %v477 = vpop.f32.mrb[0].mxu0
        %v478 = vadd.f32 0.0, %v477
        %v479 = vpop.f32.mrb[0].mxu0
        %v480 = vadd.f32 0.0, %v479
        %481 = vmatprep.mubr.f32.mxu0 0.0
        %482 = vmatmul.mubr.f32.gmra.mrb[0].mxu0 %v330
        %v483 = vpop.f32.mrb[0].mxu0
        %v484 = vadd.f32 0.0, %v483
        %v485 = vpop.f32.mrb[0].mxu0
        %v486 = vadd.f32 0.0, %v485
        %487 = vdwg.mxu0
        %v488 = vld [vmem:[%s317] sm:$0xff]
        %v489 = vld [vmem:[%s317 + $0x8] sm:$0xff]
        %v490 = vld [vmem:[%s317 + $0x10] sm:$0xff]
        %v491 = vld [vmem:[%s317 + $0x18] sm:$0xff]
        %v492 = vld [vmem:[%s317 + $0x20] sm:$0xff]
        %v493 = vld [vmem:[%s317 + $0x28] sm:$0xff]
        %v494 = vld [vmem:[%s317 + $0x30] sm:$0xff]
        %v495 = vld [vmem:[%s317 + $0x38] sm:$0xff]
        %v496 = vld [vmem:[%s317 + $0x40] sm:$0xff]
        %v497 = vld [vmem:[%s317 + $0x48] sm:$0xff]
        %v498 = vld [vmem:[%s317 + $0x50] sm:$0xff]
        %v499 = vld [vmem:[%s317 + $0x58] sm:$0xff]
        %v500 = vld [vmem:[%s317 + $0x60] sm:$0xff]
        %v501 = vld [vmem:[%s317 + $0x68] sm:$0xff]
        %v502 = vld [vmem:[%s317 + $0x70] sm:$0xff]
        %v503 = vld [vmem:[%s317 + $0x78] sm:$0xff]
        %v505 = vsel %vm325, %v488, 0
        %v508 = vsel %vm325, %v489, 0
        %v511 = vsel %vm325, %v490, 0
        %v514 = vsel %vm325, %v491, 0
        %v517 = vsel %vm325, %v492, 0
        %v520 = vsel %vm325, %v493, 0
        %v523 = vsel %vm325, %v494, 0
        %v526 = vsel %vm325, %v495, 0
        %v529 = vsel %vm325, %v496, 0
        %v532 = vsel %vm325, %v497, 0
        %v535 = vsel %vm325, %v498, 0
        %v538 = vsel %vm325, %v499, 0
        %v541 = vsel %vm325, %v500, 0
        %v544 = vsel %vm325, %v501, 0
        %v547 = vsel %vm325, %v502, 0
        %v550 = vsel %vm325, %v503, 0
        %552 = vmatprep.subr.mxu0 0.0
        %553 = vmatpush1.msra.mxu0 %v399
        %554 = vmatprep.subr.mxu0 0.0
        %555 = vmatpush1.msra.mxu0 %v404
        %556 = vmatprep.subr.mxu0 0.0
        %557 = vmatpush1.msra.mxu0 0.0
        %558 = vmatprep.subr.mxu0 0.0
        %559 = vmatpush1.msra.mxu0 0.0
        %560 = vmatprep.subr.mxu0 0.0
        %561 = vmatpush1.msra.mxu0 0.0
        %562 = vmatprep.subr.mxu0 0.0
        %563 = vmatpush1.msra.mxu0 0.0
        %564 = vmatprep.subr.mxu0 0.0
        %565 = vmatpush1.msra.mxu0 0.0
        %566 = vmatprep.subr.mxu0 0.0
        %567 = vmatpush1.msra.mxu0 0.0
        %568 = vmatprep.subr.mxu0 0.0
        %569 = vmatpush1.msra.mxu0 0.0
        %570 = vmatprep.subr.mxu0 0.0
        %571 = vmatpush1.msra.mxu0 0.0
        %572 = vmatprep.subr.mxu0 0.0
        %573 = vmatpush1.msra.mxu0 0.0
        %574 = vmatprep.subr.mxu0 0.0
        %575 = vmatpush1.msra.mxu0 0.0
        %576 = vmatprep.subr.mxu0 0.0
        %577 = vmatpush1.msra.mxu0 0.0
        %578 = vmatprep.subr.mxu0 0.0
        %579 = vmatpush1.msra.mxu0 0.0
        %580 = vmatprep.subr.mxu0 0.0
        %581 = vmatpush1.msra.mxu0 0.0
        %582 = vmatprep.subr.mxu0 0.0
        %583 = vmatpush1.msra.mxu0 0.0
        %584 = vmatprep.subr.mxu0 0.0
        %585 = vmatpush1.msra.mxu0 0.0
        %586 = vmatprep.subr.mxu0 0.0
        %587 = vmatpush1.msra.mxu0 0.0
        %588 = vmatprep.subr.mxu0 0.0
        %589 = vmatpush1.msra.mxu0 0.0
        %590 = vmatprep.subr.mxu0 0.0
        %591 = vmatpush1.msra.mxu0 0.0
        %592 = vmatprep.subr.mxu0 0.0
        %593 = vmatpush1.msra.mxu0 0.0
        %594 = vmatprep.subr.mxu0 0.0
        %595 = vmatpush1.msra.mxu0 0.0
        %596 = vmatprep.subr.mxu0 0.0
        %597 = vmatpush1.msra.mxu0 0.0
        %598 = vmatprep.subr.mxu0 0.0
        %599 = vmatpush1.msra.mxu0 0.0
        %600 = vmatprep.subr.mxu0 0.0
        %601 = vmatpush1.msra.mxu0 0.0
        %602 = vmatprep.subr.mxu0 0.0
        %603 = vmatpush1.msra.mxu0 0.0
        %604 = vmatprep.subr.mxu0 0.0
        %605 = vmatpush1.msra.mxu0 0.0
        %606 = vmatprep.subr.mxu0 0.0
        %607 = vmatpush1.msra.mxu0 0.0
        %608 = vmatprep.subr.mxu0 0.0
        %609 = vmatpush1.msra.mxu0 0.0
        %610 = vmatprep.subr.mxu0 0.0
        %611 = vmatpush1.msra.mxu0 0.0
        %612 = vmatprep.subr.mxu0 0.0
        %613 = vmatpush1.msra.mxu0 0.0
        %614 = vmatprep.subr.mxu0 0.0
        %615 = vmatpush1.msra.mxu0 0.0
        %616 = vmatprep.mubr.f32.mxu0 0.0
        %617 = vmatmul.mubr.f32.gmra.mrb[0].mxu0 %v505
        %v618 = vpop.f32.mrb[0].mxu0
        %v619 = vadd.f32 0.0, %v618
        %v620 = vpop.f32.mrb[0].mxu0
        %621 = vmatprep.mubr.f32.mxu0 0.0
        %622 = vmatmul.mubr.f32.gmra.mrb[0].mxu0 %v508
        %v623 = vpop.f32.mrb[0].mxu0
        %v624 = vadd.f32 0.0, %v623
        %v625 = vpop.f32.mrb[0].mxu0
        %626 = vmatprep.mubr.f32.mxu0 0.0
        %627 = vmatmul.mubr.f32.gmra.mrb[0].mxu0 %v511
        %v628 = vpop.f32.mrb[0].mxu0
        %v629 = vadd.f32 0.0, %v628
        %v630 = vpop.f32.mrb[0].mxu0
        %631 = vmatprep.mubr.f32.mxu0 0.0
        %632 = vmatmul.mubr.f32.gmra.mrb[0].mxu0 %v514
        %v633 = vpop.f32.mrb[0].mxu0
        %v634 = vadd.f32 0.0, %v633
        %v635 = vpop.f32.mrb[0].mxu0
        %636 = vmatprep.mubr.f32.mxu0 0.0
        %637 = vmatmul.mubr.f32.gmra.mrb[0].mxu0 %v517
        %v638 = vpop.f32.mrb[0].mxu0
        %v639 = vadd.f32 0.0, %v638
        %v640 = vpop.f32.mrb[0].mxu0
        %641 = vmatprep.mubr.f32.mxu0 0.0
        %642 = vmatmul.mubr.f32.gmra.mrb[0].mxu0 %v520
        %v643 = vpop.f32.mrb[0].mxu0
        %v644 = vadd.f32 0.0, %v643
        %v645 = vpop.f32.mrb[0].mxu0
        %646 = vmatprep.mubr.f32.mxu0 0.0
        %647 = vmatmul.mubr.f32.gmra.mrb[0].mxu0 %v523
        %v648 = vpop.f32.mrb[0].mxu0
        %v649 = vadd.f32 0.0, %v648
        %v650 = vpop.f32.mrb[0].mxu0
        %651 = vmatprep.mubr.f32.mxu0 0.0
        %652 = vmatmul.mubr.f32.gmra.mrb[0].mxu0 %v526
        %v653 = vpop.f32.mrb[0].mxu0
        %v654 = vadd.f32 0.0, %v653
        %v655 = vpop.f32.mrb[0].mxu0
        %656 = vmatprep.mubr.f32.mxu0 0.0
        %657 = vmatmul.mubr.f32.gmra.mrb[0].mxu0 %v529
        %v658 = vpop.f32.mrb[0].mxu0
        %v659 = vadd.f32 0.0, %v658
        %v660 = vpop.f32.mrb[0].mxu0
        %661 = vmatprep.mubr.f32.mxu0 0.0
        %662 = vmatmul.mubr.f32.gmra.mrb[0].mxu0 %v532
        %v663 = vpop.f32.mrb[0].mxu0
        %v664 = vadd.f32 0.0, %v663
        %v665 = vpop.f32.mrb[0].mxu0
        %666 = vmatprep.mubr.f32.mxu0 0.0
        %667 = vmatmul.mubr.f32.gmra.mrb[0].mxu0 %v535
        %v668 = vpop.f32.mrb[0].mxu0
        %v669 = vadd.f32 0.0, %v668
        %v670 = vpop.f32.mrb[0].mxu0
        %671 = vmatprep.mubr.f32.mxu0 0.0
        %672 = vmatmul.mubr.f32.gmra.mrb[0].mxu0 %v538
        %v673 = vpop.f32.mrb[0].mxu0
        %v674 = vadd.f32 0.0, %v673
        %v675 = vpop.f32.mrb[0].mxu0
        %676 = vmatprep.mubr.f32.mxu0 0.0
        %677 = vmatmul.mubr.f32.gmra.mrb[0].mxu0 %v541
        %v678 = vpop.f32.mrb[0].mxu0
        %v679 = vadd.f32 0.0, %v678
        %v680 = vpop.f32.mrb[0].mxu0
        %681 = vmatprep.mubr.f32.mxu0 0.0
        %682 = vmatmul.mubr.f32.gmra.mrb[0].mxu0 %v544
        %v683 = vpop.f32.mrb[0].mxu0
        %v684 = vadd.f32 0.0, %v683
        %v685 = vpop.f32.mrb[0].mxu0
        %686 = vmatprep.mubr.f32.mxu0 0.0
        %687 = vmatmul.mubr.f32.gmra.mrb[0].mxu0 %v547
        %v688 = vpop.f32.mrb[0].mxu0
        %v689 = vadd.f32 0.0, %v688
        %v690 = vpop.f32.mrb[0].mxu0
        %691 = vmatprep.mubr.f32.mxu0 0.0
        %692 = vmatmul.mubr.f32.gmra.mrb[0].mxu0 %v550
        %v693 = vpop.f32.mrb[0].mxu0
        %v694 = vadd.f32 0.0, %v693
        %v695 = vpop.f32.mrb[0].mxu0
        %696 = vdwg.mxu0
        %697 = vst [vmem:[%s295] sm:$0xff] %v619
        %698 = vst [vmem:[%s295 + $0x8] sm:$0xff] %v624
        %699 = vst [vmem:[%s295 + $0x10] sm:$0xff] %v629
        %700 = vst [vmem:[%s295 + $0x18] sm:$0xff] %v634
        %701 = vst [vmem:[%s295 + $0x20] sm:$0xff] %v639
        %702 = vst [vmem:[%s295 + $0x28] sm:$0xff] %v644
        %703 = vst [vmem:[%s295 + $0x30] sm:$0xff] %v649
        %704 = vst [vmem:[%s295 + $0x38] sm:$0xff] %v654
        %705 = vst [vmem:[%s295 + $0x40] sm:$0xff] %v659
        %706 = vst [vmem:[%s295 + $0x48] sm:$0xff] %v664
        %707 = vst [vmem:[%s295 + $0x50] sm:$0xff] %v669
        %708 = vst [vmem:[%s295 + $0x58] sm:$0xff] %v674
        %709 = vst [vmem:[%s295 + $0x60] sm:$0xff] %v679
        %710 = vst [vmem:[%s295 + $0x68] sm:$0xff] %v684
        %711 = vst [vmem:[%s295 + $0x70] sm:$0xff] %v689
        %712 = vst [vmem:[%s295 + $0x78] sm:$0xff] %v694
        %v713 = vld [vmem:[%s312] sm:$0xff]
        %v714 = vld [vmem:[%s312 + $0x8] sm:$0xff]
        %v715 = vld [vmem:[%s312 + $0x10] sm:$0xff]
        %v716 = vld [vmem:[%s312 + $0x18] sm:$0xff]
        %v717 = vld [vmem:[%s312 + $0x20] sm:$0xff]
        %v718 = vld [vmem:[%s312 + $0x28] sm:$0xff]
        %v719 = vld [vmem:[%s312 + $0x30] sm:$0xff]
        %v720 = vld [vmem:[%s312 + $0x38] sm:$0xff]
        %v721 = vld [vmem:[%s312 + $0x40] sm:$0xff]
        %v722 = vld [vmem:[%s312 + $0x48] sm:$0xff]
        %v723 = vld [vmem:[%s312 + $0x50] sm:$0xff]
        %v724 = vld [vmem:[%s312 + $0x58] sm:$0xff]
        %v725 = vld [vmem:[%s312 + $0x60] sm:$0xff]
        %v726 = vld [vmem:[%s312 + $0x68] sm:$0xff]
        %v727 = vld [vmem:[%s312 + $0x70] sm:$0xff]
        %v728 = vld [vmem:[%s312 + $0x78] sm:$0xff]
        %v729 = vld [vmem:[%s312 + $0x80] sm:$0xf]
        %v731 = vsel %vm325, %v713, 0
        %v734 = vsel %vm325, %v714, 0
        %v737 = vsel %vm325, %v715, 0
        %v740 = vsel %vm325, %v716, 0
        %v743 = vsel %vm325, %v717, 0
        %v746 = vsel %vm325, %v718, 0
        %v749 = vsel %vm325, %v719, 0
        %v752 = vsel %vm325, %v720, 0
        %v755 = vsel %vm325, %v721, 0
        %v758 = vsel %vm325, %v722, 0
        %v761 = vsel %vm325, %v723, 0
        %v764 = vsel %vm325, %v724, 0
        %v767 = vsel %vm325, %v725, 0
        %v770 = vsel %vm325, %v726, 0
        %v773 = vsel %vm325, %v727, 0
        %v776 = vsel %vm325, %v728, 0
        %v779 = vsel %vm325, %v729, 0
        %781 = vmatprep.subr.mxu0 %v480
        %782 = vmatpush1.msra.mxu0 %v478
        %783 = vmatprep.subr.mxu0 %v486
        %784 = vmatpush1.msra.mxu0 %v484
        %785 = vmatprep.subr.mxu0 0.0
        %786 = vmatpush1.msra.mxu0 0.0
        %787 = vmatprep.subr.mxu0 0.0
        %788 = vmatpush1.msra.mxu0 0.0
        %789 = vmatprep.subr.mxu0 0.0
        %790 = vmatpush1.msra.mxu0 0.0
        %791 = vmatprep.subr.mxu0 0.0
        %792 = vmatpush1.msra.mxu0 0.0
        %793 = vmatprep.subr.mxu0 0.0
        %794 = vmatpush1.msra.mxu0 0.0
        %795 = vmatprep.subr.mxu0 0.0
        %796 = vmatpush1.msra.mxu0 0.0
        %797 = vmatprep.subr.mxu0 0.0
        %798 = vmatpush1.msra.mxu0 0.0
        %799 = vmatprep.subr.mxu0 0.0
        %800 = vmatpush1.msra.mxu0 0.0
        %801 = vmatprep.subr.mxu0 0.0
        %802 = vmatpush1.msra.mxu0 0.0
        %803 = vmatprep.subr.mxu0 0.0
        %804 = vmatpush1.msra.mxu0 0.0
        %805 = vmatprep.subr.mxu0 0.0
        %806 = vmatpush1.msra.mxu0 0.0
        %807 = vmatprep.subr.mxu0 0.0
        %808 = vmatpush1.msra.mxu0 0.0
        %809 = vmatprep.subr.mxu0 0.0
        %810 = vmatpush1.msra.mxu0 0.0
        %811 = vmatprep.subr.mxu0 0.0
        %812 = vmatpush1.msra.mxu0 0.0
        %813 = vmatprep.subr.mxu0 0.0
        %814 = vmatpush1.msra.mxu0 0.0
        %815 = vmatprep.subr.mxu0 0.0
        %816 = vmatpush1.msra.mxu0 0.0
        %817 = vmatprep.subr.mxu0 0.0
        %818 = vmatpush1.msra.mxu0 0.0
        %819 = vmatprep.subr.mxu0 0.0
        %820 = vmatpush1.msra.mxu0 0.0
        %821 = vmatprep.subr.mxu0 0.0
        %822 = vmatpush1.msra.mxu0 0.0
        %823 = vmatprep.subr.mxu0 0.0
        %824 = vmatpush1.msra.mxu0 0.0
        %825 = vmatprep.subr.mxu0 0.0
        %826 = vmatpush1.msra.mxu0 0.0
        %827 = vmatprep.subr.mxu0 0.0
        %828 = vmatpush1.msra.mxu0 0.0
        %829 = vmatprep.subr.mxu0 0.0
        %830 = vmatpush1.msra.mxu0 0.0
        %831 = vmatprep.subr.mxu0 0.0
        %832 = vmatpush1.msra.mxu0 0.0
        %833 = vmatprep.subr.mxu0 0.0
        %834 = vmatpush1.msra.mxu0 0.0
        %835 = vmatprep.subr.mxu0 0.0
        %836 = vmatpush1.msra.mxu0 0.0
        %837 = vmatprep.subr.mxu0 0.0
        %838 = vmatpush1.msra.mxu0 0.0
        %839 = vmatprep.subr.mxu0 0.0
        %840 = vmatpush1.msra.mxu0 0.0
        %841 = vmatprep.subr.mxu0 0.0
        %842 = vmatpush1.msra.mxu0 0.0
        %843 = vmatprep.subr.mxu0 0.0
        %844 = vmatpush1.msra.mxu0 0.0
        %845 = vmatprep.mubr.f32.mxu0 0.0
        %846 = vmatmul.mubr.f32.gmra.mrb[0].mxu0 %v731
        %v847 = vpop.f32.mrb[0].mxu0
        %v848 = vadd.f32 0.0, %v847
        %v849 = vpop.f32.mrb[0].mxu0
        %v850 = vadd.f32 0.0, %v849
        %851 = vmatprep.mubr.f32.mxu0 0.0
        %852 = vmatmul.mubr.f32.gmra.mrb[0].mxu0 %v734
        %v853 = vpop.f32.mrb[0].mxu0
        %v854 = vadd.f32 0.0, %v853
        %v855 = vpop.f32.mrb[0].mxu0
        %v856 = vadd.f32 0.0, %v855
        %857 = vmatprep.mubr.f32.mxu0 0.0
        %858 = vmatmul.mubr.f32.gmra.mrb[0].mxu0 %v737
        %v859 = vpop.f32.mrb[0].mxu0
        %v860 = vadd.f32 0.0, %v859
        %v861 = vpop.f32.mrb[0].mxu0
        %v862 = vadd.f32 0.0, %v861
        %863 = vmatprep.mubr.f32.mxu0 0.0
        %864 = vmatmul.mubr.f32.gmra.mrb[0].mxu0 %v740
        %v865 = vpop.f32.mrb[0].mxu0
        %v866 = vadd.f32 0.0, %v865
        %v867 = vpop.f32.mrb[0].mxu0
        %v868 = vadd.f32 0.0, %v867
        %869 = vmatprep.mubr.f32.mxu0 0.0
        %870 = vmatmul.mubr.f32.gmra.mrb[0].mxu0 %v743
        %v871 = vpop.f32.mrb[0].mxu0
        %v872 = vadd.f32 0.0, %v871
        %v873 = vpop.f32.mrb[0].mxu0
        %v874 = vadd.f32 0.0, %v873
        %875 = vmatprep.mubr.f32.mxu0 0.0
        %876 = vmatmul.mubr.f32.gmra.mrb[0].mxu0 %v746
        %v877 = vpop.f32.mrb[0].mxu0
        %v878 = vadd.f32 0.0, %v877
        %v879 = vpop.f32.mrb[0].mxu0
        %v880 = vadd.f32 0.0, %v879
        %881 = vmatprep.mubr.f32.mxu0 0.0
        %882 = vmatmul.mubr.f32.gmra.mrb[0].mxu0 %v749
        %v883 = vpop.f32.mrb[0].mxu0
        %v884 = vadd.f32 0.0, %v883
        %v885 = vpop.f32.mrb[0].mxu0
        %v886 = vadd.f32 0.0, %v885
        %887 = vmatprep.mubr.f32.mxu0 0.0
        %888 = vmatmul.mubr.f32.gmra.mrb[0].mxu0 %v752
        %v889 = vpop.f32.mrb[0].mxu0
        %v890 = vadd.f32 0.0, %v889
        %v891 = vpop.f32.mrb[0].mxu0
        %v892 = vadd.f32 0.0, %v891
        %893 = vmatprep.mubr.f32.mxu0 0.0
        %894 = vmatmul.mubr.f32.gmra.mrb[0].mxu0 %v755
        %v895 = vpop.f32.mrb[0].mxu0
        %v896 = vadd.f32 0.0, %v895
        %v897 = vpop.f32.mrb[0].mxu0
        %v898 = vadd.f32 0.0, %v897
        %899 = vmatprep.mubr.f32.mxu0 0.0
        %900 = vmatmul.mubr.f32.gmra.mrb[0].mxu0 %v758
        %v901 = vpop.f32.mrb[0].mxu0
        %v902 = vadd.f32 0.0, %v901
        %v903 = vpop.f32.mrb[0].mxu0
        %v904 = vadd.f32 0.0, %v903
        %905 = vmatprep.mubr.f32.mxu0 0.0
        %906 = vmatmul.mubr.f32.gmra.mrb[0].mxu0 %v761
        %v907 = vpop.f32.mrb[0].mxu0
        %v908 = vadd.f32 0.0, %v907
        %v909 = vpop.f32.mrb[0].mxu0
        %v910 = vadd.f32 0.0, %v909
        %911 = vmatprep.mubr.f32.mxu0 0.0
        %912 = vmatmul.mubr.f32.gmra.mrb[0].mxu0 %v764
        %v913 = vpop.f32.mrb[0].mxu0
        %v914 = vadd.f32 0.0, %v913
        %v915 = vpop.f32.mrb[0].mxu0
        %v916 = vadd.f32 0.0, %v915
        %917 = vmatprep.mubr.f32.mxu0 0.0
        %918 = vmatmul.mubr.f32.gmra.mrb[0].mxu0 %v767
        %v919 = vpop.f32.mrb[0].mxu0
        %v920 = vadd.f32 0.0, %v919
        %v921 = vpop.f32.mrb[0].mxu0
        %v922 = vadd.f32 0.0, %v921
        %923 = vmatprep.mubr.f32.mxu0 0.0
        %924 = vmatmul.mubr.f32.gmra.mrb[0].mxu0 %v770
        %v925 = vpop.f32.mrb[0].mxu0
        %v926 = vadd.f32 0.0, %v925
        %v927 = vpop.f32.mrb[0].mxu0
        %v928 = vadd.f32 0.0, %v927
        %929 = vmatprep.mubr.f32.mxu0 0.0
        %930 = vmatmul.mubr.f32.gmra.mrb[0].mxu0 %v773
        %v931 = vpop.f32.mrb[0].mxu0
        %v932 = vadd.f32 0.0, %v931
        %v933 = vpop.f32.mrb[0].mxu0
        %v934 = vadd.f32 0.0, %v933
        %935 = vmatprep.mubr.f32.mxu0 0.0
        %936 = vmatmul.mubr.f32.gmra.mrb[0].mxu0 %v776
        %v937 = vpop.f32.mrb[0].mxu0
        %v938 = vadd.f32 0.0, %v937
        %v939 = vpop.f32.mrb[0].mxu0
        %v940 = vadd.f32 0.0, %v939
        %941 = vmatprep.mubr.f32.mxu0 0.0
        %942 = vmatmul.mubr.f32.gmra.mrb[0].mxu0 %v779
        %v943 = vpop.f32.mrb[0].mxu0
        %v944 = vadd.f32 0.0, %v943
        %v945 = vpop.f32.mrb[0].mxu0
        %v946 = vadd.f32 0.0, %v945
        %947 = vdwg.mxu0
        %vm982 = vcmask 1046528
        %v983 = vrot.slane %v848, 1
        %v984 = vrot.slane %v854, 1
        %v985 = vsel %vm982, %v983, %v984
        %v986 = vrot.slane %v850, 1
        %v987 = vrot.slane %v856, 1
        %v988 = vsel %vm982, %v986, %v987
        %v989 = vrot.slane %v860, 1
        %v990 = vsel %vm982, %v984, %v989
        %v991 = vrot.slane %v862, 1
        %v992 = vsel %vm982, %v987, %v991
        %v993 = vrot.slane %v866, 1
        %v994 = vsel %vm982, %v989, %v993
        %v995 = vrot.slane %v868, 1
        %v996 = vsel %vm982, %v991, %v995
        %v997 = vrot.slane %v872, 1
        %v998 = vsel %vm982, %v993, %v997
        %v999 = vrot.slane %v874, 1
        %v1000 = vsel %vm982, %v995, %v999
        %v1001 = vrot.slane %v878, 1
        %v1002 = vsel %vm982, %v997, %v1001
        %v1003 = vrot.slane %v880, 1
        %v1004 = vsel %vm982, %v999, %v1003
        %v1005 = vrot.slane %v884, 1
        %v1006 = vsel %vm982, %v1001, %v1005
        %v1007 = vrot.slane %v886, 1
        %v1008 = vsel %vm982, %v1003, %v1007
        %v1009 = vrot.slane %v890, 1
        %v1010 = vsel %vm982, %v1005, %v1009
        %v1011 = vrot.slane %v892, 1
        %v1012 = vsel %vm982, %v1007, %v1011
        %v1013 = vrot.slane %v896, 1
        %v1014 = vsel %vm982, %v1009, %v1013
        %v1015 = vrot.slane %v898, 1
        %v1016 = vsel %vm982, %v1011, %v1015
        %v1017 = vrot.slane %v902, 1
        %v1018 = vsel %vm982, %v1013, %v1017
        %v1019 = vrot.slane %v904, 1
        %v1020 = vsel %vm982, %v1015, %v1019
        %v1021 = vrot.slane %v908, 1
        %v1022 = vsel %vm982, %v1017, %v1021
        %v1023 = vrot.slane %v910, 1
        %v1024 = vsel %vm982, %v1019, %v1023
        %v1025 = vrot.slane %v914, 1
        %v1026 = vsel %vm982, %v1021, %v1025
        %v1027 = vrot.slane %v916, 1
        %v1028 = vsel %vm982, %v1023, %v1027
        %v1029 = vrot.slane %v920, 1
        %v1030 = vsel %vm982, %v1025, %v1029
        %v1031 = vrot.slane %v922, 1
        %v1032 = vsel %vm982, %v1027, %v1031
        %v1033 = vrot.slane %v926, 1
        %v1034 = vsel %vm982, %v1029, %v1033
        %v1035 = vrot.slane %v928, 1
        %v1036 = vsel %vm982, %v1031, %v1035
        %v1037 = vrot.slane %v932, 1
        %v1038 = vsel %vm982, %v1033, %v1037
        %v1039 = vrot.slane %v934, 1
        %v1040 = vsel %vm982, %v1035, %v1039
        %v1041 = vrot.slane %v938, 1
        %v1042 = vsel %vm982, %v1037, %v1041
        %v1043 = vrot.slane %v940, 1
        %v1044 = vsel %vm982, %v1039, %v1043
        %v1045 = vrot.slane %v944, 1
        %v1046 = vsel %vm982, %v1041, %v1045
        %v1047 = vrot.slane %v946, 1
        %v1048 = vsel %vm982, %v1043, %v1047
        %v1083 = vmax.f32 %v848, %v985
        %v1084 = vmax.f32 %v850, %v988
        %v1085 = vmax.f32 %v854, %v990
        %v1086 = vmax.f32 %v856, %v992
        %v1087 = vmax.f32 %v860, %v994
        %v1088 = vmax.f32 %v862, %v996
        %v1089 = vmax.f32 %v866, %v998
        %v1090 = vmax.f32 %v868, %v1000
        %v1091 = vmax.f32 %v872, %v1002
        %v1092 = vmax.f32 %v874, %v1004
        %v1093 = vmax.f32 %v878, %v1006
        %v1094 = vmax.f32 %v880, %v1008
        %v1095 = vmax.f32 %v884, %v1010
        %v1096 = vmax.f32 %v886, %v1012
        %v1097 = vmax.f32 %v890, %v1014
        %v1098 = vmax.f32 %v892, %v1016
        %v1099 = vmax.f32 %v896, %v1018
        %v1100 = vmax.f32 %v898, %v1020
        %v1101 = vmax.f32 %v902, %v1022
        %v1102 = vmax.f32 %v904, %v1024
        %v1103 = vmax.f32 %v908, %v1026
        %v1104 = vmax.f32 %v910, %v1028
        %v1105 = vmax.f32 %v914, %v1030
        %v1106 = vmax.f32 %v916, %v1032
        %v1107 = vmax.f32 %v920, %v1034
        %v1108 = vmax.f32 %v922, %v1036
        %v1109 = vmax.f32 %v926, %v1038
        %v1110 = vmax.f32 %v928, %v1040
        %v1111 = vmax.f32 %v932, %v1042
        %v1112 = vmax.f32 %v934, %v1044
        %v1113 = vmax.f32 %v938, %v1046
        %v1114 = vmax.f32 %v940, %v1048
        %v1115 = vmax.f32 %v944, %v1045
        %v1116 = vmax.f32 %v946, %v1047
        %vm1151 = vcmask 1045504
        %v1152 = vrot.slane %v1083, 2
        %v1153 = vrot.slane %v1085, 2
        %v1154 = vsel %vm1151, %v1152, %v1153
        %v1155 = vrot.slane %v1084, 2
        %v1156 = vrot.slane %v1086, 2
        %v1157 = vsel %vm1151, %v1155, %v1156
        %v1158 = vrot.slane %v1087, 2
        %v1159 = vsel %vm1151, %v1153, %v1158
        %v1160 = vrot.slane %v1088, 2
        %v1161 = vsel %vm1151, %v1156, %v1160
        %v1162 = vrot.slane %v1089, 2
        %v1163 = vsel %vm1151, %v1158, %v1162
        %v1164 = vrot.slane %v1090, 2
        %v1165 = vsel %vm1151, %v1160, %v1164
        %v1166 = vrot.slane %v1091, 2
        %v1167 = vsel %vm1151, %v1162, %v1166
        %v1168 = vrot.slane %v1092, 2
        %v1169 = vsel %vm1151, %v1164, %v1168
        %v1170 = vrot.slane %v1093, 2
        %v1171 = vsel %vm1151, %v1166, %v1170
        %v1172 = vrot.slane %v1094, 2
        %v1173 = vsel %vm1151, %v1168, %v1172
        %v1174 = vrot.slane %v1095, 2
        %v1175 = vsel %vm1151, %v1170, %v1174
        %v1176 = vrot.slane %v1096, 2
        %v1177 = vsel %vm1151, %v1172, %v1176
        %v1178 = vrot.slane %v1097, 2
        %v1179 = vsel %vm1151, %v1174, %v1178
        %v1180 = vrot.slane %v1098, 2
        %v1181 = vsel %vm1151, %v1176, %v1180
        %v1182 = vrot.slane %v1099, 2
        %v1183 = vsel %vm1151, %v1178, %v1182
        %v1184 = vrot.slane %v1100, 2
        %v1185 = vsel %vm1151, %v1180, %v1184
        %v1186 = vrot.slane %v1101, 2
        %v1187 = vsel %vm1151, %v1182, %v1186
        %v1188 = vrot.slane %v1102, 2
        %v1189 = vsel %vm1151, %v1184, %v1188
        %v1190 = vrot.slane %v1103, 2
        %v1191 = vsel %vm1151, %v1186, %v1190
        %v1192 = vrot.slane %v1104, 2
        %v1193 = vsel %vm1151, %v1188, %v1192
        %v1194 = vrot.slane %v1105, 2
        %v1195 = vsel %vm1151, %v1190, %v1194
        %v1196 = vrot.slane %v1106, 2
        %v1197 = vsel %vm1151, %v1192, %v1196
        %v1198 = vrot.slane %v1107, 2
        %v1199 = vsel %vm1151, %v1194, %v1198
        %v1200 = vrot.slane %v1108, 2
        %v1201 = vsel %vm1151, %v1196, %v1200
        %v1202 = vrot.slane %v1109, 2
        %v1203 = vsel %vm1151, %v1198, %v1202
        %v1204 = vrot.slane %v1110, 2
        %v1205 = vsel %vm1151, %v1200, %v1204
        %v1206 = vrot.slane %v1111, 2
        %v1207 = vsel %vm1151, %v1202, %v1206
        %v1208 = vrot.slane %v1112, 2
        %v1209 = vsel %vm1151, %v1204, %v1208
        %v1210 = vrot.slane %v1113, 2
        %v1211 = vsel %vm1151, %v1206, %v1210
        %v1212 = vrot.slane %v1114, 2
        %v1213 = vsel %vm1151, %v1208, %v1212
        %v1214 = vrot.slane %v1115, 2
        %v1215 = vsel %vm1151, %v1210, %v1214
        %v1216 = vrot.slane %v1116, 2
        %v1217 = vsel %vm1151, %v1212, %v1216
        %v1252 = vmax.f32 %v1083, %v1154
        %v1253 = vmax.f32 %v1084, %v1157
        %v1254 = vmax.f32 %v1085, %v1159
        %v1255 = vmax.f32 %v1086, %v1161
        %v1256 = vmax.f32 %v1087, %v1163
        %v1257 = vmax.f32 %v1088, %v1165
        %v1258 = vmax.f32 %v1089, %v1167
        %v1259 = vmax.f32 %v1090, %v1169
        %v1260 = vmax.f32 %v1091, %v1171
        %v1261 = vmax.f32 %v1092, %v1173
        %v1262 = vmax.f32 %v1093, %v1175
        %v1263 = vmax.f32 %v1094, %v1177
        %v1264 = vmax.f32 %v1095, %v1179
        %v1265 = vmax.f32 %v1096, %v1181
        %v1266 = vmax.f32 %v1097, %v1183
        %v1267 = vmax.f32 %v1098, %v1185
        %v1268 = vmax.f32 %v1099, %v1187
        %v1269 = vmax.f32 %v1100, %v1189
        %v1270 = vmax.f32 %v1101, %v1191
        %v1271 = vmax.f32 %v1102, %v1193
        %v1272 = vmax.f32 %v1103, %v1195
        %v1273 = vmax.f32 %v1104, %v1197
        %v1274 = vmax.f32 %v1105, %v1199
        %v1275 = vmax.f32 %v1106, %v1201
        %v1276 = vmax.f32 %v1107, %v1203
        %v1277 = vmax.f32 %v1108, %v1205
        %v1278 = vmax.f32 %v1109, %v1207
        %v1279 = vmax.f32 %v1110, %v1209
        %v1280 = vmax.f32 %v1111, %v1211
        %v1281 = vmax.f32 %v1112, %v1213
        %v1282 = vmax.f32 %v1113, %v1215
        %v1283 = vmax.f32 %v1114, %v1217
        %v1284 = vmax.f32 %v1115, %v1214
        %v1285 = vmax.f32 %v1116, %v1216
        %v1320 = vrot.slane %v1252, 1
        %v1321 = vrot.slane %v1254, 1
        %v1322 = vsel %vm982, %v1320, %v1321
        %v1323 = vrot.slane %v1253, 1
        %v1324 = vrot.slane %v1255, 1
        %v1325 = vsel %vm982, %v1323, %v1324
        %v1326 = vrot.slane %v1256, 1
        %v1327 = vsel %vm982, %v1321, %v1326
        %v1328 = vrot.slane %v1257, 1
        %v1329 = vsel %vm982, %v1324, %v1328
        %v1330 = vrot.slane %v1258, 1
        %v1331 = vsel %vm982, %v1326, %v1330
        %v1332 = vrot.slane %v1259, 1
        %v1333 = vsel %vm982, %v1328, %v1332
        %v1334 = vrot.slane %v1260, 1
        %v1335 = vsel %vm982, %v1330, %v1334
        %v1336 = vrot.slane %v1261, 1
        %v1337 = vsel %vm982, %v1332, %v1336
        %v1338 = vrot.slane %v1262, 1
        %v1339 = vsel %vm982, %v1334, %v1338
        %v1340 = vrot.slane %v1263, 1
        %v1341 = vsel %vm982, %v1336, %v1340
        %v1342 = vrot.slane %v1264, 1
        %v1343 = vsel %vm982, %v1338, %v1342
        %v1344 = vrot.slane %v1265, 1
        %v1345 = vsel %vm982, %v1340, %v1344
        %v1346 = vrot.slane %v1266, 1
        %v1347 = vsel %vm982, %v1342, %v1346
        %v1348 = vrot.slane %v1267, 1
        %v1349 = vsel %vm982, %v1344, %v1348
        %v1350 = vrot.slane %v1268, 1
        %v1351 = vsel %vm982, %v1346, %v1350
        %v1352 = vrot.slane %v1269, 1
        %v1353 = vsel %vm982, %v1348, %v1352
        %v1354 = vrot.slane %v1270, 1
        %v1355 = vsel %vm982, %v1350, %v1354
        %v1356 = vrot.slane %v1271, 1
        %v1357 = vsel %vm982, %v1352, %v1356
        %v1358 = vrot.slane %v1272, 1
        %v1359 = vsel %vm982, %v1354, %v1358
        %v1360 = vrot.slane %v1273, 1
        %v1361 = vsel %vm982, %v1356, %v1360
        %v1362 = vrot.slane %v1274, 1
        %v1363 = vsel %vm982, %v1358, %v1362
        %v1364 = vrot.slane %v1275, 1
        %v1365 = vsel %vm982, %v1360, %v1364
        %v1366 = vrot.slane %v1276, 1
        %v1367 = vsel %vm982, %v1362, %v1366
        %v1368 = vrot.slane %v1277, 1
        %v1369 = vsel %vm982, %v1364, %v1368
        %v1370 = vrot.slane %v1278, 1
        %v1371 = vsel %vm982, %v1366, %v1370
        %v1372 = vrot.slane %v1279, 1
        %v1373 = vsel %vm982, %v1368, %v1372
        %v1374 = vrot.slane %v1280, 1
        %v1375 = vsel %vm982, %v1370, %v1374
        %v1376 = vrot.slane %v1281, 1
        %v1377 = vsel %vm982, %v1372, %v1376
        %v1378 = vrot.slane %v1282, 1
        %v1379 = vsel %vm982, %v1374, %v1378
        %v1380 = vrot.slane %v1283, 1
        %v1381 = vsel %vm982, %v1376, %v1380
        %v1382 = vrot.slane %v1284, 1
        %v1383 = vsel %vm982, %v1378, %v1382
        %v1384 = vrot.slane %v1285, 1
        %v1385 = vsel %vm982, %v1380, %v1384
        %v1418 = vmax.f32 %v1252, %v1322
        %v1419 = vmax.f32 %v1253, %v1325
        %v1420 = vmax.f32 %v1254, %v1327
        %v1421 = vmax.f32 %v1255, %v1329
        %v1422 = vmax.f32 %v1256, %v1331
        %v1423 = vmax.f32 %v1257, %v1333
        %v1424 = vmax.f32 %v1258, %v1335
        %v1425 = vmax.f32 %v1259, %v1337
        %v1426 = vmax.f32 %v1260, %v1339
        %v1427 = vmax.f32 %v1261, %v1341
        %v1428 = vmax.f32 %v1262, %v1343
        %v1429 = vmax.f32 %v1263, %v1345
        %v1430 = vmax.f32 %v1264, %v1347
        %v1431 = vmax.f32 %v1265, %v1349
        %v1432 = vmax.f32 %v1266, %v1351
        %v1433 = vmax.f32 %v1267, %v1353
        %v1434 = vmax.f32 %v1268, %v1355
        %v1435 = vmax.f32 %v1269, %v1357
        %v1436 = vmax.f32 %v1270, %v1359
        %v1437 = vmax.f32 %v1271, %v1361
        %v1438 = vmax.f32 %v1272, %v1363
        %v1439 = vmax.f32 %v1273, %v1365
        %v1440 = vmax.f32 %v1274, %v1367
        %v1441 = vmax.f32 %v1275, %v1369
        %v1442 = vmax.f32 %v1276, %v1371
        %v1443 = vmax.f32 %v1277, %v1373
        %v1444 = vmax.f32 %v1278, %v1375
        %v1445 = vmax.f32 %v1279, %v1377
        %v1446 = vmax.f32 %v1280, %v1379
        %v1447 = vmax.f32 %v1281, %v1381
        %v1448 = vmax.f32 %v1282, %v1383
        %v1449 = vmax.f32 %v1283, %v1385
        %v1450 = vmin.f32 %v848, %v985
        %v1451 = vmin.f32 %v850, %v988
        %v1452 = vmin.f32 %v854, %v990
        %v1453 = vmin.f32 %v856, %v992
        %v1454 = vmin.f32 %v860, %v994
        %v1455 = vmin.f32 %v862, %v996
        %v1456 = vmin.f32 %v866, %v998
        %v1457 = vmin.f32 %v868, %v1000
        %v1458 = vmin.f32 %v872, %v1002
        %v1459 = vmin.f32 %v874, %v1004
        %v1460 = vmin.f32 %v878, %v1006
        %v1461 = vmin.f32 %v880, %v1008
        %v1462 = vmin.f32 %v884, %v1010
        %v1463 = vmin.f32 %v886, %v1012
        %v1464 = vmin.f32 %v890, %v1014
        %v1465 = vmin.f32 %v892, %v1016
        %v1466 = vmin.f32 %v896, %v1018
        %v1467 = vmin.f32 %v898, %v1020
        %v1468 = vmin.f32 %v902, %v1022
        %v1469 = vmin.f32 %v904, %v1024
        %v1470 = vmin.f32 %v908, %v1026
        %v1471 = vmin.f32 %v910, %v1028
        %v1472 = vmin.f32 %v914, %v1030
        %v1473 = vmin.f32 %v916, %v1032
        %v1474 = vmin.f32 %v920, %v1034
        %v1475 = vmin.f32 %v922, %v1036
        %v1476 = vmin.f32 %v926, %v1038
        %v1477 = vmin.f32 %v928, %v1040
        %v1478 = vmin.f32 %v932, %v1042
        %v1479 = vmin.f32 %v934, %v1044
        %v1480 = vmin.f32 %v938, %v1046
        %v1481 = vmin.f32 %v940, %v1048
        %v1482 = vmin.f32 %v944, %v1045
        %v1483 = vmin.f32 %v946, %v1047
        %v1518 = vrot.slane %v1450, 2
        %v1519 = vrot.slane %v1452, 2
        %v1520 = vsel %vm1151, %v1518, %v1519
        %v1521 = vrot.slane %v1451, 2
        %v1522 = vrot.slane %v1453, 2
        %v1523 = vsel %vm1151, %v1521, %v1522
        %v1524 = vrot.slane %v1454, 2
        %v1525 = vsel %vm1151, %v1519, %v1524
        %v1526 = vrot.slane %v1455, 2
        %v1527 = vsel %vm1151, %v1522, %v1526
        %v1528 = vrot.slane %v1456, 2
        %v1529 = vsel %vm1151, %v1524, %v1528
        %v1530 = vrot.slane %v1457, 2
        %v1531 = vsel %vm1151, %v1526, %v1530
        %v1532 = vrot.slane %v1458, 2
        %v1533 = vsel %vm1151, %v1528, %v1532
        %v1534 = vrot.slane %v1459, 2
        %v1535 = vsel %vm1151, %v1530, %v1534
        %v1536 = vrot.slane %v1460, 2
        %v1537 = vsel %vm1151, %v1532, %v1536
        %v1538 = vrot.slane %v1461, 2
        %v1539 = vsel %vm1151, %v1534, %v1538
        %v1540 = vrot.slane %v1462, 2
        %v1541 = vsel %vm1151, %v1536, %v1540
        %v1542 = vrot.slane %v1463, 2
        %v1543 = vsel %vm1151, %v1538, %v1542
        %v1544 = vrot.slane %v1464, 2
        %v1545 = vsel %vm1151, %v1540, %v1544
        %v1546 = vrot.slane %v1465, 2
        %v1547 = vsel %vm1151, %v1542, %v1546
        %v1548 = vrot.slane %v1466, 2
        %v1549 = vsel %vm1151, %v1544, %v1548
        %v1550 = vrot.slane %v1467, 2
        %v1551 = vsel %vm1151, %v1546, %v1550
        %v1552 = vrot.slane %v1468, 2
        %v1553 = vsel %vm1151, %v1548, %v1552
        %v1554 = vrot.slane %v1469, 2
        %v1555 = vsel %vm1151, %v1550, %v1554
        %v1556 = vrot.slane %v1470, 2
        %v1557 = vsel %vm1151, %v1552, %v1556
        %v1558 = vrot.slane %v1471, 2
        %v1559 = vsel %vm1151, %v1554, %v1558
        %v1560 = vrot.slane %v1472, 2
        %v1561 = vsel %vm1151, %v1556, %v1560
        %v1562 = vrot.slane %v1473, 2
        %v1563 = vsel %vm1151, %v1558, %v1562
        %v1564 = vrot.slane %v1474, 2
        %v1565 = vsel %vm1151, %v1560, %v1564
        %v1566 = vrot.slane %v1475, 2
        %v1567 = vsel %vm1151, %v1562, %v1566
        %v1568 = vrot.slane %v1476, 2
        %v1569 = vsel %vm1151, %v1564, %v1568
        %v1570 = vrot.slane %v1477, 2
        %v1571 = vsel %vm1151, %v1566, %v1570
        %v1572 = vrot.slane %v1478, 2
        %v1573 = vsel %vm1151, %v1568, %v1572
        %v1574 = vrot.slane %v1479, 2
        %v1575 = vsel %vm1151, %v1570, %v1574
        %v1576 = vrot.slane %v1480, 2
        %v1577 = vsel %vm1151, %v1572, %v1576
        %v1578 = vrot.slane %v1481, 2
        %v1579 = vsel %vm1151, %v1574, %v1578
        %v1580 = vrot.slane %v1482, 2
        %v1581 = vsel %vm1151, %v1576, %v1580
        %v1582 = vrot.slane %v1483, 2
        %v1583 = vsel %vm1151, %v1578, %v1582
        %v1618 = vmin.f32 %v1450, %v1520
        %v1619 = vmin.f32 %v1451, %v1523
        %v1620 = vmin.f32 %v1452, %v1525
        %v1621 = vmin.f32 %v1453, %v1527
        %v1622 = vmin.f32 %v1454, %v1529
        %v1623 = vmin.f32 %v1455, %v1531
        %v1624 = vmin.f32 %v1456, %v1533
        %v1625 = vmin.f32 %v1457, %v1535
        %v1626 = vmin.f32 %v1458, %v1537
        %v1627 = vmin.f32 %v1459, %v1539
        %v1628 = vmin.f32 %v1460, %v1541
        %v1629 = vmin.f32 %v1461, %v1543
        %v1630 = vmin.f32 %v1462, %v1545
        %v1631 = vmin.f32 %v1463, %v1547
        %v1632 = vmin.f32 %v1464, %v1549
        %v1633 = vmin.f32 %v1465, %v1551
        %v1634 = vmin.f32 %v1466, %v1553
        %v1635 = vmin.f32 %v1467, %v1555
        %v1636 = vmin.f32 %v1468, %v1557
        %v1637 = vmin.f32 %v1469, %v1559
        %v1638 = vmin.f32 %v1470, %v1561
        %v1639 = vmin.f32 %v1471, %v1563
        %v1640 = vmin.f32 %v1472, %v1565
        %v1641 = vmin.f32 %v1473, %v1567
        %v1642 = vmin.f32 %v1474, %v1569
        %v1643 = vmin.f32 %v1475, %v1571
        %v1644 = vmin.f32 %v1476, %v1573
        %v1645 = vmin.f32 %v1477, %v1575
        %v1646 = vmin.f32 %v1478, %v1577
        %v1647 = vmin.f32 %v1479, %v1579
        %v1648 = vmin.f32 %v1480, %v1581
        %v1649 = vmin.f32 %v1481, %v1583
        %v1650 = vmin.f32 %v1482, %v1580
        %v1651 = vmin.f32 %v1483, %v1582
        %v1686 = vrot.slane %v1618, 1
        %v1687 = vrot.slane %v1620, 1
        %v1688 = vsel %vm982, %v1686, %v1687
        %v1689 = vrot.slane %v1619, 1
        %v1690 = vrot.slane %v1621, 1
        %v1691 = vsel %vm982, %v1689, %v1690
        %v1692 = vrot.slane %v1622, 1
        %v1693 = vsel %vm982, %v1687, %v1692
        %v1694 = vrot.slane %v1623, 1
        %v1695 = vsel %vm982, %v1690, %v1694
        %v1696 = vrot.slane %v1624, 1
        %v1697 = vsel %vm982, %v1692, %v1696
        %v1698 = vrot.slane %v1625, 1
        %v1699 = vsel %vm982, %v1694, %v1698
        %v1700 = vrot.slane %v1626, 1
        %v1701 = vsel %vm982, %v1696, %v1700
        %v1702 = vrot.slane %v1627, 1
        %v1703 = vsel %vm982, %v1698, %v1702
        %v1704 = vrot.slane %v1628, 1
        %v1705 = vsel %vm982, %v1700, %v1704
        %v1706 = vrot.slane %v1629, 1
        %v1707 = vsel %vm982, %v1702, %v1706
        %v1708 = vrot.slane %v1630, 1
        %v1709 = vsel %vm982, %v1704, %v1708
        %v1710 = vrot.slane %v1631, 1
        %v1711 = vsel %vm982, %v1706, %v1710
        %v1712 = vrot.slane %v1632, 1
        %v1713 = vsel %vm982, %v1708, %v1712
        %v1714 = vrot.slane %v1633, 1
        %v1715 = vsel %vm982, %v1710, %v1714
        %v1716 = vrot.slane %v1634, 1
        %v1717 = vsel %vm982, %v1712, %v1716
        %v1718 = vrot.slane %v1635, 1
        %v1719 = vsel %vm982, %v1714, %v1718
        %v1720 = vrot.slane %v1636, 1
        %v1721 = vsel %vm982, %v1716, %v1720
        %v1722 = vrot.slane %v1637, 1
        %v1723 = vsel %vm982, %v1718, %v1722
        %v1724 = vrot.slane %v1638, 1
        %v1725 = vsel %vm982, %v1720, %v1724
        %v1726 = vrot.slane %v1639, 1
        %v1727 = vsel %vm982, %v1722, %v1726
        %v1728 = vrot.slane %v1640, 1
        %v1729 = vsel %vm982, %v1724, %v1728
        %v1730 = vrot.slane %v1641, 1
        %v1731 = vsel %vm982, %v1726, %v1730
        %v1732 = vrot.slane %v1642, 1
        %v1733 = vsel %vm982, %v1728, %v1732
        %v1734 = vrot.slane %v1643, 1
        %v1735 = vsel %vm982, %v1730, %v1734
        %v1736 = vrot.slane %v1644, 1
        %v1737 = vsel %vm982, %v1732, %v1736
        %v1738 = vrot.slane %v1645, 1
        %v1739 = vsel %vm982, %v1734, %v1738
        %v1740 = vrot.slane %v1646, 1
        %v1741 = vsel %vm982, %v1736, %v1740
        %v1742 = vrot.slane %v1647, 1
        %v1743 = vsel %vm982, %v1738, %v1742
        %v1744 = vrot.slane %v1648, 1
        %v1745 = vsel %vm982, %v1740, %v1744
        %v1746 = vrot.slane %v1649, 1
        %v1747 = vsel %vm982, %v1742, %v1746
        %v1748 = vrot.slane %v1650, 1
        %v1749 = vsel %vm982, %v1744, %v1748
        %v1750 = vrot.slane %v1651, 1
        %v1751 = vsel %vm982, %v1746, %v1750
        %v1784 = vmin.f32 %v1618, %v1688
        %v1785 = vmin.f32 %v1619, %v1691
        %v1786 = vmin.f32 %v1620, %v1693
        %v1787 = vmin.f32 %v1621, %v1695
        %v1788 = vmin.f32 %v1622, %v1697
        %v1789 = vmin.f32 %v1623, %v1699
        %v1790 = vmin.f32 %v1624, %v1701
        %v1791 = vmin.f32 %v1625, %v1703
        %v1792 = vmin.f32 %v1626, %v1705
        %v1793 = vmin.f32 %v1627, %v1707
        %v1794 = vmin.f32 %v1628, %v1709
        %v1795 = vmin.f32 %v1629, %v1711
        %v1796 = vmin.f32 %v1630, %v1713
        %v1797 = vmin.f32 %v1631, %v1715
        %v1798 = vmin.f32 %v1632, %v1717
        %v1799 = vmin.f32 %v1633, %v1719
        %v1800 = vmin.f32 %v1634, %v1721
        %v1801 = vmin.f32 %v1635, %v1723
        %v1802 = vmin.f32 %v1636, %v1725
        %v1803 = vmin.f32 %v1637, %v1727
        %v1804 = vmin.f32 %v1638, %v1729
        %v1805 = vmin.f32 %v1639, %v1731
        %v1806 = vmin.f32 %v1640, %v1733
        %v1807 = vmin.f32 %v1641, %v1735
        %v1808 = vmin.f32 %v1642, %v1737
        %v1809 = vmin.f32 %v1643, %v1739
        %v1810 = vmin.f32 %v1644, %v1741
        %v1811 = vmin.f32 %v1645, %v1743
        %v1812 = vmin.f32 %v1646, %v1745
        %v1813 = vmin.f32 %v1647, %v1747
        %v1814 = vmin.f32 %v1648, %v1749
        %v1815 = vmin.f32 %v1649, %v1751
        %1848 = vrot.lane.b32.xlu0 %v1418, 127
        %v1849 = vpop.permute.xlu0 %1848
        %1850 = vrot.lane.b32.xlu0 %v1419, 127
        %v1851 = vpop.permute.xlu0 %1850
        %1852 = vrot.lane.b32.xlu0 %v1420, 127
        %v1853 = vpop.permute.xlu0 %1852
        %1854 = vrot.lane.b32.xlu0 %v1421, 127
        %v1855 = vpop.permute.xlu0 %1854
        %1856 = vrot.lane.b32.xlu0 %v1422, 127
        %v1857 = vpop.permute.xlu0 %1856
        %1858 = vrot.lane.b32.xlu0 %v1423, 127
        %v1859 = vpop.permute.xlu0 %1858
        %1860 = vrot.lane.b32.xlu0 %v1424, 127
        %v1861 = vpop.permute.xlu0 %1860
        %1862 = vrot.lane.b32.xlu0 %v1425, 127
        %v1863 = vpop.permute.xlu0 %1862
        %1864 = vrot.lane.b32.xlu0 %v1426, 127
        %v1865 = vpop.permute.xlu0 %1864
        %1866 = vrot.lane.b32.xlu0 %v1427, 127
        %v1867 = vpop.permute.xlu0 %1866
        %1868 = vrot.lane.b32.xlu0 %v1428, 127
        %v1869 = vpop.permute.xlu0 %1868
        %1870 = vrot.lane.b32.xlu0 %v1429, 127
        %v1871 = vpop.permute.xlu0 %1870
        %1872 = vrot.lane.b32.xlu0 %v1430, 127
        %v1873 = vpop.permute.xlu0 %1872
        %1874 = vrot.lane.b32.xlu0 %v1431, 127
        %v1875 = vpop.permute.xlu0 %1874
        %1876 = vrot.lane.b32.xlu0 %v1432, 127
        %v1877 = vpop.permute.xlu0 %1876
        %1878 = vrot.lane.b32.xlu0 %v1433, 127
        %v1879 = vpop.permute.xlu0 %1878
        %1880 = vrot.lane.b32.xlu0 %v1434, 127
        %v1881 = vpop.permute.xlu0 %1880
        %1882 = vrot.lane.b32.xlu0 %v1435, 127
        %v1883 = vpop.permute.xlu0 %1882
        %1884 = vrot.lane.b32.xlu0 %v1436, 127
        %v1885 = vpop.permute.xlu0 %1884
        %1886 = vrot.lane.b32.xlu0 %v1437, 127
        %v1887 = vpop.permute.xlu0 %1886
        %1888 = vrot.lane.b32.xlu0 %v1438, 127
        %v1889 = vpop.permute.xlu0 %1888
        %1890 = vrot.lane.b32.xlu0 %v1439, 127
        %v1891 = vpop.permute.xlu0 %1890
        %1892 = vrot.lane.b32.xlu0 %v1440, 127
        %v1893 = vpop.permute.xlu0 %1892
        %1894 = vrot.lane.b32.xlu0 %v1441, 127
        %v1895 = vpop.permute.xlu0 %1894
        %1896 = vrot.lane.b32.xlu0 %v1442, 127
        %v1897 = vpop.permute.xlu0 %1896
        %1898 = vrot.lane.b32.xlu0 %v1443, 127
        %v1899 = vpop.permute.xlu0 %1898
        %1900 = vrot.lane.b32.xlu0 %v1444, 127
        %v1901 = vpop.permute.xlu0 %1900
        %1902 = vrot.lane.b32.xlu0 %v1445, 127
        %v1903 = vpop.permute.xlu0 %1902
        %1904 = vrot.lane.b32.xlu0 %v1446, 127
        %v1905 = vpop.permute.xlu0 %1904
        %1906 = vrot.lane.b32.xlu0 %v1447, 127
        %v1907 = vpop.permute.xlu0 %1906
        %1908 = vrot.lane.b32.xlu0 %v1448, 127
        %v1909 = vpop.permute.xlu0 %1908
        %1910 = vrot.lane.b32.xlu0 %v1449, 127
        %v1911 = vpop.permute.xlu0 %1910
        %vm1912 = vcmask 1039360
        %v1913 = vsel %vm1912, %v1849, %v1851
        %v1914 = vsel %vm1912, %v1853, %v1855
        %v1915 = vsel %vm1912, %v1857, %v1859
        %v1916 = vsel %vm1912, %v1861, %v1863
        %v1917 = vsel %vm1912, %v1865, %v1867
        %v1918 = vsel %vm1912, %v1869, %v1871
        %v1919 = vsel %vm1912, %v1873, %v1875
        %v1920 = vsel %vm1912, %v1877, %v1879
        %v1921 = vsel %vm1912, %v1881, %v1883
        %v1922 = vsel %vm1912, %v1885, %v1887
        %v1923 = vsel %vm1912, %v1889, %v1891
        %v1924 = vsel %vm1912, %v1893, %v1895
        %v1925 = vsel %vm1912, %v1897, %v1899
        %v1926 = vsel %vm1912, %v1901, %v1903
        %v1927 = vsel %vm1912, %v1905, %v1907
        %v1928 = vsel %vm1912, %v1909, %v1911
        %v1961 = vmax.f32 %v1418, %v1913
        %v1962 = vmax.f32 %v1419, %v1851
        %v1963 = vmax.f32 %v1420, %v1914
        %v1964 = vmax.f32 %v1421, %v1855
        %v1965 = vmax.f32 %v1422, %v1915
        %v1966 = vmax.f32 %v1423, %v1859
        %v1967 = vmax.f32 %v1424, %v1916
        %v1968 = vmax.f32 %v1425, %v1863
        %v1969 = vmax.f32 %v1426, %v1917
        %v1970 = vmax.f32 %v1427, %v1867
        %v1971 = vmax.f32 %v1428, %v1918
        %v1972 = vmax.f32 %v1429, %v1871
        %v1973 = vmax.f32 %v1430, %v1919
        %v1974 = vmax.f32 %v1431, %v1875
        %v1975 = vmax.f32 %v1432, %v1920
        %v1976 = vmax.f32 %v1433, %v1879
        %v1977 = vmax.f32 %v1434, %v1921
        %v1978 = vmax.f32 %v1435, %v1883
        %v1979 = vmax.f32 %v1436, %v1922
        %v1980 = vmax.f32 %v1437, %v1887
        %v1981 = vmax.f32 %v1438, %v1923
        %v1982 = vmax.f32 %v1439, %v1891
        %v1983 = vmax.f32 %v1440, %v1924
        %v1984 = vmax.f32 %v1441, %v1895
        %v1985 = vmax.f32 %v1442, %v1925
        %v1986 = vmax.f32 %v1443, %v1899
        %v1987 = vmax.f32 %v1444, %v1926
        %v1988 = vmax.f32 %v1445, %v1903
        %v1989 = vmax.f32 %v1446, %v1927
        %v1990 = vmax.f32 %v1447, %v1907
        %v1991 = vmax.f32 %v1448, %v1928
        %v1992 = vmax.f32 %v1449, %v1911
        %2025 = vrot.lane.b32.xlu0 %v1961, 126
        %v2026 = vpop.permute.xlu0 %2025
        %2027 = vrot.lane.b32.xlu0 %v1962, 126
        %v2028 = vpop.permute.xlu0 %2027
        %2029 = vrot.lane.b32.xlu0 %v1963, 126
        %v2030 = vpop.permute.xlu0 %2029
        %2031 = vrot.lane.b32.xlu0 %v1964, 126
        %v2032 = vpop.permute.xlu0 %2031
        %2033 = vrot.lane.b32.xlu0 %v1965, 126
        %v2034 = vpop.permute.xlu0 %2033
        %2035 = vrot.lane.b32.xlu0 %v1966, 126
        %v2036 = vpop.permute.xlu0 %2035
        %2037 = vrot.lane.b32.xlu0 %v1967, 126
        %v2038 = vpop.permute.xlu0 %2037
        %2039 = vrot.lane.b32.xlu0 %v1968, 126
        %v2040 = vpop.permute.xlu0 %2039
        %2041 = vrot.lane.b32.xlu0 %v1969, 126
        %v2042 = vpop.permute.xlu0 %2041
        %2043 = vrot.lane.b32.xlu0 %v1970, 126
        %v2044 = vpop.permute.xlu0 %2043
        %2045 = vrot.lane.b32.xlu0 %v1971, 126
        %v2046 = vpop.permute.xlu0 %2045
        %2047 = vrot.lane.b32.xlu0 %v1972, 126
        %v2048 = vpop.permute.xlu0 %2047
        %2049 = vrot.lane.b32.xlu0 %v1973, 126
        %v2050 = vpop.permute.xlu0 %2049
        %2051 = vrot.lane.b32.xlu0 %v1974, 126
        %v2052 = vpop.permute.xlu0 %2051
        %2053 = vrot.lane.b32.xlu0 %v1975, 126
        %v2054 = vpop.permute.xlu0 %2053
        %2055 = vrot.lane.b32.xlu0 %v1976, 126
        %v2056 = vpop.permute.xlu0 %2055
        %2057 = vrot.lane.b32.xlu0 %v1977, 126
        %v2058 = vpop.permute.xlu0 %2057
        %2059 = vrot.lane.b32.xlu0 %v1978, 126
        %v2060 = vpop.permute.xlu0 %2059
        %2061 = vrot.lane.b32.xlu0 %v1979, 126
        %v2062 = vpop.permute.xlu0 %2061
        %2063 = vrot.lane.b32.xlu0 %v1980, 126
        %v2064 = vpop.permute.xlu0 %2063
        %2065 = vrot.lane.b32.xlu0 %v1981, 126
        %v2066 = vpop.permute.xlu0 %2065
        %2067 = vrot.lane.b32.xlu0 %v1982, 126
        %v2068 = vpop.permute.xlu0 %2067
        %2069 = vrot.lane.b32.xlu0 %v1983, 126
        %v2070 = vpop.permute.xlu0 %2069
        %2071 = vrot.lane.b32.xlu0 %v1984, 126
        %v2072 = vpop.permute.xlu0 %2071
        %2073 = vrot.lane.b32.xlu0 %v1985, 126
        %v2074 = vpop.permute.xlu0 %2073
        %2075 = vrot.lane.b32.xlu0 %v1986, 126
        %v2076 = vpop.permute.xlu0 %2075
        %2077 = vrot.lane.b32.xlu0 %v1987, 126
        %v2078 = vpop.permute.xlu0 %2077
        %2079 = vrot.lane.b32.xlu0 %v1988, 126
        %v2080 = vpop.permute.xlu0 %2079
        %2081 = vrot.lane.b32.xlu0 %v1989, 126
        %v2082 = vpop.permute.xlu0 %2081
        %2083 = vrot.lane.b32.xlu0 %v1990, 126
        %v2084 = vpop.permute.xlu0 %2083
        %2085 = vrot.lane.b32.xlu0 %v1991, 126
        %v2086 = vpop.permute.xlu0 %2085
        %2087 = vrot.lane.b32.xlu0 %v1992, 126
        %v2088 = vpop.permute.xlu0 %2087
        %vm2089 = vcmask 1031168
        %v2090 = vsel %vm2089, %v2026, %v2028
        %v2091 = vsel %vm2089, %v2030, %v2032
        %v2092 = vsel %vm2089, %v2034, %v2036
        %v2093 = vsel %vm2089, %v2038, %v2040
        %v2094 = vsel %vm2089, %v2042, %v2044
        %v2095 = vsel %vm2089, %v2046, %v2048
        %v2096 = vsel %vm2089, %v2050, %v2052
        %v2097 = vsel %vm2089, %v2054, %v2056
        %v2098 = vsel %vm2089, %v2058, %v2060
        %v2099 = vsel %vm2089, %v2062, %v2064
        %v2100 = vsel %vm2089, %v2066, %v2068
        %v2101 = vsel %vm2089, %v2070, %v2072
        %v2102 = vsel %vm2089, %v2074, %v2076
        %v2103 = vsel %vm2089, %v2078, %v2080
        %v2104 = vsel %vm2089, %v2082, %v2084
        %v2105 = vsel %vm2089, %v2086, %v2088
        %v2138 = vmax.f32 %v1961, %v2090
        %v2139 = vmax.f32 %v1962, %v2028
        %v2140 = vmax.f32 %v1963, %v2091
        %v2141 = vmax.f32 %v1964, %v2032
        %v2142 = vmax.f32 %v1965, %v2092
        %v2143 = vmax.f32 %v1966, %v2036
        %v2144 = vmax.f32 %v1967, %v2093
        %v2145 = vmax.f32 %v1968, %v2040
        %v2146 = vmax.f32 %v1969, %v2094
        %v2147 = vmax.f32 %v1970, %v2044
        %v2148 = vmax.f32 %v1971, %v2095
        %v2149 = vmax.f32 %v1972, %v2048
        %v2150 = vmax.f32 %v1973, %v2096
        %v2151 = vmax.f32 %v1974, %v2052
        %v2152 = vmax.f32 %v1975, %v2097
        %v2153 = vmax.f32 %v1976, %v2056
        %v2154 = vmax.f32 %v1977, %v2098
        %v2155 = vmax.f32 %v1978, %v2060
        %v2156 = vmax.f32 %v1979, %v2099
        %v2157 = vmax.f32 %v1980, %v2064
        %v2158 = vmax.f32 %v1981, %v2100
        %v2159 = vmax.f32 %v1982, %v2068
        %v2160 = vmax.f32 %v1983, %v2101
        %v2161 = vmax.f32 %v1984, %v2072
        %v2162 = vmax.f32 %v1985, %v2102
        %v2163 = vmax.f32 %v1986, %v2076
        %v2164 = vmax.f32 %v1987, %v2103
        %v2165 = vmax.f32 %v1988, %v2080
        %v2166 = vmax.f32 %v1989, %v2104
        %v2167 = vmax.f32 %v1990, %v2084
        %v2168 = vmax.f32 %v1991, %v2105
        %v2169 = vmax.f32 %v1992, %v2088
        %2202 = vrot.lane.b32.xlu0 %v2138, 127
        %v2203 = vpop.permute.xlu0 %2202
        %2204 = vrot.lane.b32.xlu0 %v2139, 127
        %v2205 = vpop.permute.xlu0 %2204
        %2206 = vrot.lane.b32.xlu0 %v2140, 127
        %v2207 = vpop.permute.xlu0 %2206
        %2208 = vrot.lane.b32.xlu0 %v2141, 127
        %v2209 = vpop.permute.xlu0 %2208
        %2210 = vrot.lane.b32.xlu0 %v2142, 127
        %v2211 = vpop.permute.xlu0 %2210
        %2212 = vrot.lane.b32.xlu0 %v2143, 127
        %v2213 = vpop.permute.xlu0 %2212
        %2214 = vrot.lane.b32.xlu0 %v2144, 127
        %v2215 = vpop.permute.xlu0 %2214
        %2216 = vrot.lane.b32.xlu0 %v2145, 127
        %v2217 = vpop.permute.xlu0 %2216
        %2218 = vrot.lane.b32.xlu0 %v2146, 127
        %v2219 = vpop.permute.xlu0 %2218
        %2220 = vrot.lane.b32.xlu0 %v2147, 127
        %v2221 = vpop.permute.xlu0 %2220
        %2222 = vrot.lane.b32.xlu0 %v2148, 127
        %v2223 = vpop.permute.xlu0 %2222
        %2224 = vrot.lane.b32.xlu0 %v2149, 127
        %v2225 = vpop.permute.xlu0 %2224
        %2226 = vrot.lane.b32.xlu0 %v2150, 127
        %v2227 = vpop.permute.xlu0 %2226
        %2228 = vrot.lane.b32.xlu0 %v2151, 127
        %v2229 = vpop.permute.xlu0 %2228
        %2230 = vrot.lane.b32.xlu0 %v2152, 127
        %v2231 = vpop.permute.xlu0 %2230
        %2232 = vrot.lane.b32.xlu0 %v2153, 127
        %v2233 = vpop.permute.xlu0 %2232
        %2234 = vrot.lane.b32.xlu0 %v2154, 127
        %v2235 = vpop.permute.xlu0 %2234
        %2236 = vrot.lane.b32.xlu0 %v2155, 127
        %v2237 = vpop.permute.xlu0 %2236
        %2238 = vrot.lane.b32.xlu0 %v2156, 127
        %v2239 = vpop.permute.xlu0 %2238
        %2240 = vrot.lane.b32.xlu0 %v2157, 127
        %v2241 = vpop.permute.xlu0 %2240
        %2242 = vrot.lane.b32.xlu0 %v2158, 127
        %v2243 = vpop.permute.xlu0 %2242
        %2244 = vrot.lane.b32.xlu0 %v2159, 127
        %v2245 = vpop.permute.xlu0 %2244
        %2246 = vrot.lane.b32.xlu0 %v2160, 127
        %v2247 = vpop.permute.xlu0 %2246
        %2248 = vrot.lane.b32.xlu0 %v2161, 127
        %v2249 = vpop.permute.xlu0 %2248
        %2250 = vrot.lane.b32.xlu0 %v2162, 127
        %v2251 = vpop.permute.xlu0 %2250
        %2252 = vrot.lane.b32.xlu0 %v2163, 127
        %v2253 = vpop.permute.xlu0 %2252
        %2254 = vrot.lane.b32.xlu0 %v2164, 127
        %v2255 = vpop.permute.xlu0 %2254
        %2256 = vrot.lane.b32.xlu0 %v2165, 127
        %v2257 = vpop.permute.xlu0 %2256
        %2258 = vrot.lane.b32.xlu0 %v2166, 127
        %v2259 = vpop.permute.xlu0 %2258
        %2260 = vrot.lane.b32.xlu0 %v2167, 127
        %v2261 = vpop.permute.xlu0 %2260
        %2262 = vrot.lane.b32.xlu0 %v2168, 127
        %v2263 = vpop.permute.xlu0 %2262
        %2264 = vrot.lane.b32.xlu0 %v2169, 127
        %v2265 = vpop.permute.xlu0 %2264
        %v2266 = vsel %vm1912, %v2203, %v2205
        %v2267 = vsel %vm1912, %v2207, %v2209
        %v2268 = vsel %vm1912, %v2211, %v2213
        %v2269 = vsel %vm1912, %v2215, %v2217
        %v2270 = vsel %vm1912, %v2219, %v2221
        %v2271 = vsel %vm1912, %v2223, %v2225
        %v2272 = vsel %vm1912, %v2227, %v2229
        %v2273 = vsel %vm1912, %v2231, %v2233
        %v2274 = vsel %vm1912, %v2235, %v2237
        %v2275 = vsel %vm1912, %v2239, %v2241
        %v2276 = vsel %vm1912, %v2243, %v2245
        %v2277 = vsel %vm1912, %v2247, %v2249
        %v2278 = vsel %vm1912, %v2251, %v2253
        %v2279 = vsel %vm1912, %v2255, %v2257
        %v2280 = vsel %vm1912, %v2259, %v2261
        %v2281 = vsel %vm1912, %v2263, %v2265
        %v2298 = vmax.f32 %v2138, %v2266
        %v2299 = vmax.f32 %v2140, %v2267
        %v2300 = vmax.f32 %v2142, %v2268
        %v2301 = vmax.f32 %v2144, %v2269
        %v2302 = vmax.f32 %v2146, %v2270
        %v2303 = vmax.f32 %v2148, %v2271
        %v2304 = vmax.f32 %v2150, %v2272
        %v2305 = vmax.f32 %v2152, %v2273
        %v2306 = vmax.f32 %v2154, %v2274
        %v2307 = vmax.f32 %v2156, %v2275
        %v2308 = vmax.f32 %v2158, %v2276
        %v2309 = vmax.f32 %v2160, %v2277
        %v2310 = vmax.f32 %v2162, %v2278
        %v2311 = vmax.f32 %v2164, %v2279
        %v2312 = vmax.f32 %v2166, %v2280
        %v2313 = vmax.f32 %v2168, %v2281
        %2346 = vrot.lane.b32.xlu0 %v1784, 127
        %v2347 = vpop.permute.xlu0 %2346
        %2348 = vrot.lane.b32.xlu0 %v1785, 127
        %v2349 = vpop.permute.xlu0 %2348
        %2350 = vrot.lane.b32.xlu0 %v1786, 127
        %v2351 = vpop.permute.xlu0 %2350
        %2352 = vrot.lane.b32.xlu0 %v1787, 127
        %v2353 = vpop.permute.xlu0 %2352
        %2354 = vrot.lane.b32.xlu0 %v1788, 127
        %v2355 = vpop.permute.xlu0 %2354
        %2356 = vrot.lane.b32.xlu0 %v1789, 127
        %v2357 = vpop.permute.xlu0 %2356
        %2358 = vrot.lane.b32.xlu0 %v1790, 127
        %v2359 = vpop.permute.xlu0 %2358
        %2360 = vrot.lane.b32.xlu0 %v1791, 127
        %v2361 = vpop.permute.xlu0 %2360
        %2362 = vrot.lane.b32.xlu0 %v1792, 127
        %v2363 = vpop.permute.xlu0 %2362
        %2364 = vrot.lane.b32.xlu0 %v1793, 127
        %v2365 = vpop.permute.xlu0 %2364
        %2366 = vrot.lane.b32.xlu0 %v1794, 127
        %v2367 = vpop.permute.xlu0 %2366
        %2368 = vrot.lane.b32.xlu0 %v1795, 127
        %v2369 = vpop.permute.xlu0 %2368
        %2370 = vrot.lane.b32.xlu0 %v1796, 127
        %v2371 = vpop.permute.xlu0 %2370
        %2372 = vrot.lane.b32.xlu0 %v1797, 127
        %v2373 = vpop.permute.xlu0 %2372
        %2374 = vrot.lane.b32.xlu0 %v1798, 127
        %v2375 = vpop.permute.xlu0 %2374
        %2376 = vrot.lane.b32.xlu0 %v1799, 127
        %v2377 = vpop.permute.xlu0 %2376
        %2378 = vrot.lane.b32.xlu0 %v1800, 127
        %v2379 = vpop.permute.xlu0 %2378
        %2380 = vrot.lane.b32.xlu0 %v1801, 127
        %v2381 = vpop.permute.xlu0 %2380
        %2382 = vrot.lane.b32.xlu0 %v1802, 127
        %v2383 = vpop.permute.xlu0 %2382
        %2384 = vrot.lane.b32.xlu0 %v1803, 127
        %v2385 = vpop.permute.xlu0 %2384
        %2386 = vrot.lane.b32.xlu0 %v1804, 127
        %v2387 = vpop.permute.xlu0 %2386
        %2388 = vrot.lane.b32.xlu0 %v1805, 127
        %v2389 = vpop.permute.xlu0 %2388
        %2390 = vrot.lane.b32.xlu0 %v1806, 127
        %v2391 = vpop.permute.xlu0 %2390
        %2392 = vrot.lane.b32.xlu0 %v1807, 127
        %v2393 = vpop.permute.xlu0 %2392
        %2394 = vrot.lane.b32.xlu0 %v1808, 127
        %v2395 = vpop.permute.xlu0 %2394
        %2396 = vrot.lane.b32.xlu0 %v1809, 127
        %v2397 = vpop.permute.xlu0 %2396
        %2398 = vrot.lane.b32.xlu0 %v1810, 127
        %v2399 = vpop.permute.xlu0 %2398
        %2400 = vrot.lane.b32.xlu0 %v1811, 127
        %v2401 = vpop.permute.xlu0 %2400
        %2402 = vrot.lane.b32.xlu0 %v1812, 127
        %v2403 = vpop.permute.xlu0 %2402
        %2404 = vrot.lane.b32.xlu0 %v1813, 127
        %v2405 = vpop.permute.xlu0 %2404
        %2406 = vrot.lane.b32.xlu0 %v1814, 127
        %v2407 = vpop.permute.xlu0 %2406
        %2408 = vrot.lane.b32.xlu0 %v1815, 127
        %v2409 = vpop.permute.xlu0 %2408
        %v2410 = vsel %vm1912, %v2347, %v2349
        %v2411 = vsel %vm1912, %v2351, %v2353
        %v2412 = vsel %vm1912, %v2355, %v2357
        %v2413 = vsel %vm1912, %v2359, %v2361
        %v2414 = vsel %vm1912, %v2363, %v2365
        %v2415 = vsel %vm1912, %v2367, %v2369
        %v2416 = vsel %vm1912, %v2371, %v2373
        %v2417 = vsel %vm1912, %v2375, %v2377
        %v2418 = vsel %vm1912, %v2379, %v2381
        %v2419 = vsel %vm1912, %v2383, %v2385
        %v2420 = vsel %vm1912, %v2387, %v2389
        %v2421 = vsel %vm1912, %v2391, %v2393
        %v2422 = vsel %vm1912, %v2395, %v2397
        %v2423 = vsel %vm1912, %v2399, %v2401
        %v2424 = vsel %vm1912, %v2403, %v2405
        %v2425 = vsel %vm1912, %v2407, %v2409
        %v2458 = vmin.f32 %v1784, %v2410
        %v2459 = vmin.f32 %v1785, %v2349
        %v2460 = vmin.f32 %v1786, %v2411
        %v2461 = vmin.f32 %v1787, %v2353
        %v2462 = vmin.f32 %v1788, %v2412
        %v2463 = vmin.f32 %v1789, %v2357
        %v2464 = vmin.f32 %v1790, %v2413
        %v2465 = vmin.f32 %v1791, %v2361
        %v2466 = vmin.f32 %v1792, %v2414
        %v2467 = vmin.f32 %v1793, %v2365
        %v2468 = vmin.f32 %v1794, %v2415
        %v2469 = vmin.f32 %v1795, %v2369
        %v2470 = vmin.f32 %v1796, %v2416
        %v2471 = vmin.f32 %v1797, %v2373
        %v2472 = vmin.f32 %v1798, %v2417
        %v2473 = vmin.f32 %v1799, %v2377
        %v2474 = vmin.f32 %v1800, %v2418
        %v2475 = vmin.f32 %v1801, %v2381
        %v2476 = vmin.f32 %v1802, %v2419
        %v2477 = vmin.f32 %v1803, %v2385
        %v2478 = vmin.f32 %v1804, %v2420
        %v2479 = vmin.f32 %v1805, %v2389
        %v2480 = vmin.f32 %v1806, %v2421
        %v2481 = vmin.f32 %v1807, %v2393
        %v2482 = vmin.f32 %v1808, %v2422
        %v2483 = vmin.f32 %v1809, %v2397
        %v2484 = vmin.f32 %v1810, %v2423
        %v2485 = vmin.f32 %v1811, %v2401
        %v2486 = vmin.f32 %v1812, %v2424
        %v2487 = vmin.f32 %v1813, %v2405
        %v2488 = vmin.f32 %v1814, %v2425
        %v2489 = vmin.f32 %v1815, %v2409
        %2522 = vrot.lane.b32.xlu0 %v2458, 126
        %v2523 = vpop.permute.xlu0 %2522
        %2524 = vrot.lane.b32.xlu0 %v2459, 126
        %v2525 = vpop.permute.xlu0 %2524
        %2526 = vrot.lane.b32.xlu0 %v2460, 126
        %v2527 = vpop.permute.xlu0 %2526
        %2528 = vrot.lane.b32.xlu0 %v2461, 126
        %v2529 = vpop.permute.xlu0 %2528
        %2530 = vrot.lane.b32.xlu0 %v2462, 126
        %v2531 = vpop.permute.xlu0 %2530
        %2532 = vrot.lane.b32.xlu0 %v2463, 126
        %v2533 = vpop.permute.xlu0 %2532
        %2534 = vrot.lane.b32.xlu0 %v2464, 126
        %v2535 = vpop.permute.xlu0 %2534
        %2536 = vrot.lane.b32.xlu0 %v2465, 126
        %v2537 = vpop.permute.xlu0 %2536
        %2538 = vrot.lane.b32.xlu0 %v2466, 126
        %v2539 = vpop.permute.xlu0 %2538
        %2540 = vrot.lane.b32.xlu0 %v2467, 126
        %v2541 = vpop.permute.xlu0 %2540
        %2542 = vrot.lane.b32.xlu0 %v2468, 126
        %v2543 = vpop.permute.xlu0 %2542
        %2544 = vrot.lane.b32.xlu0 %v2469, 126
        %v2545 = vpop.permute.xlu0 %2544
        %2546 = vrot.lane.b32.xlu0 %v2470, 126
        %v2547 = vpop.permute.xlu0 %2546
        %2548 = vrot.lane.b32.xlu0 %v2471, 126
        %v2549 = vpop.permute.xlu0 %2548
        %2550 = vrot.lane.b32.xlu0 %v2472, 126
        %v2551 = vpop.permute.xlu0 %2550
        %2552 = vrot.lane.b32.xlu0 %v2473, 126
        %v2553 = vpop.permute.xlu0 %2552
        %2554 = vrot.lane.b32.xlu0 %v2474, 126
        %v2555 = vpop.permute.xlu0 %2554
        %2556 = vrot.lane.b32.xlu0 %v2475, 126
        %v2557 = vpop.permute.xlu0 %2556
        %2558 = vrot.lane.b32.xlu0 %v2476, 126
        %v2559 = vpop.permute.xlu0 %2558
        %2560 = vrot.lane.b32.xlu0 %v2477, 126
        %v2561 = vpop.permute.xlu0 %2560
        %2562 = vrot.lane.b32.xlu0 %v2478, 126
        %v2563 = vpop.permute.xlu0 %2562
        %2564 = vrot.lane.b32.xlu0 %v2479, 126
        %v2565 = vpop.permute.xlu0 %2564
        %2566 = vrot.lane.b32.xlu0 %v2480, 126
        %v2567 = vpop.permute.xlu0 %2566
        %2568 = vrot.lane.b32.xlu0 %v2481, 126
        %v2569 = vpop.permute.xlu0 %2568
        %2570 = vrot.lane.b32.xlu0 %v2482, 126
        %v2571 = vpop.permute.xlu0 %2570
        %2572 = vrot.lane.b32.xlu0 %v2483, 126
        %v2573 = vpop.permute.xlu0 %2572
        %2574 = vrot.lane.b32.xlu0 %v2484, 126
        %v2575 = vpop.permute.xlu0 %2574
        %2576 = vrot.lane.b32.xlu0 %v2485, 126
        %v2577 = vpop.permute.xlu0 %2576
        %2578 = vrot.lane.b32.xlu0 %v2486, 126
        %v2579 = vpop.permute.xlu0 %2578
        %2580 = vrot.lane.b32.xlu0 %v2487, 126
        %v2581 = vpop.permute.xlu0 %2580
        %2582 = vrot.lane.b32.xlu0 %v2488, 126
        %v2583 = vpop.permute.xlu0 %2582
        %2584 = vrot.lane.b32.xlu0 %v2489, 126
        %v2585 = vpop.permute.xlu0 %2584
        %v2586 = vsel %vm2089, %v2523, %v2525
        %v2587 = vsel %vm2089, %v2527, %v2529
        %v2588 = vsel %vm2089, %v2531, %v2533
        %v2589 = vsel %vm2089, %v2535, %v2537
        %v2590 = vsel %vm2089, %v2539, %v2541
        %v2591 = vsel %vm2089, %v2543, %v2545
        %v2592 = vsel %vm2089, %v2547, %v2549
        %v2593 = vsel %vm2089, %v2551, %v2553
        %v2594 = vsel %vm2089, %v2555, %v2557
        %v2595 = vsel %vm2089, %v2559, %v2561
        %v2596 = vsel %vm2089, %v2563, %v2565
        %v2597 = vsel %vm2089, %v2567, %v2569
        %v2598 = vsel %vm2089, %v2571, %v2573
        %v2599 = vsel %vm2089, %v2575, %v2577
        %v2600 = vsel %vm2089, %v2579, %v2581
        %v2601 = vsel %vm2089, %v2583, %v2585
        %v2634 = vmin.f32 %v2458, %v2586
        %v2635 = vmin.f32 %v2459, %v2525
        %v2636 = vmin.f32 %v2460, %v2587
        %v2637 = vmin.f32 %v2461, %v2529
        %v2638 = vmin.f32 %v2462, %v2588
        %v2639 = vmin.f32 %v2463, %v2533
        %v2640 = vmin.f32 %v2464, %v2589
        %v2641 = vmin.f32 %v2465, %v2537
        %v2642 = vmin.f32 %v2466, %v2590
        %v2643 = vmin.f32 %v2467, %v2541
        %v2644 = vmin.f32 %v2468, %v2591
        %v2645 = vmin.f32 %v2469, %v2545
        %v2646 = vmin.f32 %v2470, %v2592
        %v2647 = vmin.f32 %v2471, %v2549
        %v2648 = vmin.f32 %v2472, %v2593
        %v2649 = vmin.f32 %v2473, %v2553
        %v2650 = vmin.f32 %v2474, %v2594
        %v2651 = vmin.f32 %v2475, %v2557
        %v2652 = vmin.f32 %v2476, %v2595
        %v2653 = vmin.f32 %v2477, %v2561
        %v2654 = vmin.f32 %v2478, %v2596
        %v2655 = vmin.f32 %v2479, %v2565
        %v2656 = vmin.f32 %v2480, %v2597
        %v2657 = vmin.f32 %v2481, %v2569
        %v2658 = vmin.f32 %v2482, %v2598
        %v2659 = vmin.f32 %v2483, %v2573
        %v2660 = vmin.f32 %v2484, %v2599
        %v2661 = vmin.f32 %v2485, %v2577
        %v2662 = vmin.f32 %v2486, %v2600
        %v2663 = vmin.f32 %v2487, %v2581
        %v2664 = vmin.f32 %v2488, %v2601
        %v2665 = vmin.f32 %v2489, %v2585
        %2698 = vrot.lane.b32.xlu0 %v2634, 127
        %v2699 = vpop.permute.xlu0 %2698
        %2700 = vrot.lane.b32.xlu0 %v2635, 127
        %v2701 = vpop.permute.xlu0 %2700
        %2702 = vrot.lane.b32.xlu0 %v2636, 127
        %v2703 = vpop.permute.xlu0 %2702
        %2704 = vrot.lane.b32.xlu0 %v2637, 127
        %v2705 = vpop.permute.xlu0 %2704
        %2706 = vrot.lane.b32.xlu0 %v2638, 127
        %v2707 = vpop.permute.xlu0 %2706
        %2708 = vrot.lane.b32.xlu0 %v2639, 127
        %v2709 = vpop.permute.xlu0 %2708
        %2710 = vrot.lane.b32.xlu0 %v2640, 127
        %v2711 = vpop.permute.xlu0 %2710
        %2712 = vrot.lane.b32.xlu0 %v2641, 127
        %v2713 = vpop.permute.xlu0 %2712
        %2714 = vrot.lane.b32.xlu0 %v2642, 127
        %v2715 = vpop.permute.xlu0 %2714
        %2716 = vrot.lane.b32.xlu0 %v2643, 127
        %v2717 = vpop.permute.xlu0 %2716
        %2718 = vrot.lane.b32.xlu0 %v2644, 127
        %v2719 = vpop.permute.xlu0 %2718
        %2720 = vrot.lane.b32.xlu0 %v2645, 127
        %v2721 = vpop.permute.xlu0 %2720
        %2722 = vrot.lane.b32.xlu0 %v2646, 127
        %v2723 = vpop.permute.xlu0 %2722
        %2724 = vrot.lane.b32.xlu0 %v2647, 127
        %v2725 = vpop.permute.xlu0 %2724
        %2726 = vrot.lane.b32.xlu0 %v2648, 127
        %v2727 = vpop.permute.xlu0 %2726
        %2728 = vrot.lane.b32.xlu0 %v2649, 127
        %v2729 = vpop.permute.xlu0 %2728
        %2730 = vrot.lane.b32.xlu0 %v2650, 127
        %v2731 = vpop.permute.xlu0 %2730
        %2732 = vrot.lane.b32.xlu0 %v2651, 127
        %v2733 = vpop.permute.xlu0 %2732
        %2734 = vrot.lane.b32.xlu0 %v2652, 127
        %v2735 = vpop.permute.xlu0 %2734
        %2736 = vrot.lane.b32.xlu0 %v2653, 127
        %v2737 = vpop.permute.xlu0 %2736
        %2738 = vrot.lane.b32.xlu0 %v2654, 127
        %v2739 = vpop.permute.xlu0 %2738
        %2740 = vrot.lane.b32.xlu0 %v2655, 127
        %v2741 = vpop.permute.xlu0 %2740
        %2742 = vrot.lane.b32.xlu0 %v2656, 127
        %v2743 = vpop.permute.xlu0 %2742
        %2744 = vrot.lane.b32.xlu0 %v2657, 127
        %v2745 = vpop.permute.xlu0 %2744
        %2746 = vrot.lane.b32.xlu0 %v2658, 127
        %v2747 = vpop.permute.xlu0 %2746
        %2748 = vrot.lane.b32.xlu0 %v2659, 127
        %v2749 = vpop.permute.xlu0 %2748
        %2750 = vrot.lane.b32.xlu0 %v2660, 127
        %v2751 = vpop.permute.xlu0 %2750
        %2752 = vrot.lane.b32.xlu0 %v2661, 127
        %v2753 = vpop.permute.xlu0 %2752
        %2754 = vrot.lane.b32.xlu0 %v2662, 127
        %v2755 = vpop.permute.xlu0 %2754
        %2756 = vrot.lane.b32.xlu0 %v2663, 127
        %v2757 = vpop.permute.xlu0 %2756
        %2758 = vrot.lane.b32.xlu0 %v2664, 127
        %v2759 = vpop.permute.xlu0 %2758
        %2760 = vrot.lane.b32.xlu0 %v2665, 127
        %v2761 = vpop.permute.xlu0 %2760
        %v2762 = vsel %vm1912, %v2699, %v2701
        %v2763 = vsel %vm1912, %v2703, %v2705
        %v2764 = vsel %vm1912, %v2707, %v2709
        %v2765 = vsel %vm1912, %v2711, %v2713
        %v2766 = vsel %vm1912, %v2715, %v2717
        %v2767 = vsel %vm1912, %v2719, %v2721
        %v2768 = vsel %vm1912, %v2723, %v2725
        %v2769 = vsel %vm1912, %v2727, %v2729
        %v2770 = vsel %vm1912, %v2731, %v2733
        %v2771 = vsel %vm1912, %v2735, %v2737
        %v2772 = vsel %vm1912, %v2739, %v2741
        %v2773 = vsel %vm1912, %v2743, %v2745
        %v2774 = vsel %vm1912, %v2747, %v2749
        %v2775 = vsel %vm1912, %v2751, %v2753
        %v2776 = vsel %vm1912, %v2755, %v2757
        %v2777 = vsel %vm1912, %v2759, %v2761
        %v2794 = vmin.f32 %v2634, %v2762
        %v2795 = vmin.f32 %v2636, %v2763
        %v2796 = vmin.f32 %v2638, %v2764
        %v2797 = vmin.f32 %v2640, %v2765
        %v2798 = vmin.f32 %v2642, %v2766
        %v2799 = vmin.f32 %v2644, %v2767
        %v2800 = vmin.f32 %v2646, %v2768
        %v2801 = vmin.f32 %v2648, %v2769
        %v2802 = vmin.f32 %v2650, %v2770
        %v2803 = vmin.f32 %v2652, %v2771
        %v2804 = vmin.f32 %v2654, %v2772
        %v2805 = vmin.f32 %v2656, %v2773
        %v2806 = vmin.f32 %v2658, %v2774
        %v2807 = vmin.f32 %v2660, %v2775
        %v2808 = vmin.f32 %v2662, %v2776
        %v2809 = vmin.f32 %v2664, %v2777
        %vm2810 = vcmp.eq.f32.partialorder %v2794, 1.0
        %vm2811 = vcmp.eq.f32.partialorder %v2795, 1.0
        %vm2812 = vcmp.eq.f32.partialorder %v2796, 1.0
        %vm2813 = vcmp.eq.f32.partialorder %v2797, 1.0
        %vm2814 = vcmp.eq.f32.partialorder %v2798, 1.0
        %vm2815 = vcmp.eq.f32.partialorder %v2799, 1.0
        %vm2816 = vcmp.eq.f32.partialorder %v2800, 1.0
        %vm2817 = vcmp.eq.f32.partialorder %v2801, 1.0
        %vm2818 = vcmp.eq.f32.partialorder %v2802, 1.0
        %vm2819 = vcmp.eq.f32.partialorder %v2803, 1.0
        %vm2820 = vcmp.eq.f32.partialorder %v2804, 1.0
        %vm2821 = vcmp.eq.f32.partialorder %v2805, 1.0
        %vm2822 = vcmp.eq.f32.partialorder %v2806, 1.0
        %vm2823 = vcmp.eq.f32.partialorder %v2807, 1.0
        %vm2824 = vcmp.eq.f32.partialorder %v2808, 1.0
        %vm2825 = vcmp.eq.f32.partialorder %v2809, 1.0
        %vm2826 = vcmp.eq.f32.partialorder %v2298, 1.0
        %vm2827 = vcmp.eq.f32.partialorder %v2299, 1.0
        %vm2828 = vcmp.eq.f32.partialorder %v2300, 1.0
        %vm2829 = vcmp.eq.f32.partialorder %v2301, 1.0
        %vm2830 = vcmp.eq.f32.partialorder %v2302, 1.0
        %vm2831 = vcmp.eq.f32.partialorder %v2303, 1.0
        %vm2832 = vcmp.eq.f32.partialorder %v2304, 1.0
        %vm2833 = vcmp.eq.f32.partialorder %v2305, 1.0
        %vm2834 = vcmp.eq.f32.partialorder %v2306, 1.0
        %vm2835 = vcmp.eq.f32.partialorder %v2307, 1.0
        %vm2836 = vcmp.eq.f32.partialorder %v2308, 1.0
        %vm2837 = vcmp.eq.f32.partialorder %v2309, 1.0
        %vm2838 = vcmp.eq.f32.partialorder %v2310, 1.0
        %vm2839 = vcmp.eq.f32.partialorder %v2311, 1.0
        %vm2840 = vcmp.eq.f32.partialorder %v2312, 1.0
        %vm2841 = vcmp.eq.f32.partialorder %v2313, 1.0
        %v2842 = vsel %vm2826, 0.5, 0.0
        %v2843 = vsel %vm2827, 0.5, 0.0
        %v2844 = vsel %vm2828, 0.5, 0.0
        %v2845 = vsel %vm2829, 0.5, 0.0
        %v2846 = vsel %vm2830, 0.5, 0.0
        %v2847 = vsel %vm2831, 0.5, 0.0
        %v2848 = vsel %vm2832, 0.5, 0.0
        %v2849 = vsel %vm2833, 0.5, 0.0
        %v2850 = vsel %vm2834, 0.5, 0.0
        %v2851 = vsel %vm2835, 0.5, 0.0
        %v2852 = vsel %vm2836, 0.5, 0.0
        %v2853 = vsel %vm2837, 0.5, 0.0
        %v2854 = vsel %vm2838, 0.5, 0.0
        %v2855 = vsel %vm2839, 0.5, 0.0
        %v2856 = vsel %vm2840, 0.5, 0.0
        %v2857 = vsel %vm2841, 0.5, 0.0
        %v2858 = vsel %vm2810, 1.0, %v2842
        %v2859 = vsel %vm2811, 1.0, %v2843
        %v2860 = vsel %vm2812, 1.0, %v2844
        %v2861 = vsel %vm2813, 1.0, %v2845
        %v2862 = vsel %vm2814, 1.0, %v2846
        %v2863 = vsel %vm2815, 1.0, %v2847
        %v2864 = vsel %vm2816, 1.0, %v2848
        %v2865 = vsel %vm2817, 1.0, %v2849
        %v2866 = vsel %vm2818, 1.0, %v2850
        %v2867 = vsel %vm2819, 1.0, %v2851
        %v2868 = vsel %vm2820, 1.0, %v2852
        %v2869 = vsel %vm2821, 1.0, %v2853
        %v2870 = vsel %vm2822, 1.0, %v2854
        %v2871 = vsel %vm2823, 1.0, %v2855
        %v2872 = vsel %vm2824, 1.0, %v2856
        %v2873 = vsel %vm2825, 1.0, %v2857
        %2874 = vst [vmem:[%s302] sm:$0xff] %v2858
        %2875 = vst [vmem:[%s302 + $0x8] sm:$0xff] %v2859
        %2876 = vst [vmem:[%s302 + $0x10] sm:$0xff] %v2860
        %2877 = vst [vmem:[%s302 + $0x18] sm:$0xff] %v2861
        %2878 = vst [vmem:[%s302 + $0x20] sm:$0xff] %v2862
        %2879 = vst [vmem:[%s302 + $0x28] sm:$0xff] %v2863
        %2880 = vst [vmem:[%s302 + $0x30] sm:$0xff] %v2864
        %2881 = vst [vmem:[%s302 + $0x38] sm:$0xff] %v2865
        %2882 = vst [vmem:[%s302 + $0x40] sm:$0xff] %v2866
        %2883 = vst [vmem:[%s302 + $0x48] sm:$0xff] %v2867
        %2884 = vst [vmem:[%s302 + $0x50] sm:$0xff] %v2868
        %2885 = vst [vmem:[%s302 + $0x58] sm:$0xff] %v2869
        %2886 = vst [vmem:[%s302 + $0x60] sm:$0xff] %v2870
        %2887 = vst [vmem:[%s302 + $0x68] sm:$0xff] %v2871
        %2888 = vst [vmem:[%s302 + $0x70] sm:$0xff] %v2872
        %2889 = vst [vmem:[%s302 + $0x78] sm:$0xff] %v2873
        %s2890 = sand.u32 %s166, 1
        %s2891 = scalar_lea.sflag [#allocation3], %s2890
        %s2892 = sand.u32 %s166, 1
        %s2893 = smul.addr %s2892, 128
        %s2894 = scalar_lea.vmem [#allocation2], %s2893
        %s2895 = sand.u32 %s194, 1
        %s2896 = scalar_lea.sflag [#allocation5], %s2895
        %s2897 = sand.u32 %s194, 1
        %s2898 = smul.addr %s2897, 128
        %s2899 = scalar_lea.vmem [#allocation4], %s2898
        // Predicated region
        $region41: #{in_context_correspondence_forward.3} parent=39 // pred_check
          %p2900 = pneg %p176
        $region42: #{in_context_correspondence_forward.3} parent=39 // pred_check_branch
          %2902 = sbr.rel (%p2900) target = $region44
        $region43: #{in_context_correspondence_forward.3} parent=39 // pred_region
          %s2903 = smul.u32 16, %s29
          %s2905 = ssub.s32 2048, 2048
          %2906 = vsyncadd %s2891, %s2905
          %s2907 = smul.addr %s28, 16
          %s2908 = sadd.s32 %s2903, %s2907
          %s2909 = smul.addr %s2908, 128
          %s2910 = scalar_lea.hbm %s5, %s2909
          %s2911 = sshll.u32 %s2894, 4
          %s2912 = int_to_ptr.vmem [resolvable:$true] %s2911
          %2917 = dma.vmem_to_hbm [thread:$0]  %s2912, 2048, %s2910, %s2891, 128, 128, 8
        $region44: #{in_context_correspondence_forward.3} parent=39 // pred_fallthru
          _
        // Predicated region
        $region45: #{in_context_correspondence_forward.3} parent=39 // pred_check
          %p2918 = pneg %p204
        $region46: #{in_context_correspondence_forward.3} parent=39 // pred_check_branch
          %2920 = sbr.rel (%p2918) target = $region48
        $region47: #{in_context_correspondence_forward.3} parent=39 // pred_region
          %s2921 = smul.u32 16, %s29
          %s2923 = ssub.s32 2048, 2048
          %2924 = vsyncadd %s2896, %s2923
          %s2925 = smul.addr %s28, 16
          %s2926 = sadd.s32 %s2921, %s2925
          %s2927 = smul.addr %s2926, 128
          %s2928 = scalar_lea.hbm %s6, %s2927
          %s2929 = sshll.u32 %s2899, 4
          %s2930 = int_to_ptr.vmem [resolvable:$true] %s2929
          %2935 = dma.vmem_to_hbm [thread:$0]  %s2930, 2048, %s2928, %s2896, 128, 128, 8
        $region48: #{in_context_correspondence_forward.3} parent=39 // pred_fallthru
          _
      $region40: #{in_context_correspondence_forward.3} parent=5 // pred_fallthru
        _
      %p2936 = scmp.le.s32.totalorder 2, %s19
      // Predicated region
      $region49: #{in_context_correspondence_forward.3} parent=5 // pred_check
        %p2937 = pneg %p2936
      $region50: #{in_context_correspondence_forward.3} parent=5 // pred_check_branch
        %2939 = sbr.rel (%p2937) target = $region52
      $region51: #{in_context_correspondence_forward.3} parent=5 // pred_region
        %s2940 = ssub.s32 %s19, 2
        // Predicated region
        $region53: #{in_context_correspondence_forward.3} parent=51 // pred_check
          %p2941 = pneg %p182
        $region54: #{in_context_correspondence_forward.3} parent=51 // pred_check_branch
          %2943 = sbr.rel (%p2941) target = $region56
        $region55: #{in_context_correspondence_forward.3} parent=51 // pred_region
          %s2944 = sand.u32 %s167, 1
          %s2945 = scalar_lea.sflag [#allocation3], %s2944
          %s2946 = sand.u32 %s167, 1
          %s2947 = smul.addr %s2946, 128
          %s2948 = scalar_lea.vmem [#allocation2], %s2947
          %2949 = dma.done %s2945, 2048
        $region56: #{in_context_correspondence_forward.3} parent=51 // pred_fallthru
          _
        // Predicated region
        $region57: #{in_context_correspondence_forward.3} parent=51 // pred_check
          %p2950 = pneg %p210
        $region58: #{in_context_correspondence_forward.3} parent=51 // pred_check_branch
          %2952 = sbr.rel (%p2950) target = $region60
        $region59: #{in_context_correspondence_forward.3} parent=51 // pred_region
          %s2953 = sand.u32 %s195, 1
          %s2954 = scalar_lea.sflag [#allocation5], %s2953
          %s2955 = sand.u32 %s195, 1
          %s2956 = smul.addr %s2955, 128
          %s2957 = scalar_lea.vmem [#allocation4], %s2956
          %2958 = dma.done %s2954, 2048
        $region60: #{in_context_correspondence_forward.3} parent=51 // pred_fallthru
          _
      $region52: #{in_context_correspondence_forward.3} parent=5 // pred_fallthru
        _
    $region6: #{in_context_correspondence_forward.3} parent=1 // loop_footer
      %s23 = sadd.s32 1, %s19
    $region7: #{in_context_correspondence_forward.3} parent=1 // loop_footer_branch
      %18 = sbr.rel target = $region3
    $region8: #{in_context_correspondence_forward.3} parent=1 // loop_exit
      _
    %2959 = vsyncpa [#allocation3], 1
    %s2960 = scalar_lea.sflag [#allocation3], 1
    %2961 = vsyncpa %s2960, 1
    %2962 = vsyncpa [#allocation5], 1
    %s2963 = scalar_lea.sflag [#allocation5], 1
    %2964 = vsyncpa %s2963, 1

</llo_original>
